<compile_context>
chip_gen: v7x
topology: tpu7x:2x2x1
jax: 0.10.0
libtpu: 0.0.40
codegen_flags: <defaults>
</compile_context>

<pallas_src>
import jax
import jax.numpy as jnp
from jax.experimental import pallas as pl
from jax.experimental.pallas import tpu as pltpu

K_IN = 3 * 224 * 224          # 150528 = 147 * 1024
HIDDEN = 256
TK = 7168                     # K-tile; 150528 / 7168 == 21 (exact)
assert K_IN % TK == 0


def _fc_mlp_kernel(x_ref, w1_ref, b1_ref, w2_ref, b2_ref, o_ref, acc_ref):
    """Fused: out = relu(x @ W1 + b1) @ W2 + b2, tiled over K of the 1st matmul."""
    k = pl.program_id(0)

    @pl.when(k == 0)
    def _():
        acc_ref[...] = jnp.zeros_like(acc_ref)

    # Partial product for the big (B, K) @ (K, HIDDEN) matmul.
    # bf16 x bf16 on the MXU, f32 accumulation.
    acc_ref[...] += jnp.dot(
        x_ref[...], w1_ref[...], preferred_element_type=jnp.float32
    )

    @pl.when(k == pl.num_programs(0) - 1)
    def _():
        h = jnp.maximum(acc_ref[...] + b1_ref[...], 0.0)          # relu(fc1)
        out = jnp.dot(h, w2_ref[...], preferred_element_type=jnp.float32)
        o_ref[...] = (out + b2_ref[...]).astype(o_ref.dtype)       # fc2


@jax.jit
def fc_test_nn_forward(x, w1, b1, w2, b2):
    """x: (B, 3, 224, 224) f32. Returns (B, C), or (B,) if C == 1 (torch squeeze(1))."""
    B = x.shape[0]
    C = w2.shape[1]

    # Flatten exactly like torch .view(-1, 3*224*224) and stream in bf16.
    x2d = x.reshape(B, K_IN).astype(jnp.bfloat16)
    w1 = w1.astype(jnp.bfloat16)      # no-op if already bf16 (recommended)
    b1 = b1.astype(jnp.float32)
    w2 = w2.astype(jnp.float32)
    b2 = b2.astype(jnp.float32)

    flops = 2 * B * K_IN * HIDDEN + 2 * B * HIDDEN * C
    bytes_accessed = (
        K_IN * HIDDEN * 2          # W1 bf16 stream (dominant)
        + B * K_IN * 2             # x bf16
        + HIDDEN * C * 4 + HIDDEN * 4 + C * 4   # W2, b1, b2
        + B * C * 4                # output
    )

    out = pl.pallas_call(
        _fc_mlp_kernel,
        out_shape=jax.ShapeDtypeStruct((B, C), jnp.float32),
        grid_spec=pltpu.PrefetchScalarGridSpec(
            num_scalar_prefetch=0,
            grid=(K_IN // TK,),
            in_specs=[
                pl.BlockSpec((B, TK), lambda k: (0, k)),        # x tile (bf16)
                pl.BlockSpec((TK, HIDDEN), lambda k: (k, 0)),   # W1 tile (bf16)
                pl.BlockSpec((1, HIDDEN), lambda k: (0, 0)),    # b1 (resident)
                pl.BlockSpec((HIDDEN, C), lambda k: (0, 0)),    # W2 (resident)
                pl.BlockSpec((1, C), lambda k: (0, 0)),         # b2 (resident)
            ],
            out_specs=pl.BlockSpec((B, C), lambda k: (0, 0)),
            scratch_shapes=[pltpu.VMEM((B, HIDDEN), jnp.float32)],
        ),
        compiler_params=pltpu.CompilerParams(
            dimension_semantics=("arbitrary",),     # K is a reduction axis
        ),
        cost_estimate=pl.CostEstimate(
            flops=flops, transcendentals=0, bytes_accessed=bytes_accessed
        ),
    )(x2d, w1, b1, w2, b2)

    # torch .squeeze(1): only drops axis 1 when its size is 1.
    if C == 1:
        out = jnp.squeeze(out, axis=1)
    return out


def init_params(key, class_size):
    """Deterministic synthetic parameters (shapes from FCTestNN.__init__)."""
    k1, k2, k3, k4 = jax.random.split(key, 4)
    scale1 = 1.0 / jnp.sqrt(jnp.float32(K_IN))
    scale2 = 1.0 / jnp.sqrt(jnp.float32(HIDDEN))
    # fc1.weight.T stored bf16 once (weight stream is the kernel's entire cost).
    w1 = (jax.random.normal(k1, (K_IN, HIDDEN), jnp.float32) * scale1).astype(
        jnp.bfloat16
    )
    b1 = jax.random.normal(k2, (1, HIDDEN), jnp.float32) * scale1           # fc1.bias
    w2 = jax.random.normal(k3, (HIDDEN, class_size), jnp.float32) * scale2  # fc2.weight.T
    b2 = jax.random.normal(k4, (1, class_size), jnp.float32) * scale2       # fc2.bias
    return w1, b1, w2, b2


if __name__ == "__main__":
    class_size = 8
    batch = 2

    key = jax.random.PRNGKey(0)
    kx, kp = jax.random.split(key)
    x = jax.random.normal(kx, (batch, 3, 224, 224), jnp.float32)
    w1, b1, w2, b2 = init_params(kp, class_size)

    out = fc_test_nn_forward(x, w1, b1, w2, b2)
    out = jax.block_until_ready(out)

    # Pure-JAX reference (same bf16 inputs, f32 accumulation -> apples-to-apples).
    x2d_bf16 = x.reshape(batch, K_IN).astype(jnp.bfloat16)
    h_ref = jnp.maximum(
        jnp.dot(x2d_bf16, w1, preferred_element_type=jnp.float32) + b1, 0.0
    )
    ref = jnp.dot(h_ref, w2, preferred_element_type=jnp.float32) + b2
    if class_size == 1:
        ref = jnp.squeeze(ref, axis=1)

    assert out.shape == ref.shape, (out.shape, ref.shape)
    assert jnp.allclose(out, ref, rtol=1e-2, atol=1e-2), "mismatch vs reference"

    print("KERNEL_OK")
</pallas_src>

<mosaic_0001>
module attributes {stable_mosaic.version = 11 : i64} {
  func.func @_fc_mlp_kernel(%arg0: i32, %arg1: memref<2x7168xbf16, #tpu.memory_space<vmem>>, %arg2: memref<7168x256xbf16, #tpu.memory_space<vmem>>, %arg3: memref<1x256xf32, #tpu.memory_space<vmem>>, %arg4: memref<256x8xf32, #tpu.memory_space<vmem>>, %arg5: memref<1x8xf32, #tpu.memory_space<vmem>>, %arg6: memref<2x8xf32, #tpu.memory_space<vmem>>, %arg7: memref<2x256xf32, #tpu.memory_space<vmem>>) attributes {dimension_semantics = [#tpu.dimension_semantics<arbitrary>], iteration_bounds = array<i64: 21>, scalar_prefetch = 0 : i64, scratch_operands = 1 : i64, tpu.core_type = #tpu.core_type<tc>, window_params = [{transform_indices = @transform_0, window_bounds = array<i64: 2, 7168>}, {transform_indices = @transform_1, window_bounds = array<i64: 7168, 256>}, {pipeline_mode = #tpu.pipeline_mode<synchronous>, transform_indices = @transform_2, window_bounds = array<i64: 1, 256>}, {pipeline_mode = #tpu.pipeline_mode<synchronous>, transform_indices = @transform_3, window_bounds = array<i64: 256, 8>}, {pipeline_mode = #tpu.pipeline_mode<synchronous>, transform_indices = @transform_4, window_bounds = array<i64: 1, 8>}, {pipeline_mode = #tpu.pipeline_mode<synchronous>, transform_indices = @transform_5, window_bounds = array<i64: 2, 8>}]} {
    %c0_i32 = arith.constant 0 : i32
    %0 = arith.cmpi eq, %arg0, %c0_i32 : i32
    %1 = arith.extui %0 : i1 to i32
    %c0_i32_0 = arith.constant 0 : i32
    %2 = arith.cmpi ne, %1, %c0_i32_0 : i32
    scf.if %2 {
      %cst_9 = arith.constant 0.000000e+00 : f32
      %12 = vector.broadcast %cst_9 : f32 to vector<2x256xf32>
      %c0_10 = arith.constant 0 : index
      %c0_11 = arith.constant 0 : index
      %13 = vector.load %arg7[%c0_10, %c0_11] : memref<2x256xf32, #tpu.memory_space<vmem>>, vector<2x256xf32>
      tpu.vector_store %arg7[%c0_10, %c0_11], %12 {strides = array<i32>} : memref<2x256xf32, #tpu.memory_space<vmem>>, vector<2x256xf32>,
    } else {
    }
    %c0 = arith.constant 0 : index
    %c0_1 = arith.constant 0 : index
    %3 = vector.load %arg7[%c0, %c0_1] : memref<2x256xf32, #tpu.memory_space<vmem>>, vector<2x256xf32>
    %c0_2 = arith.constant 0 : index
    %c0_3 = arith.constant 0 : index
    %4 = vector.load %arg1[%c0_2, %c0_3] : memref<2x7168xbf16, #tpu.memory_space<vmem>>, vector<2x7168xbf16>
    %c0_4 = arith.constant 0 : index
    %c0_5 = arith.constant 0 : index
    %5 = vector.load %arg2[%c0_4, %c0_5] : memref<7168x256xbf16, #tpu.memory_space<vmem>>, vector<7168x256xbf16>
    %cst = arith.constant dense<0.000000e+00> : vector<2x256xf32>
    %6 = tpu.matmul %4, %5, %cst {dimension_numbers = #tpu.dot_dimension_numbers<[1], [0], [0], [1], [0, 0, 1, 1], [], []>} : vector<2x7168xbf16>, vector<7168x256xbf16>, vector<2x256xf32> -> vector<2x256xf32>
    %7 = arith.addf %3, %6 : vector<2x256xf32>
    %c0_6 = arith.constant 0 : index
    %c0_7 = arith.constant 0 : index
    %8 = vector.load %arg7[%c0_6, %c0_7] : memref<2x256xf32, #tpu.memory_space<vmem>>, vector<2x256xf32>
    tpu.vector_store %arg7[%c0_6, %c0_7], %7 {strides = array<i32>} : memref<2x256xf32, #tpu.memory_space<vmem>>, vector<2x256xf32>,
    %c20_i32 = arith.constant 20 : i32
    %9 = arith.cmpi eq, %arg0, %c20_i32 : i32
    %10 = arith.extui %9 : i1 to i32
    %c0_i32_8 = arith.constant 0 : i32
    %11 = arith.cmpi ne, %10, %c0_i32_8 : i32
    scf.if %11 {
      %c0_9 = arith.constant 0 : index
      %c0_10 = arith.constant 0 : index
      %12 = vector.load %arg7[%c0_9, %c0_10] : memref<2x256xf32, #tpu.memory_space<vmem>>, vector<2x256xf32>
      %c0_11 = arith.constant 0 : index
      %c0_12 = arith.constant 0 : index
      %13 = vector.load %arg3[%c0_11, %c0_12] : memref<1x256xf32, #tpu.memory_space<vmem>>, vector<1x256xf32>
      %14 = vector.broadcast %13 : vector<1x256xf32> to vector<2x256xf32>
      %15 = arith.addf %12, %14 : vector<2x256xf32>
      %cst_13 = arith.constant 0.000000e+00 : f32
      %16 = vector.broadcast %cst_13 : f32 to vector<2x256xf32>
      %17 = arith.maximumf %15, %16 : vector<2x256xf32>
      %c0_14 = arith.constant 0 : index
      %c0_15 = arith.constant 0 : index
      %18 = vector.load %arg4[%c0_14, %c0_15] : memref<256x8xf32, #tpu.memory_space<vmem>>, vector<256x8xf32>
      %cst_16 = arith.constant dense<0.000000e+00> : vector<2x8xf32>
      %19 = tpu.matmul %17, %18, %cst_16 {dimension_numbers = #tpu.dot_dimension_numbers<[1], [0], [0], [1], [0, 0, 1, 1], [], []>} : vector<2x256xf32>, vector<256x8xf32>, vector<2x8xf32> -> vector<2x8xf32>
      %c0_17 = arith.constant 0 : index
      %c0_18 = arith.constant 0 : index
      %20 = vector.load %arg5[%c0_17, %c0_18] : memref<1x8xf32, #tpu.memory_space<vmem>>, vector<1x8xf32>
      %21 = vector.broadcast %20 : vector<1x8xf32> to vector<2x8xf32>
      %22 = arith.addf %19, %21 : vector<2x8xf32>
      %c0_19 = arith.constant 0 : index
      %c0_20 = arith.constant 0 : index
      %23 = vector.load %arg6[%c0_19, %c0_20] : memref<2x8xf32, #tpu.memory_space<vmem>>, vector<2x8xf32>
      tpu.vector_store %arg6[%c0_19, %c0_20], %22 {strides = array<i32>} : memref<2x8xf32, #tpu.memory_space<vmem>>, vector<2x8xf32>,
    } else {
    }
    return
  }
  func.func @transform_0(%arg0: i32) -> (i32, i32) {
    %c0_i32 = arith.constant 0 : i32
    %c0_i32_0 = arith.constant 0 : i32
    return %c0_i32, %arg0 : i32, i32
  }
  func.func @transform_1(%arg0: i32) -> (i32, i32) {
    %c0_i32 = arith.constant 0 : i32
    %c0_i32_0 = arith.constant 0 : i32
    return %arg0, %c0_i32 : i32, i32
  }
  func.func @transform_2(%arg0: i32) -> (i32, i32) {
    %c0_i32 = arith.constant 0 : i32
    %c0_i32_0 = arith.constant 0 : i32
    %c0_i32_1 = arith.constant 0 : i32
    return %c0_i32, %c0_i32_0 : i32, i32
  }
  func.func @transform_3(%arg0: i32) -> (i32, i32) {
    %c0_i32 = arith.constant 0 : i32
    %c0_i32_0 = arith.constant 0 : i32
    %c0_i32_1 = arith.constant 0 : i32
    return %c0_i32, %c0_i32_0 : i32, i32
  }
  func.func @transform_4(%arg0: i32) -> (i32, i32) {
    %c0_i32 = arith.constant 0 : i32
    %c0_i32_0 = arith.constant 0 : i32
    %c0_i32_1 = arith.constant 0 : i32
    return %c0_i32, %c0_i32_0 : i32, i32
  }
  func.func @transform_5(%arg0: i32) -> (i32, i32) {
    %c0_i32 = arith.constant 0 : i32
    %c0_i32_0 = arith.constant 0 : i32
    %c0_i32_1 = arith.constant 0 : i32
    return %c0_i32, %c0_i32_0 : i32, i32
  }
}

</mosaic_0001>

<llo_original>
// kernel: fc_test_nn_forward.1
$region0: #{fc_test_nn_forward.1}
  #allocation0 [shape = 'u32[]', space=smem, size = 0x4, offset = 0x4, fixed_abs, tag = 'smem constant byte address 0x4 - core index']
  #allocation1 [shape = 'u32[144,128]{1,0:T(1,128)}', space=vmem, size = 0x12000, scoped, tag = 'internal scratch']
  #allocation2 [shape = 'f32[2,256]{1,0:T(2,128)}', space=vmem, size = 0x800, scoped, tag = 'scratch operand']
  %s0 = inlined_call_operand.vmem [shape: bf16[2,150528], index: 0, kind: input, shape index: {}]
  %s1 = inlined_call_operand.hbm [shape: bf16[150528,256], index: 1, kind: input, shape index: {}]
  %s2 = inlined_call_operand.hbm [shape: f32[1,256], index: 2, kind: input, shape index: {}]
  %s3 = inlined_call_operand.vmem [shape: f32[256,8], index: 3, kind: input, shape index: {}]
  %s4 = inlined_call_operand.hbm [shape: f32[1,8], index: 4, kind: input, shape index: {}]
  %s5 = inlined_call_operand.hbm [shape: f32[2,8], index: 5, kind: output, shape index: {}]
  %s6 = sld [smem:[#allocation0]]
  $region73: #{fc_test_nn_forward.1} parent=0
    _
  %s8 = ssub.s32 1, %s6
  %s9 = scalar_select 0, %s8, %s6
  $region1: #{fc_test_nn_forward.1} parent=0
    #allocation3 [shape = 'u8[7340032]{0}', space=vmem, size = 0x700000, scoped, tag = 'input window, operand 1']
    #allocation4 [shape = 's32[2]{0}', space=sflag, size = 0x8, scoped, tag = 'scoped memory for fc_test_nn_forward.1']
    #allocation5 [shape = 's32[2]{0}', space=sflag, size = 0x8, scoped, tag = 'scoped memory for fc_test_nn_forward.1']
    #allocation6 [shape = 'u8[1024]{0}', space=vmem, size = 0x400, scoped, tag = 'input window, operand 2, single buffered']
    #allocation7 [shape = 's32[1]{0}', space=sflag, size = 0x4, scoped, tag = 'scoped memory for fc_test_nn_forward.1']
    #allocation8 [shape = 'u8[512]{0}', space=vmem, size = 0x400, scoped, tag = 'input window, operand 4, single buffered']
    #allocation9 [shape = 'u8[1024]{0}', space=vmem, size = 0x400, scoped, tag = 'output window, operand 0, single buffered']
    %10 = vsyncpa [#allocation4], 0
    %s11 = scalar_lea.sflag [#allocation4], 1
    %12 = vsyncpa %s11, 0
    %13 = vsyncpa [#allocation7], 0
    %14 = vsyncpa [#allocation5], 0
    loop: start=0, step=1, limit=23
    $region2: #{fc_test_nn_forward.1} parent=1 // loop_pre_header
      _
    $region3: #{fc_test_nn_forward.1} parent=1 // loop_header
      %s16 = sphi 0, %s20
      %p17 = scmp.ge.s32.totalorder %s16, 23
      %s26 = sphi 0, %s28
      %s29 = sphi 0, %s26
      %s30 = sphi 0, %s29
      %s46 = sphi 0, %s30
      %s52 = sphi 0, %s54
      %s55 = sphi 0, %s52
      %s56 = sphi 0, %s55
      %s72 = sphi 0, %s56
      %s76 = sphi 0, %s76
      %s78 = sphi 0, %s76
      %s79 = sphi 0, %s78
      %s93 = sphi 0, %s79
      %s97 = sphi 0, %s97
      %s99 = sphi 0, %s97
      %s100 = sphi 0, %s99
      %s114 = sphi 0, %s100
      %s118 = sphi 0, %s118
      %s120 = sphi 0, %s118
      %s121 = sphi 0, %s120
      %s135 = sphi 0, %s121
      %s139 = sphi 0, %s139
      %s141 = sphi 0, %s139
      %s142 = sphi 0, %s141
      %s156 = sphi 0, %s142
    $region4: #{fc_test_nn_forward.1} parent=1 // loop_header_branch
      %19 = sbr.rel (%p17) target = $region8
    $region5: #{fc_test_nn_forward.1} parent=1 // loop_body
      %s21 = ssub.s32 %s16, 1
      %s22 = ssub.s32 %s16, 2
      %s23 = sadd.s32 %s16, 1
      %s24 = ssub.s32 %s16, %s23
      %p25 = scmp.eq.s32.totalorder %s24, 0
      %s27 = sadd.s32 %s26, 1
      %s28 = scalar_select %p25, %s26, %s27
      %p31 = pneg %p25
      %p32 = scmp.eq.s32.totalorder %s16, 20
      %p33 = por %p31, %p32
      %p34 = scmp.ne.s32.totalorder %s26, %s29
      %p35 = scmp.eq.s32.totalorder %s16, 0
      %p36 = por %p34, %p35
      %p37 = scmp.ne.s32.totalorder %s26, %s29
      %p38 = scmp.eq.s32.totalorder %s21, 20
      %p39 = por %p37, %p38
      %p40 = scmp.ne.s32.totalorder %s29, %s30
      %p41 = scmp.eq.s32.totalorder %s21, 0
      %p42 = por %p40, %p41
      %p43 = scmp.ne.s32.totalorder %s29, %s30
      %p44 = scmp.eq.s32.totalorder %s22, 20
      %p45 = por %p43, %p44
      %p47 = scmp.ne.s32.totalorder %s30, %s46
      %p48 = scmp.eq.s32.totalorder %s22, 0
      %p49 = por %p47, %p48
      %s50 = ssub.s32 %s16, %s23
      %p51 = scmp.eq.s32.totalorder %s50, 0
      %s53 = sadd.s32 %s52, 1
      %s54 = scalar_select %p51, %s52, %s53
      %p57 = pneg %p51
      %p58 = scmp.eq.s32.totalorder %s16, 20
      %p59 = por %p57, %p58
      %p60 = scmp.ne.s32.totalorder %s52, %s55
      %p61 = scmp.eq.s32.totalorder %s16, 0
      %p62 = por %p60, %p61
      %p63 = scmp.ne.s32.totalorder %s52, %s55
      %p64 = scmp.eq.s32.totalorder %s21, 20
      %p65 = por %p63, %p64
      %p66 = scmp.ne.s32.totalorder %s55, %s56
      %p67 = scmp.eq.s32.totalorder %s21, 0
      %p68 = por %p66, %p67
      %p69 = scmp.ne.s32.totalorder %s55, %s56
      %p70 = scmp.eq.s32.totalorder %s22, 20
      %p71 = por %p69, %p70
      %p73 = scmp.ne.s32.totalorder %s56, %s72
      %p74 = scmp.eq.s32.totalorder %s22, 0
      %p75 = por %p73, %p74
      %s77 = sadd.s32 %s76, 1
      %p80 = scmp.eq.s32.totalorder %s16, 20
      %p81 = scmp.ne.s32.totalorder %s76, %s78
      %p82 = scmp.eq.s32.totalorder %s16, 0
      %p83 = por %p81, %p82
      %p84 = scmp.ne.s32.totalorder %s76, %s78
      %p85 = scmp.eq.s32.totalorder %s21, 20
      %p86 = por %p84, %p85
      %p87 = scmp.ne.s32.totalorder %s78, %s79
      %p88 = scmp.eq.s32.totalorder %s21, 0
      %p89 = por %p87, %p88
      %p90 = scmp.ne.s32.totalorder %s78, %s79
      %p91 = scmp.eq.s32.totalorder %s22, 20
      %p92 = por %p90, %p91
      %p94 = scmp.ne.s32.totalorder %s79, %s93
      %p95 = scmp.eq.s32.totalorder %s22, 0
      %p96 = por %p94, %p95
      %s98 = sadd.s32 %s97, 1
      %p101 = scmp.eq.s32.totalorder %s16, 20
      %p102 = scmp.ne.s32.totalorder %s97, %s99
      %p103 = scmp.eq.s32.totalorder %s16, 0
      %p104 = por %p102, %p103
      %p105 = scmp.ne.s32.totalorder %s97, %s99
      %p106 = scmp.eq.s32.totalorder %s21, 20
      %p107 = por %p105, %p106
      %p108 = scmp.ne.s32.totalorder %s99, %s100
      %p109 = scmp.eq.s32.totalorder %s21, 0
      %p110 = por %p108, %p109
      %p111 = scmp.ne.s32.totalorder %s99, %s100
      %p112 = scmp.eq.s32.totalorder %s22, 20
      %p113 = por %p111, %p112
      %p115 = scmp.ne.s32.totalorder %s100, %s114
      %p116 = scmp.eq.s32.totalorder %s22, 0
      %p117 = por %p115, %p116
      %s119 = sadd.s32 %s118, 1
      %p122 = scmp.eq.s32.totalorder %s16, 20
      %p123 = scmp.ne.s32.totalorder %s118, %s120
      %p124 = scmp.eq.s32.totalorder %s16, 0
      %p125 = por %p123, %p124
      %p126 = scmp.ne.s32.totalorder %s118, %s120
      %p127 = scmp.eq.s32.totalorder %s21, 20
      %p128 = por %p126, %p127
      %p129 = scmp.ne.s32.totalorder %s120, %s121
      %p130 = scmp.eq.s32.totalorder %s21, 0
      %p131 = por %p129, %p130
      %p132 = scmp.ne.s32.totalorder %s120, %s121
      %p133 = scmp.eq.s32.totalorder %s22, 20
      %p134 = por %p132, %p133
      %p136 = scmp.ne.s32.totalorder %s121, %s135
      %p137 = scmp.eq.s32.totalorder %s22, 0
      %p138 = por %p136, %p137
      %s140 = sadd.s32 %s139, 1
      %p143 = scmp.eq.s32.totalorder %s16, 20
      %p144 = scmp.ne.s32.totalorder %s139, %s141
      %p145 = scmp.eq.s32.totalorder %s16, 0
      %p146 = por %p144, %p145
      %p147 = scmp.ne.s32.totalorder %s139, %s141
      %p148 = scmp.eq.s32.totalorder %s21, 20
      %p149 = por %p147, %p148
      %p150 = scmp.ne.s32.totalorder %s141, %s142
      %p151 = scmp.eq.s32.totalorder %s21, 0
      %p152 = por %p150, %p151
      %p153 = scmp.ne.s32.totalorder %s141, %s142
      %p154 = scmp.eq.s32.totalorder %s22, 20
      %p155 = por %p153, %p154
      %p157 = scmp.ne.s32.totalorder %s142, %s156
      %p158 = scmp.eq.s32.totalorder %s22, 0
      %p159 = por %p157, %p158
      %p160 = scmp.le.s32.totalorder 1, %s16
      %p161 = scmp.lt.s32.totalorder %s16, 22
      %p162 = pnand %p160, %p161
      %p163 = pneg %p162
      // Predicated region
      $region9: #{fc_test_nn_forward.1} parent=5 // pred_check
        _
      $region10: #{fc_test_nn_forward.1} parent=5 // pred_check_branch
        %165 = sbr.rel (%p162) target = $region12
      $region11: #{fc_test_nn_forward.1} parent=5 // pred_region
        %s166 = ssub.s32 %s16, 1
        // Predicated region
        $region13: #{fc_test_nn_forward.1} parent=11 // pred_check
          %p167 = pneg %p89
        $region14: #{fc_test_nn_forward.1} parent=11 // pred_check_branch
          %169 = sbr.rel (%p167) target = $region16
        $region15: #{fc_test_nn_forward.1} parent=11 // pred_region
          %s171 = ssub.s32 32, 32
          %172 = vsyncadd [#allocation7], %s171
          %s174 = sshll.u32 [#allocation6], 4
          %s175 = int_to_ptr.vmem [resolvable:$true] %s174
          %177 = dma.hbm_to_vmem [thread:$0]  %s2, 32, %s175, [#allocation7]
        $region16: #{fc_test_nn_forward.1} parent=11 // pred_fallthru
          _
        // Predicated region
        $region17: #{fc_test_nn_forward.1} parent=11 // pred_check
          %p178 = pneg %p110
        $region18: #{fc_test_nn_forward.1} parent=11 // pred_check_branch
          %180 = sbr.rel (%p178) target = $region20
        $region19: #{fc_test_nn_forward.1} parent=11 // pred_region
          _
        $region20: #{fc_test_nn_forward.1} parent=11 // pred_fallthru
          _
        // Predicated region
        $region21: #{fc_test_nn_forward.1} parent=11 // pred_check
          %p181 = pneg %p131
        $region22: #{fc_test_nn_forward.1} parent=11 // pred_check_branch
          %183 = sbr.rel (%p181) target = $region24
        $region23: #{fc_test_nn_forward.1} parent=11 // pred_region
          %s185 = ssub.s32 16, 16
          %186 = vsyncadd [#allocation7], %s185
          %s188 = sshll.u32 [#allocation8], 4
          %s189 = int_to_ptr.vmem [resolvable:$true] %s188
          %191 = dma.hbm_to_vmem [thread:$0]  %s4, 16, %s189, [#allocation7]
        $region24: #{fc_test_nn_forward.1} parent=11 // pred_fallthru
          _
      $region12: #{fc_test_nn_forward.1} parent=5 // pred_fallthru
        _
      %p192 = scmp.lt.s32.totalorder %s16, 21
      // Predicated region
      $region25: #{fc_test_nn_forward.1} parent=5 // pred_check
        %p193 = pneg %p192
      $region26: #{fc_test_nn_forward.1} parent=5 // pred_check_branch
        %195 = sbr.rel (%p193) target = $region28
      $region27: #{fc_test_nn_forward.1} parent=5 // pred_region
        // Predicated region
        $region29: #{fc_test_nn_forward.1} parent=27 // pred_check
          %p196 = pneg %p36
        $region30: #{fc_test_nn_forward.1} parent=27 // pred_check_branch
          %198 = sbr.rel (%p196) target = $region32
        $region31: #{fc_test_nn_forward.1} parent=27 // pred_region
          %s199 = smul.u32 56, %s16
          %p200 = scmp.lt.s32.totalorder %s199, 1175
          %s201 = scalar_select %p200, %s199, 1175
          %s202 = scalar_lea.vmem %s0, %s201
          %s203 = smul.u32 56, %s16
        $region32: #{fc_test_nn_forward.1} parent=27 // pred_fallthru
          _
        // Predicated region
        $region33: #{fc_test_nn_forward.1} parent=27 // pred_check
          %p204 = pneg %p62
        $region34: #{fc_test_nn_forward.1} parent=27 // pred_check_branch
          %206 = sbr.rel (%p204) target = $region36
        $region35: #{fc_test_nn_forward.1} parent=27 // pred_region
          %s207 = sand.u32 %s52, 1
          %s208 = scalar_lea.sflag [#allocation4], %s207
          %s209 = sand.u32 %s52, 1
          %s210 = smul.addr %s209, 7168
          %s211 = scalar_lea.vmem [#allocation3], %s210
          %s212 = smul.u32 896, %s16
          %s214 = ssub.s32 114688, 114688
          %215 = vsyncadd %s208, %s214
          %s216 = smul.addr %s212, 2
          %s217 = smul.addr %s216, 64
          %s218 = scalar_lea.hbm %s1, %s217
          %s219 = sshll.u32 %s211, 4
          %s220 = int_to_ptr.vmem [resolvable:$true] %s219
          %225 = dma.hbm_to_vmem [thread:$0]  %s218, 114688, %s220, %s208, 128, 128, 8
        $region36: #{fc_test_nn_forward.1} parent=27 // pred_fallthru
          _
      $region28: #{fc_test_nn_forward.1} parent=5 // pred_fallthru
        _
      %p226 = scmp.le.s32.totalorder 1, %s16
      %p227 = scmp.lt.s32.totalorder %s16, 22
      %p228 = pnand %p226, %p227
      %p229 = pneg %p228
      // Predicated region
      $region37: #{fc_test_nn_forward.1} parent=5 // pred_check
        _
      $region38: #{fc_test_nn_forward.1} parent=5 // pred_check_branch
        %231 = sbr.rel (%p228) target = $region40
      $region39: #{fc_test_nn_forward.1} parent=5 // pred_region
        %s232 = ssub.s32 %s16, 1
        %s233 = sand.u32 %s55, 1
        %s234 = scalar_lea.sflag [#allocation4], %s233
        %s235 = sand.u32 %s55, 1
        %s236 = smul.addr %s235, 7168
        %s237 = scalar_lea.vmem [#allocation3], %s236
        // Predicated region
        $region41: #{fc_test_nn_forward.1} parent=39 // pred_check
          %p238 = pneg %p68
        $region42: #{fc_test_nn_forward.1} parent=39 // pred_check_branch
          %240 = sbr.rel (%p238) target = $region44
        $region43: #{fc_test_nn_forward.1} parent=39 // pred_region
          %241 = dma.done %s234, 114688
        $region44: #{fc_test_nn_forward.1} parent=39 // pred_fallthru
          _
        // Predicated region
        $region45: #{fc_test_nn_forward.1} parent=39 // pred_check
          %p242 = pneg %p89
        $region46: #{fc_test_nn_forward.1} parent=39 // pred_check_branch
          %244 = sbr.rel (%p242) target = $region48
        $region47: #{fc_test_nn_forward.1} parent=39 // pred_region
          %245 = dma.done [#allocation7], 32
        $region48: #{fc_test_nn_forward.1} parent=39 // pred_fallthru
          _
        // Predicated region
        $region49: #{fc_test_nn_forward.1} parent=39 // pred_check
          %p246 = pneg %p131
        $region50: #{fc_test_nn_forward.1} parent=39 // pred_check_branch
          %248 = sbr.rel (%p246) target = $region52
        $region51: #{fc_test_nn_forward.1} parent=39 // pred_region
          %249 = dma.done [#allocation7], 16
        $region52: #{fc_test_nn_forward.1} parent=39 // pred_fallthru
          _
        %s250 = smul.u32 56, %s21
        %p251 = scmp.lt.s32.totalorder %s250, 1175
        %s252 = scalar_select %p251, %s250, 1175
        %s253 = scalar_lea.vmem %s0, %s252
        %p254 = pneg %p42
        %p255 = pneg %p39
        %s256 = sand.u32 %s55, 1
        %s257 = scalar_lea.sflag [#allocation4], %s256
        %s258 = sand.u32 %s55, 1
        %s259 = smul.addr %s258, 7168
        %s260 = scalar_lea.vmem [#allocation3], %s259
        %p261 = pneg %p68
        %p262 = pneg %p65
        %p263 = pneg %p89
        %p264 = pneg %p86
        %p265 = pneg %p110
        %p266 = pneg %p107
        %p267 = pneg %p131
        %p268 = pneg %p128
        %p269 = pneg %p152
        %p270 = pneg %p149
        %s271 = smul.u32 56, %s21
        %p272 = scmp.lt.s32.totalorder %s271, 1175
        %s273 = scalar_select %p272, %s271, 1175
        %s274 = scalar_lea.vmem %s0, %s273
        %s275 = smul.u32 56, %s21
        %s276 = smul.u32 896, %s21
        %p277 = scmp.eq.s32.totalorder %s21, 0
        // Predicated region
        $region53: #{fc_test_nn_forward.1} parent=39 // pred_check
          %p278 = pneg %p277
        $region54: #{fc_test_nn_forward.1} parent=39 // pred_check_branch
          %280 = sbr.rel (%p278) target = $region56
        $region55: #{fc_test_nn_forward.1} parent=39 // pred_region
          %281 = vst [vmem:[#allocation2] sm:$0xf] 0.0
        $region56: #{fc_test_nn_forward.1} parent=39 // pred_fallthru
          _
        %v282 = vld [vmem:[#allocation2] sm:$0xf]
        %v283 = vld [vmem:[%s274] sm:$0xff]
        %v284 = vld [vmem:[%s274 + $0x8] sm:$0xff]
        %v285 = vld [vmem:[%s274 + $0x10] sm:$0xff]
        %v286 = vld [vmem:[%s274 + $0x18] sm:$0xff]
        %v287 = vld [vmem:[%s274 + $0x20] sm:$0xff]
        %v288 = vld [vmem:[%s274 + $0x28] sm:$0xff]
        %v289 = vld [vmem:[%s274 + $0x30] sm:$0xff]
        %v290 = vld [vmem:[%s237] sm:$0xff]
        %v291 = vld [vmem:[%s237 + $0x8] sm:$0xff]
        %v292 = vld [vmem:[%s237 + $0x10] sm:$0xff]
        %v293 = vld [vmem:[%s237 + $0x18] sm:$0xff]
        %v294 = vld [vmem:[%s237 + $0x20] sm:$0xff]
        %v295 = vld [vmem:[%s237 + $0x28] sm:$0xff]
        %v296 = vld [vmem:[%s237 + $0x30] sm:$0xff]
        %v297 = vld [vmem:[%s237 + $0x38] sm:$0xff]
        %v298 = vld [vmem:[%s237 + $0x40] sm:$0xff]
        %v299 = vld [vmem:[%s237 + $0x48] sm:$0xff]
        %v300 = vld [vmem:[%s237 + $0x50] sm:$0xff]
        %v301 = vld [vmem:[%s237 + $0x58] sm:$0xff]
        %v302 = vld [vmem:[%s237 + $0x60] sm:$0xff]
        %v303 = vld [vmem:[%s237 + $0x68] sm:$0xff]
        %v304 = vld [vmem:[%s237 + $0x70] sm:$0xff]
        %v305 = vld [vmem:[%s237 + $0x78] sm:$0xff]
        %v306 = vld [vmem:[%s237 + $0x80] sm:$0xff]
        %v307 = vld [vmem:[%s237 + $0x88] sm:$0xff]
        %v308 = vld [vmem:[%s237 + $0x90] sm:$0xff]
        %v309 = vld [vmem:[%s237 + $0x98] sm:$0xff]
        %v310 = vld [vmem:[%s237 + $0xa0] sm:$0xff]
        %v311 = vld [vmem:[%s237 + $0xa8] sm:$0xff]
        %v312 = vld [vmem:[%s237 + $0xb0] sm:$0xff]
        %v313 = vld [vmem:[%s237 + $0xb8] sm:$0xff]
        %v314 = vld [vmem:[%s237 + $0xc0] sm:$0xff]
        %v315 = vld [vmem:[%s237 + $0xc8] sm:$0xff]
        %v316 = vld [vmem:[%s237 + $0xd0] sm:$0xff]
        %v317 = vld [vmem:[%s237 + $0xd8] sm:$0xff]
        %v318 = vld [vmem:[%s237 + $0xe0] sm:$0xff]
        %v319 = vld [vmem:[%s237 + $0xe8] sm:$0xff]
        %v320 = vld [vmem:[%s237 + $0xf0] sm:$0xff]
        %v321 = vld [vmem:[%s237 + $0xf8] sm:$0xff]
        %v322 = vld [vmem:[%s237 + $0x100] sm:$0xff]
        %v323 = vld [vmem:[%s237 + $0x108] sm:$0xff]
        %v324 = vld [vmem:[%s237 + $0x110] sm:$0xff]
        %v325 = vld [vmem:[%s237 + $0x118] sm:$0xff]
        %v326 = vld [vmem:[%s237 + $0x120] sm:$0xff]
        %v327 = vld [vmem:[%s237 + $0x128] sm:$0xff]
        %v328 = vld [vmem:[%s237 + $0x130] sm:$0xff]
        %v329 = vld [vmem:[%s237 + $0x138] sm:$0xff]
        %v330 = vld [vmem:[%s237 + $0x140] sm:$0xff]
        %v331 = vld [vmem:[%s237 + $0x148] sm:$0xff]
        %v332 = vld [vmem:[%s237 + $0x150] sm:$0xff]
        %v333 = vld [vmem:[%s237 + $0x158] sm:$0xff]
        %v334 = vld [vmem:[%s237 + $0x160] sm:$0xff]
        %v335 = vld [vmem:[%s237 + $0x168] sm:$0xff]
        %v336 = vld [vmem:[%s237 + $0x170] sm:$0xff]
        %v337 = vld [vmem:[%s237 + $0x178] sm:$0xff]
        %v338 = vld [vmem:[%s237 + $0x180] sm:$0xff]
        %v339 = vld [vmem:[%s237 + $0x188] sm:$0xff]
        %v340 = vld [vmem:[%s237 + $0x190] sm:$0xff]
        %v341 = vld [vmem:[%s237 + $0x198] sm:$0xff]
        %v342 = vld [vmem:[%s237 + $0x1a0] sm:$0xff]
        %v343 = vld [vmem:[%s237 + $0x1a8] sm:$0xff]
        %v344 = vld [vmem:[%s237 + $0x1b0] sm:$0xff]
        %v345 = vld [vmem:[%s237 + $0x1b8] sm:$0xff]
        %v346 = vld [vmem:[%s237 + $0x1c0] sm:$0xff]
        %v347 = vld [vmem:[%s237 + $0x1c8] sm:$0xff]
        %v348 = vld [vmem:[%s237 + $0x1d0] sm:$0xff]
        %v349 = vld [vmem:[%s237 + $0x1d8] sm:$0xff]
        %v350 = vld [vmem:[%s237 + $0x1e0] sm:$0xff]
        %v351 = vld [vmem:[%s237 + $0x1e8] sm:$0xff]
        %v352 = vld [vmem:[%s237 + $0x1f0] sm:$0xff]
        %v353 = vld [vmem:[%s237 + $0x1f8] sm:$0xff]
        %v354 = vld [vmem:[%s237 + $0x200] sm:$0xff]
        %v355 = vld [vmem:[%s237 + $0x208] sm:$0xff]
        %v356 = vld [vmem:[%s237 + $0x210] sm:$0xff]
        %v357 = vld [vmem:[%s237 + $0x218] sm:$0xff]
        %v358 = vld [vmem:[%s237 + $0x220] sm:$0xff]
        %v359 = vld [vmem:[%s237 + $0x228] sm:$0xff]
        %v360 = vld [vmem:[%s237 + $0x230] sm:$0xff]
        %v361 = vld [vmem:[%s237 + $0x238] sm:$0xff]
        %v362 = vld [vmem:[%s237 + $0x240] sm:$0xff]
        %v363 = vld [vmem:[%s237 + $0x248] sm:$0xff]
        %v364 = vld [vmem:[%s237 + $0x250] sm:$0xff]
        %v365 = vld [vmem:[%s237 + $0x258] sm:$0xff]
        %v366 = vld [vmem:[%s237 + $0x260] sm:$0xff]
        %v367 = vld [vmem:[%s237 + $0x268] sm:$0xff]
        %v368 = vld [vmem:[%s237 + $0x270] sm:$0xff]
        %v369 = vld [vmem:[%s237 + $0x278] sm:$0xff]
        %v370 = vld [vmem:[%s237 + $0x280] sm:$0xff]
        %v371 = vld [vmem:[%s237 + $0x288] sm:$0xff]
        %v372 = vld [vmem:[%s237 + $0x290] sm:$0xff]
        %v373 = vld [vmem:[%s237 + $0x298] sm:$0xff]
        %v374 = vld [vmem:[%s237 + $0x2a0] sm:$0xff]
        %v375 = vld [vmem:[%s237 + $0x2a8] sm:$0xff]
        %v376 = vld [vmem:[%s237 + $0x2b0] sm:$0xff]
        %v377 = vld [vmem:[%s237 + $0x2b8] sm:$0xff]
        %v378 = vld [vmem:[%s237 + $0x2c0] sm:$0xff]
        %v379 = vld [vmem:[%s237 + $0x2c8] sm:$0xff]
        %v380 = vld [vmem:[%s237 + $0x2d0] sm:$0xff]
        %v381 = vld [vmem:[%s237 + $0x2d8] sm:$0xff]
        %v382 = vld [vmem:[%s237 + $0x2e0] sm:$0xff]
        %v383 = vld [vmem:[%s237 + $0x2e8] sm:$0xff]
        %v384 = vld [vmem:[%s237 + $0x2f0] sm:$0xff]
        %v385 = vld [vmem:[%s237 + $0x2f8] sm:$0xff]
        %v386 = vld [vmem:[%s237 + $0x300] sm:$0xff]
        %v387 = vld [vmem:[%s237 + $0x308] sm:$0xff]
        %v388 = vld [vmem:[%s237 + $0x310] sm:$0xff]
        %v389 = vld [vmem:[%s237 + $0x318] sm:$0xff]
        %v390 = vld [vmem:[%s237 + $0x320] sm:$0xff]
        %v391 = vld [vmem:[%s237 + $0x328] sm:$0xff]
        %v392 = vld [vmem:[%s237 + $0x330] sm:$0xff]
        %v393 = vld [vmem:[%s237 + $0x338] sm:$0xff]
        %v394 = vld [vmem:[%s237 + $0x340] sm:$0xff]
        %v395 = vld [vmem:[%s237 + $0x348] sm:$0xff]
        %v396 = vld [vmem:[%s237 + $0x350] sm:$0xff]
        %v397 = vld [vmem:[%s237 + $0x358] sm:$0xff]
        %v398 = vld [vmem:[%s237 + $0x360] sm:$0xff]
        %v399 = vld [vmem:[%s237 + $0x368] sm:$0xff]
        %v400 = vld [vmem:[%s237 + $0x370] sm:$0xff]
        %v401 = vld [vmem:[%s237 + $0x378] sm:$0xff]
        %v402 = vld [vmem:[%s237 + $0x380] sm:$0xff]
        %v403 = vld [vmem:[%s237 + $0x388] sm:$0xff]
        %v404 = vld [vmem:[%s237 + $0x390] sm:$0xff]
        %v405 = vld [vmem:[%s237 + $0x398] sm:$0xff]
        %v406 = vld [vmem:[%s237 + $0x3a0] sm:$0xff]
        %v407 = vld [vmem:[%s237 + $0x3a8] sm:$0xff]
        %v408 = vld [vmem:[%s237 + $0x3b0] sm:$0xff]
        %v409 = vld [vmem:[%s237 + $0x3b8] sm:$0xff]
        %v410 = vld [vmem:[%s237 + $0x3c0] sm:$0xff]
        %v411 = vld [vmem:[%s237 + $0x3c8] sm:$0xff]
        %v412 = vld [vmem:[%s237 + $0x3d0] sm:$0xff]
        %v413 = vld [vmem:[%s237 + $0x3d8] sm:$0xff]
        %v414 = vld [vmem:[%s237 + $0x3e0] sm:$0xff]
        %v415 = vld [vmem:[%s237 + $0x3e8] sm:$0xff]
        %v416 = vld [vmem:[%s237 + $0x3f0] sm:$0xff]
        %v417 = vld [vmem:[%s237 + $0x3f8] sm:$0xff]
        %v418 = vld [vmem:[%s237 + $0x400] sm:$0xff]
        %v419 = vld [vmem:[%s237 + $0x408] sm:$0xff]
        %v420 = vld [vmem:[%s237 + $0x410] sm:$0xff]
        %v421 = vld [vmem:[%s237 + $0x418] sm:$0xff]
        %v422 = vld [vmem:[%s237 + $0x420] sm:$0xff]
        %v423 = vld [vmem:[%s237 + $0x428] sm:$0xff]
        %v424 = vld [vmem:[%s237 + $0x430] sm:$0xff]
        %v425 = vld [vmem:[%s237 + $0x438] sm:$0xff]
        %v426 = vld [vmem:[%s237 + $0x440] sm:$0xff]
        %v427 = vld [vmem:[%s237 + $0x448] sm:$0xff]
        %v428 = vld [vmem:[%s237 + $0x450] sm:$0xff]
        %v429 = vld [vmem:[%s237 + $0x458] sm:$0xff]
        %v430 = vld [vmem:[%s237 + $0x460] sm:$0xff]
        %v431 = vld [vmem:[%s237 + $0x468] sm:$0xff]
        %v432 = vld [vmem:[%s237 + $0x470] sm:$0xff]
        %v433 = vld [vmem:[%s237 + $0x478] sm:$0xff]
        %v434 = vld [vmem:[%s237 + $0x480] sm:$0xff]
        %v435 = vld [vmem:[%s237 + $0x488] sm:$0xff]
        %v436 = vld [vmem:[%s237 + $0x490] sm:$0xff]
        %v437 = vld [vmem:[%s237 + $0x498] sm:$0xff]
        %v438 = vld [vmem:[%s237 + $0x4a0] sm:$0xff]
        %v439 = vld [vmem:[%s237 + $0x4a8] sm:$0xff]
        %v440 = vld [vmem:[%s237 + $0x4b0] sm:$0xff]
        %v441 = vld [vmem:[%s237 + $0x4b8] sm:$0xff]
        %v442 = vld [vmem:[%s237 + $0x4c0] sm:$0xff]
        %v443 = vld [vmem:[%s237 + $0x4c8] sm:$0xff]
        %v444 = vld [vmem:[%s237 + $0x4d0] sm:$0xff]
        %v445 = vld [vmem:[%s237 + $0x4d8] sm:$0xff]
        %v446 = vld [vmem:[%s237 + $0x4e0] sm:$0xff]
        %v447 = vld [vmem:[%s237 + $0x4e8] sm:$0xff]
        %v448 = vld [vmem:[%s237 + $0x4f0] sm:$0xff]
        %v449 = vld [vmem:[%s237 + $0x4f8] sm:$0xff]
        %v450 = vld [vmem:[%s237 + $0x500] sm:$0xff]
        %v451 = vld [vmem:[%s237 + $0x508] sm:$0xff]
        %v452 = vld [vmem:[%s237 + $0x510] sm:$0xff]
        %v453 = vld [vmem:[%s237 + $0x518] sm:$0xff]
        %v454 = vld [vmem:[%s237 + $0x520] sm:$0xff]
        %v455 = vld [vmem:[%s237 + $0x528] sm:$0xff]
        %v456 = vld [vmem:[%s237 + $0x530] sm:$0xff]
        %v457 = vld [vmem:[%s237 + $0x538] sm:$0xff]
        %v458 = vld [vmem:[%s237 + $0x540] sm:$0xff]
        %v459 = vld [vmem:[%s237 + $0x548] sm:$0xff]
        %v460 = vld [vmem:[%s237 + $0x550] sm:$0xff]
        %v461 = vld [vmem:[%s237 + $0x558] sm:$0xff]
        %v462 = vld [vmem:[%s237 + $0x560] sm:$0xff]
        %v463 = vld [vmem:[%s237 + $0x568] sm:$0xff]
        %v464 = vld [vmem:[%s237 + $0x570] sm:$0xff]
        %v465 = vld [vmem:[%s237 + $0x578] sm:$0xff]
        %v466 = vld [vmem:[%s237 + $0x580] sm:$0xff]
        %v467 = vld [vmem:[%s237 + $0x588] sm:$0xff]
        %v468 = vld [vmem:[%s237 + $0x590] sm:$0xff]
        %v469 = vld [vmem:[%s237 + $0x598] sm:$0xff]
        %v470 = vld [vmem:[%s237 + $0x5a0] sm:$0xff]
        %v471 = vld [vmem:[%s237 + $0x5a8] sm:$0xff]
        %v472 = vld [vmem:[%s237 + $0x5b0] sm:$0xff]
        %v473 = vld [vmem:[%s237 + $0x5b8] sm:$0xff]
        %v474 = vld [vmem:[%s237 + $0x5c0] sm:$0xff]
        %v475 = vld [vmem:[%s237 + $0x5c8] sm:$0xff]
        %v476 = vld [vmem:[%s237 + $0x5d0] sm:$0xff]
        %v477 = vld [vmem:[%s237 + $0x5d8] sm:$0xff]
        %v478 = vld [vmem:[%s237 + $0x5e0] sm:$0xff]
        %v479 = vld [vmem:[%s237 + $0x5e8] sm:$0xff]
        %v480 = vld [vmem:[%s237 + $0x5f0] sm:$0xff]
        %v481 = vld [vmem:[%s237 + $0x5f8] sm:$0xff]
        %v482 = vld [vmem:[%s237 + $0x600] sm:$0xff]
        %v483 = vld [vmem:[%s237 + $0x608] sm:$0xff]
        %v484 = vld [vmem:[%s237 + $0x610] sm:$0xff]
        %v485 = vld [vmem:[%s237 + $0x618] sm:$0xff]
        %v486 = vld [vmem:[%s237 + $0x620] sm:$0xff]
        %v487 = vld [vmem:[%s237 + $0x628] sm:$0xff]
        %v488 = vld [vmem:[%s237 + $0x630] sm:$0xff]
        %v489 = vld [vmem:[%s237 + $0x638] sm:$0xff]
        %v490 = vld [vmem:[%s237 + $0x640] sm:$0xff]
        %v491 = vld [vmem:[%s237 + $0x648] sm:$0xff]
        %v492 = vld [vmem:[%s237 + $0x650] sm:$0xff]
        %v493 = vld [vmem:[%s237 + $0x658] sm:$0xff]
        %v494 = vld [vmem:[%s237 + $0x660] sm:$0xff]
        %v495 = vld [vmem:[%s237 + $0x668] sm:$0xff]
        %v496 = vld [vmem:[%s237 + $0x670] sm:$0xff]
        %v497 = vld [vmem:[%s237 + $0x678] sm:$0xff]
        %v498 = vld [vmem:[%s237 + $0x680] sm:$0xff]
        %v499 = vld [vmem:[%s237 + $0x688] sm:$0xff]
        %v500 = vld [vmem:[%s237 + $0x690] sm:$0xff]
        %v501 = vld [vmem:[%s237 + $0x698] sm:$0xff]
        %v502 = vld [vmem:[%s237 + $0x6a0] sm:$0xff]
        %v503 = vld [vmem:[%s237 + $0x6a8] sm:$0xff]
        %v504 = vld [vmem:[%s237 + $0x6b0] sm:$0xff]
        %v505 = vld [vmem:[%s237 + $0x6b8] sm:$0xff]
        %v506 = vld [vmem:[%s237 + $0x6c0] sm:$0xff]
        %v507 = vld [vmem:[%s237 + $0x6c8] sm:$0xff]
        %v508 = vld [vmem:[%s237 + $0x6d0] sm:$0xff]
        %v509 = vld [vmem:[%s237 + $0x6d8] sm:$0xff]
        %v510 = vld [vmem:[%s237 + $0x6e0] sm:$0xff]
        %v511 = vld [vmem:[%s237 + $0x6e8] sm:$0xff]
        %v512 = vld [vmem:[%s237 + $0x6f0] sm:$0xff]
        %v513 = vld [vmem:[%s237 + $0x6f8] sm:$0xff]
        %v514 = vld [vmem:[%s237 + $0x700] sm:$0xff]
        %v515 = vld [vmem:[%s237 + $0x708] sm:$0xff]
        %v516 = vld [vmem:[%s237 + $0x710] sm:$0xff]
        %v517 = vld [vmem:[%s237 + $0x718] sm:$0xff]
        %v518 = vld [vmem:[%s237 + $0x720] sm:$0xff]
        %v519 = vld [vmem:[%s237 + $0x728] sm:$0xff]
        %v520 = vld [vmem:[%s237 + $0x730] sm:$0xff]
        %v521 = vld [vmem:[%s237 + $0x738] sm:$0xff]
        %v522 = vld [vmem:[%s237 + $0x740] sm:$0xff]
        %v523 = vld [vmem:[%s237 + $0x748] sm:$0xff]
        %v524 = vld [vmem:[%s237 + $0x750] sm:$0xff]
        %v525 = vld [vmem:[%s237 + $0x758] sm:$0xff]
        %v526 = vld [vmem:[%s237 + $0x760] sm:$0xff]
        %v527 = vld [vmem:[%s237 + $0x768] sm:$0xff]
        %v528 = vld [vmem:[%s237 + $0x770] sm:$0xff]
        %v529 = vld [vmem:[%s237 + $0x778] sm:$0xff]
        %v530 = vld [vmem:[%s237 + $0x780] sm:$0xff]
        %v531 = vld [vmem:[%s237 + $0x788] sm:$0xff]
        %v532 = vld [vmem:[%s237 + $0x790] sm:$0xff]
        %v533 = vld [vmem:[%s237 + $0x798] sm:$0xff]
        %v534 = vld [vmem:[%s237 + $0x7a0] sm:$0xff]
        %v535 = vld [vmem:[%s237 + $0x7a8] sm:$0xff]
        %v536 = vld [vmem:[%s237 + $0x7b0] sm:$0xff]
        %v537 = vld [vmem:[%s237 + $0x7b8] sm:$0xff]
        %v538 = vld [vmem:[%s237 + $0x7c0] sm:$0xff]
        %v539 = vld [vmem:[%s237 + $0x7c8] sm:$0xff]
        %v540 = vld [vmem:[%s237 + $0x7d0] sm:$0xff]
        %v541 = vld [vmem:[%s237 + $0x7d8] sm:$0xff]
        %v542 = vld [vmem:[%s237 + $0x7e0] sm:$0xff]
        %v543 = vld [vmem:[%s237 + $0x7e8] sm:$0xff]
        %v544 = vld [vmem:[%s237 + $0x7f0] sm:$0xff]
        %v545 = vld [vmem:[%s237 + $0x7f8] sm:$0xff]
        %v546 = vld [vmem:[%s237 + $0x800] sm:$0xff]
        %v547 = vld [vmem:[%s237 + $0x808] sm:$0xff]
        %v548 = vld [vmem:[%s237 + $0x810] sm:$0xff]
        %v549 = vld [vmem:[%s237 + $0x818] sm:$0xff]
        %v550 = vld [vmem:[%s237 + $0x820] sm:$0xff]
        %v551 = vld [vmem:[%s237 + $0x828] sm:$0xff]
        %v552 = vld [vmem:[%s237 + $0x830] sm:$0xff]
        %v553 = vld [vmem:[%s237 + $0x838] sm:$0xff]
        %v554 = vld [vmem:[%s237 + $0x840] sm:$0xff]
        %v555 = vld [vmem:[%s237 + $0x848] sm:$0xff]
        %v556 = vld [vmem:[%s237 + $0x850] sm:$0xff]
        %v557 = vld [vmem:[%s237 + $0x858] sm:$0xff]
        %v558 = vld [vmem:[%s237 + $0x860] sm:$0xff]
        %v559 = vld [vmem:[%s237 + $0x868] sm:$0xff]
        %v560 = vld [vmem:[%s237 + $0x870] sm:$0xff]
        %v561 = vld [vmem:[%s237 + $0x878] sm:$0xff]
        %v562 = vld [vmem:[%s237 + $0x880] sm:$0xff]
        %v563 = vld [vmem:[%s237 + $0x888] sm:$0xff]
        %v564 = vld [vmem:[%s237 + $0x890] sm:$0xff]
        %v565 = vld [vmem:[%s237 + $0x898] sm:$0xff]
        %v566 = vld [vmem:[%s237 + $0x8a0] sm:$0xff]
        %v567 = vld [vmem:[%s237 + $0x8a8] sm:$0xff]
        %v568 = vld [vmem:[%s237 + $0x8b0] sm:$0xff]
        %v569 = vld [vmem:[%s237 + $0x8b8] sm:$0xff]
        %v570 = vld [vmem:[%s237 + $0x8c0] sm:$0xff]
        %v571 = vld [vmem:[%s237 + $0x8c8] sm:$0xff]
        %v572 = vld [vmem:[%s237 + $0x8d0] sm:$0xff]
        %v573 = vld [vmem:[%s237 + $0x8d8] sm:$0xff]
        %v574 = vld [vmem:[%s237 + $0x8e0] sm:$0xff]
        %v575 = vld [vmem:[%s237 + $0x8e8] sm:$0xff]
        %v576 = vld [vmem:[%s237 + $0x8f0] sm:$0xff]
        %v577 = vld [vmem:[%s237 + $0x8f8] sm:$0xff]
        %v578 = vld [vmem:[%s237 + $0x900] sm:$0xff]
        %v579 = vld [vmem:[%s237 + $0x908] sm:$0xff]
        %v580 = vld [vmem:[%s237 + $0x910] sm:$0xff]
        %v581 = vld [vmem:[%s237 + $0x918] sm:$0xff]
        %v582 = vld [vmem:[%s237 + $0x920] sm:$0xff]
        %v583 = vld [vmem:[%s237 + $0x928] sm:$0xff]
        %v584 = vld [vmem:[%s237 + $0x930] sm:$0xff]
        %v585 = vld [vmem:[%s237 + $0x938] sm:$0xff]
        %v586 = vld [vmem:[%s237 + $0x940] sm:$0xff]
        %v587 = vld [vmem:[%s237 + $0x948] sm:$0xff]
        %v588 = vld [vmem:[%s237 + $0x950] sm:$0xff]
        %v589 = vld [vmem:[%s237 + $0x958] sm:$0xff]
        %v590 = vld [vmem:[%s237 + $0x960] sm:$0xff]
        %v591 = vld [vmem:[%s237 + $0x968] sm:$0xff]
        %v592 = vld [vmem:[%s237 + $0x970] sm:$0xff]
        %v593 = vld [vmem:[%s237 + $0x978] sm:$0xff]
        %v594 = vld [vmem:[%s237 + $0x980] sm:$0xff]
        %v595 = vld [vmem:[%s237 + $0x988] sm:$0xff]
        %v596 = vld [vmem:[%s237 + $0x990] sm:$0xff]
        %v597 = vld [vmem:[%s237 + $0x998] sm:$0xff]
        %v598 = vld [vmem:[%s237 + $0x9a0] sm:$0xff]
        %v599 = vld [vmem:[%s237 + $0x9a8] sm:$0xff]
        %v600 = vld [vmem:[%s237 + $0x9b0] sm:$0xff]
        %v601 = vld [vmem:[%s237 + $0x9b8] sm:$0xff]
        %v602 = vld [vmem:[%s237 + $0x9c0] sm:$0xff]
        %v603 = vld [vmem:[%s237 + $0x9c8] sm:$0xff]
        %v604 = vld [vmem:[%s237 + $0x9d0] sm:$0xff]
        %v605 = vld [vmem:[%s237 + $0x9d8] sm:$0xff]
        %v606 = vld [vmem:[%s237 + $0x9e0] sm:$0xff]
        %v607 = vld [vmem:[%s237 + $0x9e8] sm:$0xff]
        %v608 = vld [vmem:[%s237 + $0x9f0] sm:$0xff]
        %v609 = vld [vmem:[%s237 + $0x9f8] sm:$0xff]
        %v610 = vld [vmem:[%s237 + $0xa00] sm:$0xff]
        %v611 = vld [vmem:[%s237 + $0xa08] sm:$0xff]
        %v612 = vld [vmem:[%s237 + $0xa10] sm:$0xff]
        %v613 = vld [vmem:[%s237 + $0xa18] sm:$0xff]
        %v614 = vld [vmem:[%s237 + $0xa20] sm:$0xff]
        %v615 = vld [vmem:[%s237 + $0xa28] sm:$0xff]
        %v616 = vld [vmem:[%s237 + $0xa30] sm:$0xff]
        %v617 = vld [vmem:[%s237 + $0xa38] sm:$0xff]
        %v618 = vld [vmem:[%s237 + $0xa40] sm:$0xff]
        %v619 = vld [vmem:[%s237 + $0xa48] sm:$0xff]
        %v620 = vld [vmem:[%s237 + $0xa50] sm:$0xff]
        %v621 = vld [vmem:[%s237 + $0xa58] sm:$0xff]
        %v622 = vld [vmem:[%s237 + $0xa60] sm:$0xff]
        %v623 = vld [vmem:[%s237 + $0xa68] sm:$0xff]
        %v624 = vld [vmem:[%s237 + $0xa70] sm:$0xff]
        %v625 = vld [vmem:[%s237 + $0xa78] sm:$0xff]
        %v626 = vld [vmem:[%s237 + $0xa80] sm:$0xff]
        %v627 = vld [vmem:[%s237 + $0xa88] sm:$0xff]
        %v628 = vld [vmem:[%s237 + $0xa90] sm:$0xff]
        %v629 = vld [vmem:[%s237 + $0xa98] sm:$0xff]
        %v630 = vld [vmem:[%s237 + $0xaa0] sm:$0xff]
        %v631 = vld [vmem:[%s237 + $0xaa8] sm:$0xff]
        %v632 = vld [vmem:[%s237 + $0xab0] sm:$0xff]
        %v633 = vld [vmem:[%s237 + $0xab8] sm:$0xff]
        %v634 = vld [vmem:[%s237 + $0xac0] sm:$0xff]
        %v635 = vld [vmem:[%s237 + $0xac8] sm:$0xff]
        %v636 = vld [vmem:[%s237 + $0xad0] sm:$0xff]
        %v637 = vld [vmem:[%s237 + $0xad8] sm:$0xff]
        %v638 = vld [vmem:[%s237 + $0xae0] sm:$0xff]
        %v639 = vld [vmem:[%s237 + $0xae8] sm:$0xff]
        %v640 = vld [vmem:[%s237 + $0xaf0] sm:$0xff]
        %v641 = vld [vmem:[%s237 + $0xaf8] sm:$0xff]
        %v642 = vld [vmem:[%s237 + $0xb00] sm:$0xff]
        %v643 = vld [vmem:[%s237 + $0xb08] sm:$0xff]
        %v644 = vld [vmem:[%s237 + $0xb10] sm:$0xff]
        %v645 = vld [vmem:[%s237 + $0xb18] sm:$0xff]
        %v646 = vld [vmem:[%s237 + $0xb20] sm:$0xff]
        %v647 = vld [vmem:[%s237 + $0xb28] sm:$0xff]
        %v648 = vld [vmem:[%s237 + $0xb30] sm:$0xff]
        %v649 = vld [vmem:[%s237 + $0xb38] sm:$0xff]
        %v650 = vld [vmem:[%s237 + $0xb40] sm:$0xff]
        %v651 = vld [vmem:[%s237 + $0xb48] sm:$0xff]
        %v652 = vld [vmem:[%s237 + $0xb50] sm:$0xff]
        %v653 = vld [vmem:[%s237 + $0xb58] sm:$0xff]
        %v654 = vld [vmem:[%s237 + $0xb60] sm:$0xff]
        %v655 = vld [vmem:[%s237 + $0xb68] sm:$0xff]
        %v656 = vld [vmem:[%s237 + $0xb70] sm:$0xff]
        %v657 = vld [vmem:[%s237 + $0xb78] sm:$0xff]
        %v658 = vld [vmem:[%s237 + $0xb80] sm:$0xff]
        %v659 = vld [vmem:[%s237 + $0xb88] sm:$0xff]
        %v660 = vld [vmem:[%s237 + $0xb90] sm:$0xff]
        %v661 = vld [vmem:[%s237 + $0xb98] sm:$0xff]
        %v662 = vld [vmem:[%s237 + $0xba0] sm:$0xff]
        %v663 = vld [vmem:[%s237 + $0xba8] sm:$0xff]
        %v664 = vld [vmem:[%s237 + $0xbb0] sm:$0xff]
        %v665 = vld [vmem:[%s237 + $0xbb8] sm:$0xff]
        %v666 = vld [vmem:[%s237 + $0xbc0] sm:$0xff]
        %v667 = vld [vmem:[%s237 + $0xbc8] sm:$0xff]
        %v668 = vld [vmem:[%s237 + $0xbd0] sm:$0xff]
        %v669 = vld [vmem:[%s237 + $0xbd8] sm:$0xff]
        %v670 = vld [vmem:[%s237 + $0xbe0] sm:$0xff]
        %v671 = vld [vmem:[%s237 + $0xbe8] sm:$0xff]
        %v672 = vld [vmem:[%s237 + $0xbf0] sm:$0xff]
        %v673 = vld [vmem:[%s237 + $0xbf8] sm:$0xff]
        %v674 = vld [vmem:[%s237 + $0xc00] sm:$0xff]
        %v675 = vld [vmem:[%s237 + $0xc08] sm:$0xff]
        %v676 = vld [vmem:[%s237 + $0xc10] sm:$0xff]
        %v677 = vld [vmem:[%s237 + $0xc18] sm:$0xff]
        %v678 = vld [vmem:[%s237 + $0xc20] sm:$0xff]
        %v679 = vld [vmem:[%s237 + $0xc28] sm:$0xff]
        %v680 = vld [vmem:[%s237 + $0xc30] sm:$0xff]
        %v681 = vld [vmem:[%s237 + $0xc38] sm:$0xff]
        %v682 = vld [vmem:[%s237 + $0xc40] sm:$0xff]
        %v683 = vld [vmem:[%s237 + $0xc48] sm:$0xff]
        %v684 = vld [vmem:[%s237 + $0xc50] sm:$0xff]
        %v685 = vld [vmem:[%s237 + $0xc58] sm:$0xff]
        %v686 = vld [vmem:[%s237 + $0xc60] sm:$0xff]
        %v687 = vld [vmem:[%s237 + $0xc68] sm:$0xff]
        %v688 = vld [vmem:[%s237 + $0xc70] sm:$0xff]
        %v689 = vld [vmem:[%s237 + $0xc78] sm:$0xff]
        %v690 = vld [vmem:[%s237 + $0xc80] sm:$0xff]
        %v691 = vld [vmem:[%s237 + $0xc88] sm:$0xff]
        %v692 = vld [vmem:[%s237 + $0xc90] sm:$0xff]
        %v693 = vld [vmem:[%s237 + $0xc98] sm:$0xff]
        %v694 = vld [vmem:[%s237 + $0xca0] sm:$0xff]
        %v695 = vld [vmem:[%s237 + $0xca8] sm:$0xff]
        %v696 = vld [vmem:[%s237 + $0xcb0] sm:$0xff]
        %v697 = vld [vmem:[%s237 + $0xcb8] sm:$0xff]
        %v698 = vld [vmem:[%s237 + $0xcc0] sm:$0xff]
        %v699 = vld [vmem:[%s237 + $0xcc8] sm:$0xff]
        %v700 = vld [vmem:[%s237 + $0xcd0] sm:$0xff]
        %v701 = vld [vmem:[%s237 + $0xcd8] sm:$0xff]
        %v702 = vld [vmem:[%s237 + $0xce0] sm:$0xff]
        %v703 = vld [vmem:[%s237 + $0xce8] sm:$0xff]
        %v704 = vld [vmem:[%s237 + $0xcf0] sm:$0xff]
        %v705 = vld [vmem:[%s237 + $0xcf8] sm:$0xff]
        %v706 = vld [vmem:[%s237 + $0xd00] sm:$0xff]
        %v707 = vld [vmem:[%s237 + $0xd08] sm:$0xff]
        %v708 = vld [vmem:[%s237 + $0xd10] sm:$0xff]
        %v709 = vld [vmem:[%s237 + $0xd18] sm:$0xff]
        %v710 = vld [vmem:[%s237 + $0xd20] sm:$0xff]
        %v711 = vld [vmem:[%s237 + $0xd28] sm:$0xff]
        %v712 = vld [vmem:[%s237 + $0xd30] sm:$0xff]
        %v713 = vld [vmem:[%s237 + $0xd38] sm:$0xff]
        %v714 = vld [vmem:[%s237 + $0xd40] sm:$0xff]
        %v715 = vld [vmem:[%s237 + $0xd48] sm:$0xff]
        %v716 = vld [vmem:[%s237 + $0xd50] sm:$0xff]
        %v717 = vld [vmem:[%s237 + $0xd58] sm:$0xff]
        %v718 = vld [vmem:[%s237 + $0xd60] sm:$0xff]
        %v719 = vld [vmem:[%s237 + $0xd68] sm:$0xff]
        %v720 = vld [vmem:[%s237 + $0xd70] sm:$0xff]
        %v721 = vld [vmem:[%s237 + $0xd78] sm:$0xff]
        %v722 = vld [vmem:[%s237 + $0xd80] sm:$0xff]
        %v723 = vld [vmem:[%s237 + $0xd88] sm:$0xff]
        %v724 = vld [vmem:[%s237 + $0xd90] sm:$0xff]
        %v725 = vld [vmem:[%s237 + $0xd98] sm:$0xff]
        %v726 = vld [vmem:[%s237 + $0xda0] sm:$0xff]
        %v727 = vld [vmem:[%s237 + $0xda8] sm:$0xff]
        %v728 = vld [vmem:[%s237 + $0xdb0] sm:$0xff]
        %v729 = vld [vmem:[%s237 + $0xdb8] sm:$0xff]
        %v730 = vld [vmem:[%s237 + $0xdc0] sm:$0xff]
        %v731 = vld [vmem:[%s237 + $0xdc8] sm:$0xff]
        %v732 = vld [vmem:[%s237 + $0xdd0] sm:$0xff]
        %v733 = vld [vmem:[%s237 + $0xdd8] sm:$0xff]
        %v734 = vld [vmem:[%s237 + $0xde0] sm:$0xff]
        %v735 = vld [vmem:[%s237 + $0xde8] sm:$0xff]
        %v736 = vld [vmem:[%s237 + $0xdf0] sm:$0xff]
        %v737 = vld [vmem:[%s237 + $0xdf8] sm:$0xff]
        %v738 = vld [vmem:[%s237 + $0xe00] sm:$0xff]
        %v739 = vld [vmem:[%s237 + $0xe08] sm:$0xff]
        %v740 = vld [vmem:[%s237 + $0xe10] sm:$0xff]
        %v741 = vld [vmem:[%s237 + $0xe18] sm:$0xff]
        %v742 = vld [vmem:[%s237 + $0xe20] sm:$0xff]
        %v743 = vld [vmem:[%s237 + $0xe28] sm:$0xff]
        %v744 = vld [vmem:[%s237 + $0xe30] sm:$0xff]
        %v745 = vld [vmem:[%s237 + $0xe38] sm:$0xff]
        %v746 = vld [vmem:[%s237 + $0xe40] sm:$0xff]
        %v747 = vld [vmem:[%s237 + $0xe48] sm:$0xff]
        %v748 = vld [vmem:[%s237 + $0xe50] sm:$0xff]
        %v749 = vld [vmem:[%s237 + $0xe58] sm:$0xff]
        %v750 = vld [vmem:[%s237 + $0xe60] sm:$0xff]
        %v751 = vld [vmem:[%s237 + $0xe68] sm:$0xff]
        %v752 = vld [vmem:[%s237 + $0xe70] sm:$0xff]
        %v753 = vld [vmem:[%s237 + $0xe78] sm:$0xff]
        %v754 = vld [vmem:[%s237 + $0xe80] sm:$0xff]
        %v755 = vld [vmem:[%s237 + $0xe88] sm:$0xff]
        %v756 = vld [vmem:[%s237 + $0xe90] sm:$0xff]
        %v757 = vld [vmem:[%s237 + $0xe98] sm:$0xff]
        %v758 = vld [vmem:[%s237 + $0xea0] sm:$0xff]
        %v759 = vld [vmem:[%s237 + $0xea8] sm:$0xff]
        %v760 = vld [vmem:[%s237 + $0xeb0] sm:$0xff]
        %v761 = vld [vmem:[%s237 + $0xeb8] sm:$0xff]
        %v762 = vld [vmem:[%s237 + $0xec0] sm:$0xff]
        %v763 = vld [vmem:[%s237 + $0xec8] sm:$0xff]
        %v764 = vld [vmem:[%s237 + $0xed0] sm:$0xff]
        %v765 = vld [vmem:[%s237 + $0xed8] sm:$0xff]
        %v766 = vld [vmem:[%s237 + $0xee0] sm:$0xff]
        %v767 = vld [vmem:[%s237 + $0xee8] sm:$0xff]
        %v768 = vld [vmem:[%s237 + $0xef0] sm:$0xff]
        %v769 = vld [vmem:[%s237 + $0xef8] sm:$0xff]
        %v770 = vld [vmem:[%s237 + $0xf00] sm:$0xff]
        %v771 = vld [vmem:[%s237 + $0xf08] sm:$0xff]
        %v772 = vld [vmem:[%s237 + $0xf10] sm:$0xff]
        %v773 = vld [vmem:[%s237 + $0xf18] sm:$0xff]
        %v774 = vld [vmem:[%s237 + $0xf20] sm:$0xff]
        %v775 = vld [vmem:[%s237 + $0xf28] sm:$0xff]
        %v776 = vld [vmem:[%s237 + $0xf30] sm:$0xff]
        %v777 = vld [vmem:[%s237 + $0xf38] sm:$0xff]
        %v778 = vld [vmem:[%s237 + $0xf40] sm:$0xff]
        %v779 = vld [vmem:[%s237 + $0xf48] sm:$0xff]
        %v780 = vld [vmem:[%s237 + $0xf50] sm:$0xff]
        %v781 = vld [vmem:[%s237 + $0xf58] sm:$0xff]
        %v782 = vld [vmem:[%s237 + $0xf60] sm:$0xff]
        %v783 = vld [vmem:[%s237 + $0xf68] sm:$0xff]
        %v784 = vld [vmem:[%s237 + $0xf70] sm:$0xff]
        %v785 = vld [vmem:[%s237 + $0xf78] sm:$0xff]
        %v786 = vld [vmem:[%s237 + $0xf80] sm:$0xff]
        %v787 = vld [vmem:[%s237 + $0xf88] sm:$0xff]
        %v788 = vld [vmem:[%s237 + $0xf90] sm:$0xff]
        %v789 = vld [vmem:[%s237 + $0xf98] sm:$0xff]
        %v790 = vld [vmem:[%s237 + $0xfa0] sm:$0xff]
        %v791 = vld [vmem:[%s237 + $0xfa8] sm:$0xff]
        %v792 = vld [vmem:[%s237 + $0xfb0] sm:$0xff]
        %v793 = vld [vmem:[%s237 + $0xfb8] sm:$0xff]
        %v794 = vld [vmem:[%s237 + $0xfc0] sm:$0xff]
        %v795 = vld [vmem:[%s237 + $0xfc8] sm:$0xff]
        %v796 = vld [vmem:[%s237 + $0xfd0] sm:$0xff]
        %v797 = vld [vmem:[%s237 + $0xfd8] sm:$0xff]
        %v798 = vld [vmem:[%s237 + $0xfe0] sm:$0xff]
        %v799 = vld [vmem:[%s237 + $0xfe8] sm:$0xff]
        %v800 = vld [vmem:[%s237 + $0xff0] sm:$0xff]
        %v801 = vld [vmem:[%s237 + $0xff8] sm:$0xff]
        %v802 = vld [vmem:[%s237 + $0x1000] sm:$0xff]
        %v803 = vld [vmem:[%s237 + $0x1008] sm:$0xff]
        %v804 = vld [vmem:[%s237 + $0x1010] sm:$0xff]
        %v805 = vld [vmem:[%s237 + $0x1018] sm:$0xff]
        %v806 = vld [vmem:[%s237 + $0x1020] sm:$0xff]
        %v807 = vld [vmem:[%s237 + $0x1028] sm:$0xff]
        %v808 = vld [vmem:[%s237 + $0x1030] sm:$0xff]
        %v809 = vld [vmem:[%s237 + $0x1038] sm:$0xff]
        %v810 = vld [vmem:[%s237 + $0x1040] sm:$0xff]
        %v811 = vld [vmem:[%s237 + $0x1048] sm:$0xff]
        %v812 = vld [vmem:[%s237 + $0x1050] sm:$0xff]
        %v813 = vld [vmem:[%s237 + $0x1058] sm:$0xff]
        %v814 = vld [vmem:[%s237 + $0x1060] sm:$0xff]
        %v815 = vld [vmem:[%s237 + $0x1068] sm:$0xff]
        %v816 = vld [vmem:[%s237 + $0x1070] sm:$0xff]
        %v817 = vld [vmem:[%s237 + $0x1078] sm:$0xff]
        %v818 = vld [vmem:[%s237 + $0x1080] sm:$0xff]
        %v819 = vld [vmem:[%s237 + $0x1088] sm:$0xff]
        %v820 = vld [vmem:[%s237 + $0x1090] sm:$0xff]
        %v821 = vld [vmem:[%s237 + $0x1098] sm:$0xff]
        %v822 = vld [vmem:[%s237 + $0x10a0] sm:$0xff]
        %v823 = vld [vmem:[%s237 + $0x10a8] sm:$0xff]
        %v824 = vld [vmem:[%s237 + $0x10b0] sm:$0xff]
        %v825 = vld [vmem:[%s237 + $0x10b8] sm:$0xff]
        %v826 = vld [vmem:[%s237 + $0x10c0] sm:$0xff]
        %v827 = vld [vmem:[%s237 + $0x10c8] sm:$0xff]
        %v828 = vld [vmem:[%s237 + $0x10d0] sm:$0xff]
        %v829 = vld [vmem:[%s237 + $0x10d8] sm:$0xff]
        %v830 = vld [vmem:[%s237 + $0x10e0] sm:$0xff]
        %v831 = vld [vmem:[%s237 + $0x10e8] sm:$0xff]
        %v832 = vld [vmem:[%s237 + $0x10f0] sm:$0xff]
        %v833 = vld [vmem:[%s237 + $0x10f8] sm:$0xff]
        %v834 = vld [vmem:[%s237 + $0x1100] sm:$0xff]
        %v835 = vld [vmem:[%s237 + $0x1108] sm:$0xff]
        %v836 = vld [vmem:[%s237 + $0x1110] sm:$0xff]
        %v837 = vld [vmem:[%s237 + $0x1118] sm:$0xff]
        %v838 = vld [vmem:[%s237 + $0x1120] sm:$0xff]
        %v839 = vld [vmem:[%s237 + $0x1128] sm:$0xff]
        %v840 = vld [vmem:[%s237 + $0x1130] sm:$0xff]
        %v841 = vld [vmem:[%s237 + $0x1138] sm:$0xff]
        %v842 = vld [vmem:[%s237 + $0x1140] sm:$0xff]
        %v843 = vld [vmem:[%s237 + $0x1148] sm:$0xff]
        %v844 = vld [vmem:[%s237 + $0x1150] sm:$0xff]
        %v845 = vld [vmem:[%s237 + $0x1158] sm:$0xff]
        %v846 = vld [vmem:[%s237 + $0x1160] sm:$0xff]
        %v847 = vld [vmem:[%s237 + $0x1168] sm:$0xff]
        %v848 = vld [vmem:[%s237 + $0x1170] sm:$0xff]
        %v849 = vld [vmem:[%s237 + $0x1178] sm:$0xff]
        %v850 = vld [vmem:[%s237 + $0x1180] sm:$0xff]
        %v851 = vld [vmem:[%s237 + $0x1188] sm:$0xff]
        %v852 = vld [vmem:[%s237 + $0x1190] sm:$0xff]
        %v853 = vld [vmem:[%s237 + $0x1198] sm:$0xff]
        %v854 = vld [vmem:[%s237 + $0x11a0] sm:$0xff]
        %v855 = vld [vmem:[%s237 + $0x11a8] sm:$0xff]
        %v856 = vld [vmem:[%s237 + $0x11b0] sm:$0xff]
        %v857 = vld [vmem:[%s237 + $0x11b8] sm:$0xff]
        %v858 = vld [vmem:[%s237 + $0x11c0] sm:$0xff]
        %v859 = vld [vmem:[%s237 + $0x11c8] sm:$0xff]
        %v860 = vld [vmem:[%s237 + $0x11d0] sm:$0xff]
        %v861 = vld [vmem:[%s237 + $0x11d8] sm:$0xff]
        %v862 = vld [vmem:[%s237 + $0x11e0] sm:$0xff]
        %v863 = vld [vmem:[%s237 + $0x11e8] sm:$0xff]
        %v864 = vld [vmem:[%s237 + $0x11f0] sm:$0xff]
        %v865 = vld [vmem:[%s237 + $0x11f8] sm:$0xff]
        %v866 = vld [vmem:[%s237 + $0x1200] sm:$0xff]
        %v867 = vld [vmem:[%s237 + $0x1208] sm:$0xff]
        %v868 = vld [vmem:[%s237 + $0x1210] sm:$0xff]
        %v869 = vld [vmem:[%s237 + $0x1218] sm:$0xff]
        %v870 = vld [vmem:[%s237 + $0x1220] sm:$0xff]
        %v871 = vld [vmem:[%s237 + $0x1228] sm:$0xff]
        %v872 = vld [vmem:[%s237 + $0x1230] sm:$0xff]
        %v873 = vld [vmem:[%s237 + $0x1238] sm:$0xff]
        %v874 = vld [vmem:[%s237 + $0x1240] sm:$0xff]
        %v875 = vld [vmem:[%s237 + $0x1248] sm:$0xff]
        %v876 = vld [vmem:[%s237 + $0x1250] sm:$0xff]
        %v877 = vld [vmem:[%s237 + $0x1258] sm:$0xff]
        %v878 = vld [vmem:[%s237 + $0x1260] sm:$0xff]
        %v879 = vld [vmem:[%s237 + $0x1268] sm:$0xff]
        %v880 = vld [vmem:[%s237 + $0x1270] sm:$0xff]
        %v881 = vld [vmem:[%s237 + $0x1278] sm:$0xff]
        %v882 = vld [vmem:[%s237 + $0x1280] sm:$0xff]
        %v883 = vld [vmem:[%s237 + $0x1288] sm:$0xff]
        %v884 = vld [vmem:[%s237 + $0x1290] sm:$0xff]
        %v885 = vld [vmem:[%s237 + $0x1298] sm:$0xff]
        %v886 = vld [vmem:[%s237 + $0x12a0] sm:$0xff]
        %v887 = vld [vmem:[%s237 + $0x12a8] sm:$0xff]
        %v888 = vld [vmem:[%s237 + $0x12b0] sm:$0xff]
        %v889 = vld [vmem:[%s237 + $0x12b8] sm:$0xff]
        %v890 = vld [vmem:[%s237 + $0x12c0] sm:$0xff]
        %v891 = vld [vmem:[%s237 + $0x12c8] sm:$0xff]
        %v892 = vld [vmem:[%s237 + $0x12d0] sm:$0xff]
        %v893 = vld [vmem:[%s237 + $0x12d8] sm:$0xff]
        %v894 = vld [vmem:[%s237 + $0x12e0] sm:$0xff]
        %v895 = vld [vmem:[%s237 + $0x12e8] sm:$0xff]
        %v896 = vld [vmem:[%s237 + $0x12f0] sm:$0xff]
        %v897 = vld [vmem:[%s237 + $0x12f8] sm:$0xff]
        %v898 = vld [vmem:[%s237 + $0x1300] sm:$0xff]
        %v899 = vld [vmem:[%s237 + $0x1308] sm:$0xff]
        %v900 = vld [vmem:[%s237 + $0x1310] sm:$0xff]
        %v901 = vld [vmem:[%s237 + $0x1318] sm:$0xff]
        %v902 = vld [vmem:[%s237 + $0x1320] sm:$0xff]
        %v903 = vld [vmem:[%s237 + $0x1328] sm:$0xff]
        %v904 = vld [vmem:[%s237 + $0x1330] sm:$0xff]
        %v905 = vld [vmem:[%s237 + $0x1338] sm:$0xff]
        %v906 = vld [vmem:[%s237 + $0x1340] sm:$0xff]
        %v907 = vld [vmem:[%s237 + $0x1348] sm:$0xff]
        %v908 = vld [vmem:[%s237 + $0x1350] sm:$0xff]
        %v909 = vld [vmem:[%s237 + $0x1358] sm:$0xff]
        %v910 = vld [vmem:[%s237 + $0x1360] sm:$0xff]
        %v911 = vld [vmem:[%s237 + $0x1368] sm:$0xff]
        %v912 = vld [vmem:[%s237 + $0x1370] sm:$0xff]
        %v913 = vld [vmem:[%s237 + $0x1378] sm:$0xff]
        %v914 = vld [vmem:[%s237 + $0x1380] sm:$0xff]
        %v915 = vld [vmem:[%s237 + $0x1388] sm:$0xff]
        %v916 = vld [vmem:[%s237 + $0x1390] sm:$0xff]
        %v917 = vld [vmem:[%s237 + $0x1398] sm:$0xff]
        %v918 = vld [vmem:[%s237 + $0x13a0] sm:$0xff]
        %v919 = vld [vmem:[%s237 + $0x13a8] sm:$0xff]
        %v920 = vld [vmem:[%s237 + $0x13b0] sm:$0xff]
        %v921 = vld [vmem:[%s237 + $0x13b8] sm:$0xff]
        %v922 = vld [vmem:[%s237 + $0x13c0] sm:$0xff]
        %v923 = vld [vmem:[%s237 + $0x13c8] sm:$0xff]
        %v924 = vld [vmem:[%s237 + $0x13d0] sm:$0xff]
        %v925 = vld [vmem:[%s237 + $0x13d8] sm:$0xff]
        %v926 = vld [vmem:[%s237 + $0x13e0] sm:$0xff]
        %v927 = vld [vmem:[%s237 + $0x13e8] sm:$0xff]
        %v928 = vld [vmem:[%s237 + $0x13f0] sm:$0xff]
        %v929 = vld [vmem:[%s237 + $0x13f8] sm:$0xff]
        %v930 = vld [vmem:[%s237 + $0x1400] sm:$0xff]
        %v931 = vld [vmem:[%s237 + $0x1408] sm:$0xff]
        %v932 = vld [vmem:[%s237 + $0x1410] sm:$0xff]
        %v933 = vld [vmem:[%s237 + $0x1418] sm:$0xff]
        %v934 = vld [vmem:[%s237 + $0x1420] sm:$0xff]
        %v935 = vld [vmem:[%s237 + $0x1428] sm:$0xff]
        %v936 = vld [vmem:[%s237 + $0x1430] sm:$0xff]
        %v937 = vld [vmem:[%s237 + $0x1438] sm:$0xff]
        %v938 = vld [vmem:[%s237 + $0x1440] sm:$0xff]
        %v939 = vld [vmem:[%s237 + $0x1448] sm:$0xff]
        %v940 = vld [vmem:[%s237 + $0x1450] sm:$0xff]
        %v941 = vld [vmem:[%s237 + $0x1458] sm:$0xff]
        %v942 = vld [vmem:[%s237 + $0x1460] sm:$0xff]
        %v943 = vld [vmem:[%s237 + $0x1468] sm:$0xff]
        %v944 = vld [vmem:[%s237 + $0x1470] sm:$0xff]
        %v945 = vld [vmem:[%s237 + $0x1478] sm:$0xff]
        %v946 = vld [vmem:[%s237 + $0x1480] sm:$0xff]
        %v947 = vld [vmem:[%s237 + $0x1488] sm:$0xff]
        %v948 = vld [vmem:[%s237 + $0x1490] sm:$0xff]
        %v949 = vld [vmem:[%s237 + $0x1498] sm:$0xff]
        %v950 = vld [vmem:[%s237 + $0x14a0] sm:$0xff]
        %v951 = vld [vmem:[%s237 + $0x14a8] sm:$0xff]
        %v952 = vld [vmem:[%s237 + $0x14b0] sm:$0xff]
        %v953 = vld [vmem:[%s237 + $0x14b8] sm:$0xff]
        %v954 = vld [vmem:[%s237 + $0x14c0] sm:$0xff]
        %v955 = vld [vmem:[%s237 + $0x14c8] sm:$0xff]
        %v956 = vld [vmem:[%s237 + $0x14d0] sm:$0xff]
        %v957 = vld [vmem:[%s237 + $0x14d8] sm:$0xff]
        %v958 = vld [vmem:[%s237 + $0x14e0] sm:$0xff]
        %v959 = vld [vmem:[%s237 + $0x14e8] sm:$0xff]
        %v960 = vld [vmem:[%s237 + $0x14f0] sm:$0xff]
        %v961 = vld [vmem:[%s237 + $0x14f8] sm:$0xff]
        %v962 = vld [vmem:[%s237 + $0x1500] sm:$0xff]
        %v963 = vld [vmem:[%s237 + $0x1508] sm:$0xff]
        %v964 = vld [vmem:[%s237 + $0x1510] sm:$0xff]
        %v965 = vld [vmem:[%s237 + $0x1518] sm:$0xff]
        %v966 = vld [vmem:[%s237 + $0x1520] sm:$0xff]
        %v967 = vld [vmem:[%s237 + $0x1528] sm:$0xff]
        %v968 = vld [vmem:[%s237 + $0x1530] sm:$0xff]
        %v969 = vld [vmem:[%s237 + $0x1538] sm:$0xff]
        %v970 = vld [vmem:[%s237 + $0x1540] sm:$0xff]
        %v971 = vld [vmem:[%s237 + $0x1548] sm:$0xff]
        %v972 = vld [vmem:[%s237 + $0x1550] sm:$0xff]
        %v973 = vld [vmem:[%s237 + $0x1558] sm:$0xff]
        %v974 = vld [vmem:[%s237 + $0x1560] sm:$0xff]
        %v975 = vld [vmem:[%s237 + $0x1568] sm:$0xff]
        %v976 = vld [vmem:[%s237 + $0x1570] sm:$0xff]
        %v977 = vld [vmem:[%s237 + $0x1578] sm:$0xff]
        %v978 = vld [vmem:[%s237 + $0x1580] sm:$0xff]
        %v979 = vld [vmem:[%s237 + $0x1588] sm:$0xff]
        %v980 = vld [vmem:[%s237 + $0x1590] sm:$0xff]
        %v981 = vld [vmem:[%s237 + $0x1598] sm:$0xff]
        %v982 = vld [vmem:[%s237 + $0x15a0] sm:$0xff]
        %v983 = vld [vmem:[%s237 + $0x15a8] sm:$0xff]
        %v984 = vld [vmem:[%s237 + $0x15b0] sm:$0xff]
        %v985 = vld [vmem:[%s237 + $0x15b8] sm:$0xff]
        %v986 = vld [vmem:[%s237 + $0x15c0] sm:$0xff]
        %v987 = vld [vmem:[%s237 + $0x15c8] sm:$0xff]
        %v988 = vld [vmem:[%s237 + $0x15d0] sm:$0xff]
        %v989 = vld [vmem:[%s237 + $0x15d8] sm:$0xff]
        %v990 = vld [vmem:[%s237 + $0x15e0] sm:$0xff]
        %v991 = vld [vmem:[%s237 + $0x15e8] sm:$0xff]
        %v992 = vld [vmem:[%s237 + $0x15f0] sm:$0xff]
        %v993 = vld [vmem:[%s237 + $0x15f8] sm:$0xff]
        %v994 = vld [vmem:[%s237 + $0x1600] sm:$0xff]
        %v995 = vld [vmem:[%s237 + $0x1608] sm:$0xff]
        %v996 = vld [vmem:[%s237 + $0x1610] sm:$0xff]
        %v997 = vld [vmem:[%s237 + $0x1618] sm:$0xff]
        %v998 = vld [vmem:[%s237 + $0x1620] sm:$0xff]
        %v999 = vld [vmem:[%s237 + $0x1628] sm:$0xff]
        %v1000 = vld [vmem:[%s237 + $0x1630] sm:$0xff]
        %v1001 = vld [vmem:[%s237 + $0x1638] sm:$0xff]
        %v1002 = vld [vmem:[%s237 + $0x1640] sm:$0xff]
        %v1003 = vld [vmem:[%s237 + $0x1648] sm:$0xff]
        %v1004 = vld [vmem:[%s237 + $0x1650] sm:$0xff]
        %v1005 = vld [vmem:[%s237 + $0x1658] sm:$0xff]
        %v1006 = vld [vmem:[%s237 + $0x1660] sm:$0xff]
        %v1007 = vld [vmem:[%s237 + $0x1668] sm:$0xff]
        %v1008 = vld [vmem:[%s237 + $0x1670] sm:$0xff]
        %v1009 = vld [vmem:[%s237 + $0x1678] sm:$0xff]
        %v1010 = vld [vmem:[%s237 + $0x1680] sm:$0xff]
        %v1011 = vld [vmem:[%s237 + $0x1688] sm:$0xff]
        %v1012 = vld [vmem:[%s237 + $0x1690] sm:$0xff]
        %v1013 = vld [vmem:[%s237 + $0x1698] sm:$0xff]
        %v1014 = vld [vmem:[%s237 + $0x16a0] sm:$0xff]
        %v1015 = vld [vmem:[%s237 + $0x16a8] sm:$0xff]
        %v1016 = vld [vmem:[%s237 + $0x16b0] sm:$0xff]
        %v1017 = vld [vmem:[%s237 + $0x16b8] sm:$0xff]
        %v1018 = vld [vmem:[%s237 + $0x16c0] sm:$0xff]
        %v1019 = vld [vmem:[%s237 + $0x16c8] sm:$0xff]
        %v1020 = vld [vmem:[%s237 + $0x16d0] sm:$0xff]
        %v1021 = vld [vmem:[%s237 + $0x16d8] sm:$0xff]
        %v1022 = vld [vmem:[%s237 + $0x16e0] sm:$0xff]
        %v1023 = vld [vmem:[%s237 + $0x16e8] sm:$0xff]
        %v1024 = vld [vmem:[%s237 + $0x16f0] sm:$0xff]
        %v1025 = vld [vmem:[%s237 + $0x16f8] sm:$0xff]
        %v1026 = vld [vmem:[%s237 + $0x1700] sm:$0xff]
        %v1027 = vld [vmem:[%s237 + $0x1708] sm:$0xff]
        %v1028 = vld [vmem:[%s237 + $0x1710] sm:$0xff]
        %v1029 = vld [vmem:[%s237 + $0x1718] sm:$0xff]
        %v1030 = vld [vmem:[%s237 + $0x1720] sm:$0xff]
        %v1031 = vld [vmem:[%s237 + $0x1728] sm:$0xff]
        %v1032 = vld [vmem:[%s237 + $0x1730] sm:$0xff]
        %v1033 = vld [vmem:[%s237 + $0x1738] sm:$0xff]
        %v1034 = vld [vmem:[%s237 + $0x1740] sm:$0xff]
        %v1035 = vld [vmem:[%s237 + $0x1748] sm:$0xff]
        %v1036 = vld [vmem:[%s237 + $0x1750] sm:$0xff]
        %v1037 = vld [vmem:[%s237 + $0x1758] sm:$0xff]
        %v1038 = vld [vmem:[%s237 + $0x1760] sm:$0xff]
        %v1039 = vld [vmem:[%s237 + $0x1768] sm:$0xff]
        %v1040 = vld [vmem:[%s237 + $0x1770] sm:$0xff]
        %v1041 = vld [vmem:[%s237 + $0x1778] sm:$0xff]
        %v1042 = vld [vmem:[%s237 + $0x1780] sm:$0xff]
        %v1043 = vld [vmem:[%s237 + $0x1788] sm:$0xff]
        %v1044 = vld [vmem:[%s237 + $0x1790] sm:$0xff]
        %v1045 = vld [vmem:[%s237 + $0x1798] sm:$0xff]
        %v1046 = vld [vmem:[%s237 + $0x17a0] sm:$0xff]
        %v1047 = vld [vmem:[%s237 + $0x17a8] sm:$0xff]
        %v1048 = vld [vmem:[%s237 + $0x17b0] sm:$0xff]
        %v1049 = vld [vmem:[%s237 + $0x17b8] sm:$0xff]
        %v1050 = vld [vmem:[%s237 + $0x17c0] sm:$0xff]
        %v1051 = vld [vmem:[%s237 + $0x17c8] sm:$0xff]
        %v1052 = vld [vmem:[%s237 + $0x17d0] sm:$0xff]
        %v1053 = vld [vmem:[%s237 + $0x17d8] sm:$0xff]
        %v1054 = vld [vmem:[%s237 + $0x17e0] sm:$0xff]
        %v1055 = vld [vmem:[%s237 + $0x17e8] sm:$0xff]
        %v1056 = vld [vmem:[%s237 + $0x17f0] sm:$0xff]
        %v1057 = vld [vmem:[%s237 + $0x17f8] sm:$0xff]
        %v1058 = vld [vmem:[%s237 + $0x1800] sm:$0xff]
        %v1059 = vld [vmem:[%s237 + $0x1808] sm:$0xff]
        %v1060 = vld [vmem:[%s237 + $0x1810] sm:$0xff]
        %v1061 = vld [vmem:[%s237 + $0x1818] sm:$0xff]
        %v1062 = vld [vmem:[%s237 + $0x1820] sm:$0xff]
        %v1063 = vld [vmem:[%s237 + $0x1828] sm:$0xff]
        %v1064 = vld [vmem:[%s237 + $0x1830] sm:$0xff]
        %v1065 = vld [vmem:[%s237 + $0x1838] sm:$0xff]
        %v1066 = vld [vmem:[%s237 + $0x1840] sm:$0xff]
        %v1067 = vld [vmem:[%s237 + $0x1848] sm:$0xff]
        %v1068 = vld [vmem:[%s237 + $0x1850] sm:$0xff]
        %v1069 = vld [vmem:[%s237 + $0x1858] sm:$0xff]
        %v1070 = vld [vmem:[%s237 + $0x1860] sm:$0xff]
        %v1071 = vld [vmem:[%s237 + $0x1868] sm:$0xff]
        %v1072 = vld [vmem:[%s237 + $0x1870] sm:$0xff]
        %v1073 = vld [vmem:[%s237 + $0x1878] sm:$0xff]
        %v1074 = vld [vmem:[%s237 + $0x1880] sm:$0xff]
        %v1075 = vld [vmem:[%s237 + $0x1888] sm:$0xff]
        %v1076 = vld [vmem:[%s237 + $0x1890] sm:$0xff]
        %v1077 = vld [vmem:[%s237 + $0x1898] sm:$0xff]
        %v1078 = vld [vmem:[%s237 + $0x18a0] sm:$0xff]
        %v1079 = vld [vmem:[%s237 + $0x18a8] sm:$0xff]
        %v1080 = vld [vmem:[%s237 + $0x18b0] sm:$0xff]
        %v1081 = vld [vmem:[%s237 + $0x18b8] sm:$0xff]
        %v1082 = vld [vmem:[%s237 + $0x18c0] sm:$0xff]
        %v1083 = vld [vmem:[%s237 + $0x18c8] sm:$0xff]
        %v1084 = vld [vmem:[%s237 + $0x18d0] sm:$0xff]
        %v1085 = vld [vmem:[%s237 + $0x18d8] sm:$0xff]
        %v1086 = vld [vmem:[%s237 + $0x18e0] sm:$0xff]
        %v1087 = vld [vmem:[%s237 + $0x18e8] sm:$0xff]
        %v1088 = vld [vmem:[%s237 + $0x18f0] sm:$0xff]
        %v1089 = vld [vmem:[%s237 + $0x18f8] sm:$0xff]
        %v1090 = vld [vmem:[%s237 + $0x1900] sm:$0xff]
        %v1091 = vld [vmem:[%s237 + $0x1908] sm:$0xff]
        %v1092 = vld [vmem:[%s237 + $0x1910] sm:$0xff]
        %v1093 = vld [vmem:[%s237 + $0x1918] sm:$0xff]
        %v1094 = vld [vmem:[%s237 + $0x1920] sm:$0xff]
        %v1095 = vld [vmem:[%s237 + $0x1928] sm:$0xff]
        %v1096 = vld [vmem:[%s237 + $0x1930] sm:$0xff]
        %v1097 = vld [vmem:[%s237 + $0x1938] sm:$0xff]
        %v1098 = vld [vmem:[%s237 + $0x1940] sm:$0xff]
        %v1099 = vld [vmem:[%s237 + $0x1948] sm:$0xff]
        %v1100 = vld [vmem:[%s237 + $0x1950] sm:$0xff]
        %v1101 = vld [vmem:[%s237 + $0x1958] sm:$0xff]
        %v1102 = vld [vmem:[%s237 + $0x1960] sm:$0xff]
        %v1103 = vld [vmem:[%s237 + $0x1968] sm:$0xff]
        %v1104 = vld [vmem:[%s237 + $0x1970] sm:$0xff]
        %v1105 = vld [vmem:[%s237 + $0x1978] sm:$0xff]
        %v1106 = vld [vmem:[%s237 + $0x1980] sm:$0xff]
        %v1107 = vld [vmem:[%s237 + $0x1988] sm:$0xff]
        %v1108 = vld [vmem:[%s237 + $0x1990] sm:$0xff]
        %v1109 = vld [vmem:[%s237 + $0x1998] sm:$0xff]
        %v1110 = vld [vmem:[%s237 + $0x19a0] sm:$0xff]
        %v1111 = vld [vmem:[%s237 + $0x19a8] sm:$0xff]
        %v1112 = vld [vmem:[%s237 + $0x19b0] sm:$0xff]
        %v1113 = vld [vmem:[%s237 + $0x19b8] sm:$0xff]
        %v1114 = vld [vmem:[%s237 + $0x19c0] sm:$0xff]
        %v1115 = vld [vmem:[%s237 + $0x19c8] sm:$0xff]
        %v1116 = vld [vmem:[%s237 + $0x19d0] sm:$0xff]
        %v1117 = vld [vmem:[%s237 + $0x19d8] sm:$0xff]
        %v1118 = vld [vmem:[%s237 + $0x19e0] sm:$0xff]
        %v1119 = vld [vmem:[%s237 + $0x19e8] sm:$0xff]
        %v1120 = vld [vmem:[%s237 + $0x19f0] sm:$0xff]
        %v1121 = vld [vmem:[%s237 + $0x19f8] sm:$0xff]
        %v1122 = vld [vmem:[%s237 + $0x1a00] sm:$0xff]
        %v1123 = vld [vmem:[%s237 + $0x1a08] sm:$0xff]
        %v1124 = vld [vmem:[%s237 + $0x1a10] sm:$0xff]
        %v1125 = vld [vmem:[%s237 + $0x1a18] sm:$0xff]
        %v1126 = vld [vmem:[%s237 + $0x1a20] sm:$0xff]
        %v1127 = vld [vmem:[%s237 + $0x1a28] sm:$0xff]
        %v1128 = vld [vmem:[%s237 + $0x1a30] sm:$0xff]
        %v1129 = vld [vmem:[%s237 + $0x1a38] sm:$0xff]
        %v1130 = vld [vmem:[%s237 + $0x1a40] sm:$0xff]
        %v1131 = vld [vmem:[%s237 + $0x1a48] sm:$0xff]
        %v1132 = vld [vmem:[%s237 + $0x1a50] sm:$0xff]
        %v1133 = vld [vmem:[%s237 + $0x1a58] sm:$0xff]
        %v1134 = vld [vmem:[%s237 + $0x1a60] sm:$0xff]
        %v1135 = vld [vmem:[%s237 + $0x1a68] sm:$0xff]
        %v1136 = vld [vmem:[%s237 + $0x1a70] sm:$0xff]
        %v1137 = vld [vmem:[%s237 + $0x1a78] sm:$0xff]
        %v1138 = vld [vmem:[%s237 + $0x1a80] sm:$0xff]
        %v1139 = vld [vmem:[%s237 + $0x1a88] sm:$0xff]
        %v1140 = vld [vmem:[%s237 + $0x1a90] sm:$0xff]
        %v1141 = vld [vmem:[%s237 + $0x1a98] sm:$0xff]
        %v1142 = vld [vmem:[%s237 + $0x1aa0] sm:$0xff]
        %v1143 = vld [vmem:[%s237 + $0x1aa8] sm:$0xff]
        %v1144 = vld [vmem:[%s237 + $0x1ab0] sm:$0xff]
        %v1145 = vld [vmem:[%s237 + $0x1ab8] sm:$0xff]
        %v1146 = vld [vmem:[%s237 + $0x1ac0] sm:$0xff]
        %v1147 = vld [vmem:[%s237 + $0x1ac8] sm:$0xff]
        %v1148 = vld [vmem:[%s237 + $0x1ad0] sm:$0xff]
        %v1149 = vld [vmem:[%s237 + $0x1ad8] sm:$0xff]
        %v1150 = vld [vmem:[%s237 + $0x1ae0] sm:$0xff]
        %v1151 = vld [vmem:[%s237 + $0x1ae8] sm:$0xff]
        %v1152 = vld [vmem:[%s237 + $0x1af0] sm:$0xff]
        %v1153 = vld [vmem:[%s237 + $0x1af8] sm:$0xff]
        %v1154 = vld [vmem:[%s237 + $0x1b00] sm:$0xff]
        %v1155 = vld [vmem:[%s237 + $0x1b08] sm:$0xff]
        %v1156 = vld [vmem:[%s237 + $0x1b10] sm:$0xff]
        %v1157 = vld [vmem:[%s237 + $0x1b18] sm:$0xff]
        %v1158 = vld [vmem:[%s237 + $0x1b20] sm:$0xff]
        %v1159 = vld [vmem:[%s237 + $0x1b28] sm:$0xff]
        %v1160 = vld [vmem:[%s237 + $0x1b30] sm:$0xff]
        %v1161 = vld [vmem:[%s237 + $0x1b38] sm:$0xff]
        %v1162 = vld [vmem:[%s237 + $0x1b40] sm:$0xff]
        %v1163 = vld [vmem:[%s237 + $0x1b48] sm:$0xff]
        %v1164 = vld [vmem:[%s237 + $0x1b50] sm:$0xff]
        %v1165 = vld [vmem:[%s237 + $0x1b58] sm:$0xff]
        %v1166 = vld [vmem:[%s237 + $0x1b60] sm:$0xff]
        %v1167 = vld [vmem:[%s237 + $0x1b68] sm:$0xff]
        %v1168 = vld [vmem:[%s237 + $0x1b70] sm:$0xff]
        %v1169 = vld [vmem:[%s237 + $0x1b78] sm:$0xff]
        %v1170 = vld [vmem:[%s237 + $0x1b80] sm:$0xff]
        %v1171 = vld [vmem:[%s237 + $0x1b88] sm:$0xff]
        %v1172 = vld [vmem:[%s237 + $0x1b90] sm:$0xff]
        %v1173 = vld [vmem:[%s237 + $0x1b98] sm:$0xff]
        %v1174 = vld [vmem:[%s237 + $0x1ba0] sm:$0xff]
        %v1175 = vld [vmem:[%s237 + $0x1ba8] sm:$0xff]
        %v1176 = vld [vmem:[%s237 + $0x1bb0] sm:$0xff]
        %v1177 = vld [vmem:[%s237 + $0x1bb8] sm:$0xff]
        %v1178 = vld [vmem:[%s237 + $0x1bc0] sm:$0xff]
        %v1179 = vld [vmem:[%s237 + $0x1bc8] sm:$0xff]
        %v1180 = vld [vmem:[%s237 + $0x1bd0] sm:$0xff]
        %v1181 = vld [vmem:[%s237 + $0x1bd8] sm:$0xff]
        %v1182 = vld [vmem:[%s237 + $0x1be0] sm:$0xff]
        %v1183 = vld [vmem:[%s237 + $0x1be8] sm:$0xff]
        %v1184 = vld [vmem:[%s237 + $0x1bf0] sm:$0xff]
        %v1185 = vld [vmem:[%s237 + $0x1bf8] sm:$0xff]
        %v1193 = vcombine.high %v283, %v283
        %v1195 = vunpack.c.l.s4 1966171168
        %v1196 = vunpack.c.0.s8 %v1195
        %v1197 = vlaneseq
        %v1198 = vshrl.u32 %v1197, 7
        %v1199 = vsub.s32 %v1196, %v1198
        %v1200 = vrot.slane %v283, %v1199
        %v1202 = vunpack.c.l.s4 1966171168
        %v1203 = vunpack.c.0.s8 %v1202
        %v1204 = vlaneseq
        %v1205 = vshrl.u32 %v1204, 7
        %v1206 = vsub.s32 %v1203, %v1205
        %v1207 = vrot.slane %v1193, %v1206
        %v1208 = vcombine.high %v1200, %v1200
        %v1209 = vcombine.high %v1207, %v1207
        %v1211 = vunpack.c.l.s4 1966171168
        %v1212 = vunpack.c.0.s8 %v1211
        %v1213 = vlaneseq
        %v1214 = vshrl.u32 %v1213, 7
        %v1215 = vsub.s32 %v1212, %v1214
        %v1216 = vrot.slane %v1200, %v1215
        %v1218 = vunpack.c.l.s4 1966171168
        %v1219 = vunpack.c.0.s8 %v1218
        %v1220 = vlaneseq
        %v1221 = vshrl.u32 %v1220, 7
        %v1222 = vsub.s32 %v1219, %v1221
        %v1223 = vrot.slane %v1207, %v1222
        %v1225 = vunpack.c.l.s4 1966171168
        %v1226 = vunpack.c.0.s8 %v1225
        %v1227 = vlaneseq
        %v1228 = vshrl.u32 %v1227, 7
        %v1229 = vsub.s32 %v1226, %v1228
        %v1230 = vrot.slane %v1208, %v1229
        %v1232 = vunpack.c.l.s4 1966171168
        %v1233 = vunpack.c.0.s8 %v1232
        %v1234 = vlaneseq
        %v1235 = vshrl.u32 %v1234, 7
        %v1236 = vsub.s32 %v1233, %v1235
        %v1237 = vrot.slane %v1209, %v1236
        %v1238 = vcombine.high %v1216, %v1216
        %v1239 = vcombine.high %v1223, %v1223
        %v1240 = vcombine.high %v1230, %v1230
        %v1241 = vcombine.high %v1237, %v1237
        %v1242 = vcombine.high %v284, %v284
        %v1244 = vunpack.c.l.s4 1966171168
        %v1245 = vunpack.c.0.s8 %v1244
        %v1246 = vlaneseq
        %v1247 = vshrl.u32 %v1246, 7
        %v1248 = vsub.s32 %v1245, %v1247
        %v1249 = vrot.slane %v284, %v1248
        %v1251 = vunpack.c.l.s4 1966171168
        %v1252 = vunpack.c.0.s8 %v1251
        %v1253 = vlaneseq
        %v1254 = vshrl.u32 %v1253, 7
        %v1255 = vsub.s32 %v1252, %v1254
        %v1256 = vrot.slane %v1242, %v1255
        %v1257 = vcombine.high %v1249, %v1249
        %v1258 = vcombine.high %v1256, %v1256
        %v1260 = vunpack.c.l.s4 1966171168
        %v1261 = vunpack.c.0.s8 %v1260
        %v1262 = vlaneseq
        %v1263 = vshrl.u32 %v1262, 7
        %v1264 = vsub.s32 %v1261, %v1263
        %v1265 = vrot.slane %v1249, %v1264
        %v1267 = vunpack.c.l.s4 1966171168
        %v1268 = vunpack.c.0.s8 %v1267
        %v1269 = vlaneseq
        %v1270 = vshrl.u32 %v1269, 7
        %v1271 = vsub.s32 %v1268, %v1270
        %v1272 = vrot.slane %v1256, %v1271
        %v1274 = vunpack.c.l.s4 1966171168
        %v1275 = vunpack.c.0.s8 %v1274
        %v1276 = vlaneseq
        %v1277 = vshrl.u32 %v1276, 7
        %v1278 = vsub.s32 %v1275, %v1277
        %v1279 = vrot.slane %v1257, %v1278
        %v1281 = vunpack.c.l.s4 1966171168
        %v1282 = vunpack.c.0.s8 %v1281
        %v1283 = vlaneseq
        %v1284 = vshrl.u32 %v1283, 7
        %v1285 = vsub.s32 %v1282, %v1284
        %v1286 = vrot.slane %v1258, %v1285
        %v1287 = vcombine.high %v1265, %v1265
        %v1288 = vcombine.high %v1272, %v1272
        %v1289 = vcombine.high %v1279, %v1279
        %v1290 = vcombine.high %v1286, %v1286
        %v1291 = vcombine.high %v285, %v285
        %v1293 = vunpack.c.l.s4 1966171168
        %v1294 = vunpack.c.0.s8 %v1293
        %v1295 = vlaneseq
        %v1296 = vshrl.u32 %v1295, 7
        %v1297 = vsub.s32 %v1294, %v1296
        %v1298 = vrot.slane %v285, %v1297
        %v1300 = vunpack.c.l.s4 1966171168
        %v1301 = vunpack.c.0.s8 %v1300
        %v1302 = vlaneseq
        %v1303 = vshrl.u32 %v1302, 7
        %v1304 = vsub.s32 %v1301, %v1303
        %v1305 = vrot.slane %v1291, %v1304
        %v1306 = vcombine.high %v1298, %v1298
        %v1307 = vcombine.high %v1305, %v1305
        %v1309 = vunpack.c.l.s4 1966171168
        %v1310 = vunpack.c.0.s8 %v1309
        %v1311 = vlaneseq
        %v1312 = vshrl.u32 %v1311, 7
        %v1313 = vsub.s32 %v1310, %v1312
        %v1314 = vrot.slane %v1298, %v1313
        %v1316 = vunpack.c.l.s4 1966171168
        %v1317 = vunpack.c.0.s8 %v1316
        %v1318 = vlaneseq
        %v1319 = vshrl.u32 %v1318, 7
        %v1320 = vsub.s32 %v1317, %v1319
        %v1321 = vrot.slane %v1305, %v1320
        %v1323 = vunpack.c.l.s4 1966171168
        %v1324 = vunpack.c.0.s8 %v1323
        %v1325 = vlaneseq
        %v1326 = vshrl.u32 %v1325, 7
        %v1327 = vsub.s32 %v1324, %v1326
        %v1328 = vrot.slane %v1306, %v1327
        %v1330 = vunpack.c.l.s4 1966171168
        %v1331 = vunpack.c.0.s8 %v1330
        %v1332 = vlaneseq
        %v1333 = vshrl.u32 %v1332, 7
        %v1334 = vsub.s32 %v1331, %v1333
        %v1335 = vrot.slane %v1307, %v1334
        %v1336 = vcombine.high %v1314, %v1314
        %v1337 = vcombine.high %v1321, %v1321
        %v1338 = vcombine.high %v1328, %v1328
        %v1339 = vcombine.high %v1335, %v1335
        %v1340 = vcombine.high %v286, %v286
        %v1342 = vunpack.c.l.s4 1966171168
        %v1343 = vunpack.c.0.s8 %v1342
        %v1344 = vlaneseq
        %v1345 = vshrl.u32 %v1344, 7
        %v1346 = vsub.s32 %v1343, %v1345
        %v1347 = vrot.slane %v286, %v1346
        %v1349 = vunpack.c.l.s4 1966171168
        %v1350 = vunpack.c.0.s8 %v1349
        %v1351 = vlaneseq
        %v1352 = vshrl.u32 %v1351, 7
        %v1353 = vsub.s32 %v1350, %v1352
        %v1354 = vrot.slane %v1340, %v1353
        %v1355 = vcombine.high %v1347, %v1347
        %v1356 = vcombine.high %v1354, %v1354
        %v1358 = vunpack.c.l.s4 1966171168
        %v1359 = vunpack.c.0.s8 %v1358
        %v1360 = vlaneseq
        %v1361 = vshrl.u32 %v1360, 7
        %v1362 = vsub.s32 %v1359, %v1361
        %v1363 = vrot.slane %v1347, %v1362
        %v1365 = vunpack.c.l.s4 1966171168
        %v1366 = vunpack.c.0.s8 %v1365
        %v1367 = vlaneseq
        %v1368 = vshrl.u32 %v1367, 7
        %v1369 = vsub.s32 %v1366, %v1368
        %v1370 = vrot.slane %v1354, %v1369
        %v1372 = vunpack.c.l.s4 1966171168
        %v1373 = vunpack.c.0.s8 %v1372
        %v1374 = vlaneseq
        %v1375 = vshrl.u32 %v1374, 7
        %v1376 = vsub.s32 %v1373, %v1375
        %v1377 = vrot.slane %v1355, %v1376
        %v1379 = vunpack.c.l.s4 1966171168
        %v1380 = vunpack.c.0.s8 %v1379
        %v1381 = vlaneseq
        %v1382 = vshrl.u32 %v1381, 7
        %v1383 = vsub.s32 %v1380, %v1382
        %v1384 = vrot.slane %v1356, %v1383
        %v1385 = vcombine.high %v1363, %v1363
        %v1386 = vcombine.high %v1370, %v1370
        %v1387 = vcombine.high %v1377, %v1377
        %v1388 = vcombine.high %v1384, %v1384
        %v1389 = vcombine.high %v287, %v287
        %v1391 = vunpack.c.l.s4 1966171168
        %v1392 = vunpack.c.0.s8 %v1391
        %v1393 = vlaneseq
        %v1394 = vshrl.u32 %v1393, 7
        %v1395 = vsub.s32 %v1392, %v1394
        %v1396 = vrot.slane %v287, %v1395
        %v1398 = vunpack.c.l.s4 1966171168
        %v1399 = vunpack.c.0.s8 %v1398
        %v1400 = vlaneseq
        %v1401 = vshrl.u32 %v1400, 7
        %v1402 = vsub.s32 %v1399, %v1401
        %v1403 = vrot.slane %v1389, %v1402
        %v1404 = vcombine.high %v1396, %v1396
        %v1405 = vcombine.high %v1403, %v1403
        %v1407 = vunpack.c.l.s4 1966171168
        %v1408 = vunpack.c.0.s8 %v1407
        %v1409 = vlaneseq
        %v1410 = vshrl.u32 %v1409, 7
        %v1411 = vsub.s32 %v1408, %v1410
        %v1412 = vrot.slane %v1396, %v1411
        %v1414 = vunpack.c.l.s4 1966171168
        %v1415 = vunpack.c.0.s8 %v1414
        %v1416 = vlaneseq
        %v1417 = vshrl.u32 %v1416, 7
        %v1418 = vsub.s32 %v1415, %v1417
        %v1419 = vrot.slane %v1403, %v1418
        %v1421 = vunpack.c.l.s4 1966171168
        %v1422 = vunpack.c.0.s8 %v1421
        %v1423 = vlaneseq
        %v1424 = vshrl.u32 %v1423, 7
        %v1425 = vsub.s32 %v1422, %v1424
        %v1426 = vrot.slane %v1404, %v1425
        %v1428 = vunpack.c.l.s4 1966171168
        %v1429 = vunpack.c.0.s8 %v1428
        %v1430 = vlaneseq
        %v1431 = vshrl.u32 %v1430, 7
        %v1432 = vsub.s32 %v1429, %v1431
        %v1433 = vrot.slane %v1405, %v1432
        %v1434 = vcombine.high %v1412, %v1412
        %v1435 = vcombine.high %v1419, %v1419
        %v1436 = vcombine.high %v1426, %v1426
        %v1437 = vcombine.high %v1433, %v1433
        %v1438 = vcombine.high %v288, %v288
        %v1440 = vunpack.c.l.s4 1966171168
        %v1441 = vunpack.c.0.s8 %v1440
        %v1442 = vlaneseq
        %v1443 = vshrl.u32 %v1442, 7
        %v1444 = vsub.s32 %v1441, %v1443
        %v1445 = vrot.slane %v288, %v1444
        %v1447 = vunpack.c.l.s4 1966171168
        %v1448 = vunpack.c.0.s8 %v1447
        %v1449 = vlaneseq
        %v1450 = vshrl.u32 %v1449, 7
        %v1451 = vsub.s32 %v1448, %v1450
        %v1452 = vrot.slane %v1438, %v1451
        %v1453 = vcombine.high %v1445, %v1445
        %v1454 = vcombine.high %v1452, %v1452
        %v1456 = vunpack.c.l.s4 1966171168
        %v1457 = vunpack.c.0.s8 %v1456
        %v1458 = vlaneseq
        %v1459 = vshrl.u32 %v1458, 7
        %v1460 = vsub.s32 %v1457, %v1459
        %v1461 = vrot.slane %v1445, %v1460
        %v1463 = vunpack.c.l.s4 1966171168
        %v1464 = vunpack.c.0.s8 %v1463
        %v1465 = vlaneseq
        %v1466 = vshrl.u32 %v1465, 7
        %v1467 = vsub.s32 %v1464, %v1466
        %v1468 = vrot.slane %v1452, %v1467
        %v1470 = vunpack.c.l.s4 1966171168
        %v1471 = vunpack.c.0.s8 %v1470
        %v1472 = vlaneseq
        %v1473 = vshrl.u32 %v1472, 7
        %v1474 = vsub.s32 %v1471, %v1473
        %v1475 = vrot.slane %v1453, %v1474
        %v1477 = vunpack.c.l.s4 1966171168
        %v1478 = vunpack.c.0.s8 %v1477
        %v1479 = vlaneseq
        %v1480 = vshrl.u32 %v1479, 7
        %v1481 = vsub.s32 %v1478, %v1480
        %v1482 = vrot.slane %v1454, %v1481
        %v1483 = vcombine.high %v1461, %v1461
        %v1484 = vcombine.high %v1468, %v1468
        %v1485 = vcombine.high %v1475, %v1475
        %v1486 = vcombine.high %v1482, %v1482
        %v1487 = vcombine.high %v289, %v289
        %v1489 = vunpack.c.l.s4 1966171168
        %v1490 = vunpack.c.0.s8 %v1489
        %v1491 = vlaneseq
        %v1492 = vshrl.u32 %v1491, 7
        %v1493 = vsub.s32 %v1490, %v1492
        %v1494 = vrot.slane %v289, %v1493
        %v1496 = vunpack.c.l.s4 1966171168
        %v1497 = vunpack.c.0.s8 %v1496
        %v1498 = vlaneseq
        %v1499 = vshrl.u32 %v1498, 7
        %v1500 = vsub.s32 %v1497, %v1499
        %v1501 = vrot.slane %v1487, %v1500
        %v1502 = vcombine.high %v1494, %v1494
        %v1503 = vcombine.high %v1501, %v1501
        %v1505 = vunpack.c.l.s4 1966171168
        %v1506 = vunpack.c.0.s8 %v1505
        %v1507 = vlaneseq
        %v1508 = vshrl.u32 %v1507, 7
        %v1509 = vsub.s32 %v1506, %v1508
        %v1510 = vrot.slane %v1494, %v1509
        %v1512 = vunpack.c.l.s4 1966171168
        %v1513 = vunpack.c.0.s8 %v1512
        %v1514 = vlaneseq
        %v1515 = vshrl.u32 %v1514, 7
        %v1516 = vsub.s32 %v1513, %v1515
        %v1517 = vrot.slane %v1501, %v1516
        %v1519 = vunpack.c.l.s4 1966171168
        %v1520 = vunpack.c.0.s8 %v1519
        %v1521 = vlaneseq
        %v1522 = vshrl.u32 %v1521, 7
        %v1523 = vsub.s32 %v1520, %v1522
        %v1524 = vrot.slane %v1502, %v1523
        %v1526 = vunpack.c.l.s4 1966171168
        %v1527 = vunpack.c.0.s8 %v1526
        %v1528 = vlaneseq
        %v1529 = vshrl.u32 %v1528, 7
        %v1530 = vsub.s32 %v1527, %v1529
        %v1531 = vrot.slane %v1503, %v1530
        %v1532 = vcombine.high %v1510, %v1510
        %v1533 = vcombine.high %v1517, %v1517
        %v1534 = vcombine.high %v1524, %v1524
        %v1535 = vcombine.high %v1531, %v1531
        %v2488 = vunpack.c.l.b16 %v290
        %v2489 = vunpack.c.h.b16 %v290
        %v2490 = vunpack.c.l.b16 %v291
        %v2491 = vunpack.c.h.b16 %v291
        %v2492 = vunpack.c.l.b16 %v292
        %v2493 = vunpack.c.h.b16 %v292
        %v2494 = vunpack.c.l.b16 %v293
        %v2495 = vunpack.c.h.b16 %v293
        %v2496 = vunpack.c.l.b16 %v294
        %v2497 = vunpack.c.h.b16 %v294
        %v2498 = vunpack.c.l.b16 %v295
        %v2499 = vunpack.c.h.b16 %v295
        %v2500 = vunpack.c.l.b16 %v296
        %v2501 = vunpack.c.h.b16 %v296
        %v2502 = vunpack.c.l.b16 %v297
        %v2503 = vunpack.c.h.b16 %v297
        %v2504 = vunpack.c.l.b16 %v298
        %v2505 = vunpack.c.h.b16 %v298
        %v2506 = vunpack.c.l.b16 %v299
        %v2507 = vunpack.c.h.b16 %v299
        %v2508 = vunpack.c.l.b16 %v300
        %v2509 = vunpack.c.h.b16 %v300
        %v2510 = vunpack.c.l.b16 %v301
        %v2511 = vunpack.c.h.b16 %v301
        %v2512 = vunpack.c.l.b16 %v302
        %v2513 = vunpack.c.h.b16 %v302
        %v2514 = vunpack.c.l.b16 %v303
        %v2515 = vunpack.c.h.b16 %v303
        %v2516 = vunpack.c.l.b16 %v304
        %v2517 = vunpack.c.h.b16 %v304
        %v2518 = vunpack.c.l.b16 %v305
        %v2519 = vunpack.c.h.b16 %v305
        %v2520 = vunpack.c.l.b16 %v306
        %v2521 = vunpack.c.h.b16 %v306
        %v2522 = vunpack.c.l.b16 %v307
        %v2523 = vunpack.c.h.b16 %v307
        %v2524 = vunpack.c.l.b16 %v308
        %v2525 = vunpack.c.h.b16 %v308
        %v2526 = vunpack.c.l.b16 %v309
        %v2527 = vunpack.c.h.b16 %v309
        %v2528 = vunpack.c.l.b16 %v310
        %v2529 = vunpack.c.h.b16 %v310
        %v2530 = vunpack.c.l.b16 %v311
        %v2531 = vunpack.c.h.b16 %v311
        %v2532 = vunpack.c.l.b16 %v312
        %v2533 = vunpack.c.h.b16 %v312
        %v2534 = vunpack.c.l.b16 %v313
        %v2535 = vunpack.c.h.b16 %v313
        %v2536 = vunpack.c.l.b16 %v314
        %v2537 = vunpack.c.h.b16 %v314
        %v2538 = vunpack.c.l.b16 %v315
        %v2539 = vunpack.c.h.b16 %v315
        %v2540 = vunpack.c.l.b16 %v316
        %v2541 = vunpack.c.h.b16 %v316
        %v2542 = vunpack.c.l.b16 %v317
        %v2543 = vunpack.c.h.b16 %v317
        %v2544 = vunpack.c.l.b16 %v318
        %v2545 = vunpack.c.h.b16 %v318
        %v2546 = vunpack.c.l.b16 %v319
        %v2547 = vunpack.c.h.b16 %v319
        %v2548 = vunpack.c.l.b16 %v320
        %v2549 = vunpack.c.h.b16 %v320
        %v2550 = vunpack.c.l.b16 %v321
        %v2551 = vunpack.c.h.b16 %v321
        %v2552 = vunpack.c.l.b16 %v322
        %v2553 = vunpack.c.h.b16 %v322
        %v2554 = vunpack.c.l.b16 %v323
        %v2555 = vunpack.c.h.b16 %v323
        %v2556 = vunpack.c.l.b16 %v324
        %v2557 = vunpack.c.h.b16 %v324
        %v2558 = vunpack.c.l.b16 %v325
        %v2559 = vunpack.c.h.b16 %v325
        %v2560 = vunpack.c.l.b16 %v326
        %v2561 = vunpack.c.h.b16 %v326
        %v2562 = vunpack.c.l.b16 %v327
        %v2563 = vunpack.c.h.b16 %v327
        %v2564 = vunpack.c.l.b16 %v328
        %v2565 = vunpack.c.h.b16 %v328
        %v2566 = vunpack.c.l.b16 %v329
        %v2567 = vunpack.c.h.b16 %v329
        %v2568 = vunpack.c.l.b16 %v330
        %v2569 = vunpack.c.h.b16 %v330
        %v2570 = vunpack.c.l.b16 %v331
        %v2571 = vunpack.c.h.b16 %v331
        %v2572 = vunpack.c.l.b16 %v332
        %v2573 = vunpack.c.h.b16 %v332
        %v2574 = vunpack.c.l.b16 %v333
        %v2575 = vunpack.c.h.b16 %v333
        %v2576 = vunpack.c.l.b16 %v334
        %v2577 = vunpack.c.h.b16 %v334
        %v2578 = vunpack.c.l.b16 %v335
        %v2579 = vunpack.c.h.b16 %v335
        %v2580 = vunpack.c.l.b16 %v336
        %v2581 = vunpack.c.h.b16 %v336
        %v2582 = vunpack.c.l.b16 %v337
        %v2583 = vunpack.c.h.b16 %v337
        %v2584 = vunpack.c.l.b16 %v338
        %v2585 = vunpack.c.h.b16 %v338
        %v2586 = vunpack.c.l.b16 %v339
        %v2587 = vunpack.c.h.b16 %v339
        %v2588 = vunpack.c.l.b16 %v340
        %v2589 = vunpack.c.h.b16 %v340
        %v2590 = vunpack.c.l.b16 %v341
        %v2591 = vunpack.c.h.b16 %v341
        %v2592 = vunpack.c.l.b16 %v342
        %v2593 = vunpack.c.h.b16 %v342
        %v2594 = vunpack.c.l.b16 %v343
        %v2595 = vunpack.c.h.b16 %v343
        %v2596 = vunpack.c.l.b16 %v344
        %v2597 = vunpack.c.h.b16 %v344
        %v2598 = vunpack.c.l.b16 %v345
        %v2599 = vunpack.c.h.b16 %v345
        %v2600 = vunpack.c.l.b16 %v346
        %v2601 = vunpack.c.h.b16 %v346
        %v2602 = vunpack.c.l.b16 %v347
        %v2603 = vunpack.c.h.b16 %v347
        %v2604 = vunpack.c.l.b16 %v348
        %v2605 = vunpack.c.h.b16 %v348
        %v2606 = vunpack.c.l.b16 %v349
        %v2607 = vunpack.c.h.b16 %v349
        %v2608 = vunpack.c.l.b16 %v350
        %v2609 = vunpack.c.h.b16 %v350
        %v2610 = vunpack.c.l.b16 %v351
        %v2611 = vunpack.c.h.b16 %v351
        %v2612 = vunpack.c.l.b16 %v352
        %v2613 = vunpack.c.h.b16 %v352
        %v2614 = vunpack.c.l.b16 %v353
        %v2615 = vunpack.c.h.b16 %v353
        %v2616 = vunpack.c.l.b16 %v354
        %v2617 = vunpack.c.h.b16 %v354
        %v2618 = vunpack.c.l.b16 %v355
        %v2619 = vunpack.c.h.b16 %v355
        %v2620 = vunpack.c.l.b16 %v356
        %v2621 = vunpack.c.h.b16 %v356
        %v2622 = vunpack.c.l.b16 %v357
        %v2623 = vunpack.c.h.b16 %v357
        %v2624 = vunpack.c.l.b16 %v358
        %v2625 = vunpack.c.h.b16 %v358
        %v2626 = vunpack.c.l.b16 %v359
        %v2627 = vunpack.c.h.b16 %v359
        %v2628 = vunpack.c.l.b16 %v360
        %v2629 = vunpack.c.h.b16 %v360
        %v2630 = vunpack.c.l.b16 %v361
        %v2631 = vunpack.c.h.b16 %v361
        %v2632 = vunpack.c.l.b16 %v362
        %v2633 = vunpack.c.h.b16 %v362
        %v2634 = vunpack.c.l.b16 %v363
        %v2635 = vunpack.c.h.b16 %v363
        %v2636 = vunpack.c.l.b16 %v364
        %v2637 = vunpack.c.h.b16 %v364
        %v2638 = vunpack.c.l.b16 %v365
        %v2639 = vunpack.c.h.b16 %v365
        %v2640 = vunpack.c.l.b16 %v366
        %v2641 = vunpack.c.h.b16 %v366
        %v2642 = vunpack.c.l.b16 %v367
        %v2643 = vunpack.c.h.b16 %v367
        %v2644 = vunpack.c.l.b16 %v368
        %v2645 = vunpack.c.h.b16 %v368
        %v2646 = vunpack.c.l.b16 %v369
        %v2647 = vunpack.c.h.b16 %v369
        %v2648 = vunpack.c.l.b16 %v370
        %v2649 = vunpack.c.h.b16 %v370
        %v2650 = vunpack.c.l.b16 %v371
        %v2651 = vunpack.c.h.b16 %v371
        %v2652 = vunpack.c.l.b16 %v372
        %v2653 = vunpack.c.h.b16 %v372
        %v2654 = vunpack.c.l.b16 %v373
        %v2655 = vunpack.c.h.b16 %v373
        %v2656 = vunpack.c.l.b16 %v374
        %v2657 = vunpack.c.h.b16 %v374
        %v2658 = vunpack.c.l.b16 %v375
        %v2659 = vunpack.c.h.b16 %v375
        %v2660 = vunpack.c.l.b16 %v376
        %v2661 = vunpack.c.h.b16 %v376
        %v2662 = vunpack.c.l.b16 %v377
        %v2663 = vunpack.c.h.b16 %v377
        %v2664 = vunpack.c.l.b16 %v378
        %v2665 = vunpack.c.h.b16 %v378
        %v2666 = vunpack.c.l.b16 %v379
        %v2667 = vunpack.c.h.b16 %v379
        %v2668 = vunpack.c.l.b16 %v380
        %v2669 = vunpack.c.h.b16 %v380
        %v2670 = vunpack.c.l.b16 %v381
        %v2671 = vunpack.c.h.b16 %v381
        %v2672 = vunpack.c.l.b16 %v382
        %v2673 = vunpack.c.h.b16 %v382
        %v2674 = vunpack.c.l.b16 %v383
        %v2675 = vunpack.c.h.b16 %v383
        %v2676 = vunpack.c.l.b16 %v384
        %v2677 = vunpack.c.h.b16 %v384
        %v2678 = vunpack.c.l.b16 %v385
        %v2679 = vunpack.c.h.b16 %v385
        %v2680 = vunpack.c.l.b16 %v386
        %v2681 = vunpack.c.h.b16 %v386
        %v2682 = vunpack.c.l.b16 %v387
        %v2683 = vunpack.c.h.b16 %v387
        %v2684 = vunpack.c.l.b16 %v388
        %v2685 = vunpack.c.h.b16 %v388
        %v2686 = vunpack.c.l.b16 %v389
        %v2687 = vunpack.c.h.b16 %v389
        %v2688 = vunpack.c.l.b16 %v390
        %v2689 = vunpack.c.h.b16 %v390
        %v2690 = vunpack.c.l.b16 %v391
        %v2691 = vunpack.c.h.b16 %v391
        %v2692 = vunpack.c.l.b16 %v392
        %v2693 = vunpack.c.h.b16 %v392
        %v2694 = vunpack.c.l.b16 %v393
        %v2695 = vunpack.c.h.b16 %v393
        %v2696 = vunpack.c.l.b16 %v394
        %v2697 = vunpack.c.h.b16 %v394
        %v2698 = vunpack.c.l.b16 %v395
        %v2699 = vunpack.c.h.b16 %v395
        %v2700 = vunpack.c.l.b16 %v396
        %v2701 = vunpack.c.h.b16 %v396
        %v2702 = vunpack.c.l.b16 %v397
        %v2703 = vunpack.c.h.b16 %v397
        %v2704 = vunpack.c.l.b16 %v398
        %v2705 = vunpack.c.h.b16 %v398
        %v2706 = vunpack.c.l.b16 %v399
        %v2707 = vunpack.c.h.b16 %v399
        %v2708 = vunpack.c.l.b16 %v400
        %v2709 = vunpack.c.h.b16 %v400
        %v2710 = vunpack.c.l.b16 %v401
        %v2711 = vunpack.c.h.b16 %v401
        %v2712 = vunpack.c.l.b16 %v402
        %v2713 = vunpack.c.h.b16 %v402
        %v2714 = vunpack.c.l.b16 %v403
        %v2715 = vunpack.c.h.b16 %v403
        %v2716 = vunpack.c.l.b16 %v404
        %v2717 = vunpack.c.h.b16 %v404
        %v2718 = vunpack.c.l.b16 %v405
        %v2719 = vunpack.c.h.b16 %v405
        %v2720 = vunpack.c.l.b16 %v406
        %v2721 = vunpack.c.h.b16 %v406
        %v2722 = vunpack.c.l.b16 %v407
        %v2723 = vunpack.c.h.b16 %v407
        %v2724 = vunpack.c.l.b16 %v408
        %v2725 = vunpack.c.h.b16 %v408
        %v2726 = vunpack.c.l.b16 %v409
        %v2727 = vunpack.c.h.b16 %v409
        %v2728 = vunpack.c.l.b16 %v410
        %v2729 = vunpack.c.h.b16 %v410
        %v2730 = vunpack.c.l.b16 %v411
        %v2731 = vunpack.c.h.b16 %v411
        %v2732 = vunpack.c.l.b16 %v412
        %v2733 = vunpack.c.h.b16 %v412
        %v2734 = vunpack.c.l.b16 %v413
        %v2735 = vunpack.c.h.b16 %v413
        %v2736 = vunpack.c.l.b16 %v414
        %v2737 = vunpack.c.h.b16 %v414
        %v2738 = vunpack.c.l.b16 %v415
        %v2739 = vunpack.c.h.b16 %v415
        %v2740 = vunpack.c.l.b16 %v416
        %v2741 = vunpack.c.h.b16 %v416
        %v2742 = vunpack.c.l.b16 %v417
        %v2743 = vunpack.c.h.b16 %v417
        %v2744 = vunpack.c.l.b16 %v418
        %v2745 = vunpack.c.h.b16 %v418
        %v2746 = vunpack.c.l.b16 %v419
        %v2747 = vunpack.c.h.b16 %v419
        %v2748 = vunpack.c.l.b16 %v420
        %v2749 = vunpack.c.h.b16 %v420
        %v2750 = vunpack.c.l.b16 %v421
        %v2751 = vunpack.c.h.b16 %v421
        %v2752 = vunpack.c.l.b16 %v422
        %v2753 = vunpack.c.h.b16 %v422
        %v2754 = vunpack.c.l.b16 %v423
        %v2755 = vunpack.c.h.b16 %v423
        %v2756 = vunpack.c.l.b16 %v424
        %v2757 = vunpack.c.h.b16 %v424
        %v2758 = vunpack.c.l.b16 %v425
        %v2759 = vunpack.c.h.b16 %v425
        %v2760 = vunpack.c.l.b16 %v426
        %v2761 = vunpack.c.h.b16 %v426
        %v2762 = vunpack.c.l.b16 %v427
        %v2763 = vunpack.c.h.b16 %v427
        %v2764 = vunpack.c.l.b16 %v428
        %v2765 = vunpack.c.h.b16 %v428
        %v2766 = vunpack.c.l.b16 %v429
        %v2767 = vunpack.c.h.b16 %v429
        %v2768 = vunpack.c.l.b16 %v430
        %v2769 = vunpack.c.h.b16 %v430
        %v2770 = vunpack.c.l.b16 %v431
        %v2771 = vunpack.c.h.b16 %v431
        %v2772 = vunpack.c.l.b16 %v432
        %v2773 = vunpack.c.h.b16 %v432
        %v2774 = vunpack.c.l.b16 %v433
        %v2775 = vunpack.c.h.b16 %v433
        %v2776 = vunpack.c.l.b16 %v434
        %v2777 = vunpack.c.h.b16 %v434
        %v2778 = vunpack.c.l.b16 %v435
        %v2779 = vunpack.c.h.b16 %v435
        %v2780 = vunpack.c.l.b16 %v436
        %v2781 = vunpack.c.h.b16 %v436
        %v2782 = vunpack.c.l.b16 %v437
        %v2783 = vunpack.c.h.b16 %v437
        %v2784 = vunpack.c.l.b16 %v438
        %v2785 = vunpack.c.h.b16 %v438
        %v2786 = vunpack.c.l.b16 %v439
        %v2787 = vunpack.c.h.b16 %v439
        %v2788 = vunpack.c.l.b16 %v440
        %v2789 = vunpack.c.h.b16 %v440
        %v2790 = vunpack.c.l.b16 %v441
        %v2791 = vunpack.c.h.b16 %v441
        %v2792 = vunpack.c.l.b16 %v442
        %v2793 = vunpack.c.h.b16 %v442
        %v2794 = vunpack.c.l.b16 %v443
        %v2795 = vunpack.c.h.b16 %v443
        %v2796 = vunpack.c.l.b16 %v444
        %v2797 = vunpack.c.h.b16 %v444
        %v2798 = vunpack.c.l.b16 %v445
        %v2799 = vunpack.c.h.b16 %v445
        %v2800 = vunpack.c.l.b16 %v446
        %v2801 = vunpack.c.h.b16 %v446
        %v2802 = vunpack.c.l.b16 %v447
        %v2803 = vunpack.c.h.b16 %v447
        %v2804 = vunpack.c.l.b16 %v448
        %v2805 = vunpack.c.h.b16 %v448
        %v2806 = vunpack.c.l.b16 %v449
        %v2807 = vunpack.c.h.b16 %v449
        %v2808 = vunpack.c.l.b16 %v450
        %v2809 = vunpack.c.h.b16 %v450
        %v2810 = vunpack.c.l.b16 %v451
        %v2811 = vunpack.c.h.b16 %v451
        %v2812 = vunpack.c.l.b16 %v452
        %v2813 = vunpack.c.h.b16 %v452
        %v2814 = vunpack.c.l.b16 %v453
        %v2815 = vunpack.c.h.b16 %v453
        %v2816 = vunpack.c.l.b16 %v454
        %v2817 = vunpack.c.h.b16 %v454
        %v2818 = vunpack.c.l.b16 %v455
        %v2819 = vunpack.c.h.b16 %v455
        %v2820 = vunpack.c.l.b16 %v456
        %v2821 = vunpack.c.h.b16 %v456
        %v2822 = vunpack.c.l.b16 %v457
        %v2823 = vunpack.c.h.b16 %v457
        %v2824 = vunpack.c.l.b16 %v458
        %v2825 = vunpack.c.h.b16 %v458
        %v2826 = vunpack.c.l.b16 %v459
        %v2827 = vunpack.c.h.b16 %v459
        %v2828 = vunpack.c.l.b16 %v460
        %v2829 = vunpack.c.h.b16 %v460
        %v2830 = vunpack.c.l.b16 %v461
        %v2831 = vunpack.c.h.b16 %v461
        %v2832 = vunpack.c.l.b16 %v462
        %v2833 = vunpack.c.h.b16 %v462
        %v2834 = vunpack.c.l.b16 %v463
        %v2835 = vunpack.c.h.b16 %v463
        %v2836 = vunpack.c.l.b16 %v464
        %v2837 = vunpack.c.h.b16 %v464
        %v2838 = vunpack.c.l.b16 %v465
        %v2839 = vunpack.c.h.b16 %v465
        %v2840 = vunpack.c.l.b16 %v466
        %v2841 = vunpack.c.h.b16 %v466
        %v2842 = vunpack.c.l.b16 %v467
        %v2843 = vunpack.c.h.b16 %v467
        %v2844 = vunpack.c.l.b16 %v468
        %v2845 = vunpack.c.h.b16 %v468
        %v2846 = vunpack.c.l.b16 %v469
        %v2847 = vunpack.c.h.b16 %v469
        %v2848 = vunpack.c.l.b16 %v470
        %v2849 = vunpack.c.h.b16 %v470
        %v2850 = vunpack.c.l.b16 %v471
        %v2851 = vunpack.c.h.b16 %v471
        %v2852 = vunpack.c.l.b16 %v472
        %v2853 = vunpack.c.h.b16 %v472
        %v2854 = vunpack.c.l.b16 %v473
        %v2855 = vunpack.c.h.b16 %v473
        %v2856 = vunpack.c.l.b16 %v474
        %v2857 = vunpack.c.h.b16 %v474
        %v2858 = vunpack.c.l.b16 %v475
        %v2859 = vunpack.c.h.b16 %v475
        %v2860 = vunpack.c.l.b16 %v476
        %v2861 = vunpack.c.h.b16 %v476
        %v2862 = vunpack.c.l.b16 %v477
        %v2863 = vunpack.c.h.b16 %v477
        %v2864 = vunpack.c.l.b16 %v478
        %v2865 = vunpack.c.h.b16 %v478
        %v2866 = vunpack.c.l.b16 %v479
        %v2867 = vunpack.c.h.b16 %v479
        %v2868 = vunpack.c.l.b16 %v480
        %v2869 = vunpack.c.h.b16 %v480
        %v2870 = vunpack.c.l.b16 %v481
        %v2871 = vunpack.c.h.b16 %v481
        %v2872 = vunpack.c.l.b16 %v482
        %v2873 = vunpack.c.h.b16 %v482
        %v2874 = vunpack.c.l.b16 %v483
        %v2875 = vunpack.c.h.b16 %v483
        %v2876 = vunpack.c.l.b16 %v484
        %v2877 = vunpack.c.h.b16 %v484
        %v2878 = vunpack.c.l.b16 %v485
        %v2879 = vunpack.c.h.b16 %v485
        %v2880 = vunpack.c.l.b16 %v486
        %v2881 = vunpack.c.h.b16 %v486
        %v2882 = vunpack.c.l.b16 %v487
        %v2883 = vunpack.c.h.b16 %v487
        %v2884 = vunpack.c.l.b16 %v488
        %v2885 = vunpack.c.h.b16 %v488
        %v2886 = vunpack.c.l.b16 %v489
        %v2887 = vunpack.c.h.b16 %v489
        %v2888 = vunpack.c.l.b16 %v490
        %v2889 = vunpack.c.h.b16 %v490
        %v2890 = vunpack.c.l.b16 %v491
        %v2891 = vunpack.c.h.b16 %v491
        %v2892 = vunpack.c.l.b16 %v492
        %v2893 = vunpack.c.h.b16 %v492
        %v2894 = vunpack.c.l.b16 %v493
        %v2895 = vunpack.c.h.b16 %v493
        %v2896 = vunpack.c.l.b16 %v494
        %v2897 = vunpack.c.h.b16 %v494
        %v2898 = vunpack.c.l.b16 %v495
        %v2899 = vunpack.c.h.b16 %v495
        %v2900 = vunpack.c.l.b16 %v496
        %v2901 = vunpack.c.h.b16 %v496
        %v2902 = vunpack.c.l.b16 %v497
        %v2903 = vunpack.c.h.b16 %v497
        %v2904 = vunpack.c.l.b16 %v498
        %v2905 = vunpack.c.h.b16 %v498
        %v2906 = vunpack.c.l.b16 %v499
        %v2907 = vunpack.c.h.b16 %v499
        %v2908 = vunpack.c.l.b16 %v500
        %v2909 = vunpack.c.h.b16 %v500
        %v2910 = vunpack.c.l.b16 %v501
        %v2911 = vunpack.c.h.b16 %v501
        %v2912 = vunpack.c.l.b16 %v502
        %v2913 = vunpack.c.h.b16 %v502
        %v2914 = vunpack.c.l.b16 %v503
        %v2915 = vunpack.c.h.b16 %v503
        %v2916 = vunpack.c.l.b16 %v504
        %v2917 = vunpack.c.h.b16 %v504
        %v2918 = vunpack.c.l.b16 %v505
        %v2919 = vunpack.c.h.b16 %v505
        %v2920 = vunpack.c.l.b16 %v506
        %v2921 = vunpack.c.h.b16 %v506
        %v2922 = vunpack.c.l.b16 %v507
        %v2923 = vunpack.c.h.b16 %v507
        %v2924 = vunpack.c.l.b16 %v508
        %v2925 = vunpack.c.h.b16 %v508
        %v2926 = vunpack.c.l.b16 %v509
        %v2927 = vunpack.c.h.b16 %v509
        %v2928 = vunpack.c.l.b16 %v510
        %v2929 = vunpack.c.h.b16 %v510
        %v2930 = vunpack.c.l.b16 %v511
        %v2931 = vunpack.c.h.b16 %v511
        %v2932 = vunpack.c.l.b16 %v512
        %v2933 = vunpack.c.h.b16 %v512
        %v2934 = vunpack.c.l.b16 %v513
        %v2935 = vunpack.c.h.b16 %v513
        %v2936 = vunpack.c.l.b16 %v514
        %v2937 = vunpack.c.h.b16 %v514
        %v2938 = vunpack.c.l.b16 %v515
        %v2939 = vunpack.c.h.b16 %v515
        %v2940 = vunpack.c.l.b16 %v516
        %v2941 = vunpack.c.h.b16 %v516
        %v2942 = vunpack.c.l.b16 %v517
        %v2943 = vunpack.c.h.b16 %v517
        %v2944 = vunpack.c.l.b16 %v518
        %v2945 = vunpack.c.h.b16 %v518
        %v2946 = vunpack.c.l.b16 %v519
        %v2947 = vunpack.c.h.b16 %v519
        %v2948 = vunpack.c.l.b16 %v520
        %v2949 = vunpack.c.h.b16 %v520
        %v2950 = vunpack.c.l.b16 %v521
        %v2951 = vunpack.c.h.b16 %v521
        %v2952 = vunpack.c.l.b16 %v522
        %v2953 = vunpack.c.h.b16 %v522
        %v2954 = vunpack.c.l.b16 %v523
        %v2955 = vunpack.c.h.b16 %v523
        %v2956 = vunpack.c.l.b16 %v524
        %v2957 = vunpack.c.h.b16 %v524
        %v2958 = vunpack.c.l.b16 %v525
        %v2959 = vunpack.c.h.b16 %v525
        %v2960 = vunpack.c.l.b16 %v526
        %v2961 = vunpack.c.h.b16 %v526
        %v2962 = vunpack.c.l.b16 %v527
        %v2963 = vunpack.c.h.b16 %v527
        %v2964 = vunpack.c.l.b16 %v528
        %v2965 = vunpack.c.h.b16 %v528
        %v2966 = vunpack.c.l.b16 %v529
        %v2967 = vunpack.c.h.b16 %v529
        %v2968 = vunpack.c.l.b16 %v530
        %v2969 = vunpack.c.h.b16 %v530
        %v2970 = vunpack.c.l.b16 %v531
        %v2971 = vunpack.c.h.b16 %v531
        %v2972 = vunpack.c.l.b16 %v532
        %v2973 = vunpack.c.h.b16 %v532
        %v2974 = vunpack.c.l.b16 %v533
        %v2975 = vunpack.c.h.b16 %v533
        %v2976 = vunpack.c.l.b16 %v534
        %v2977 = vunpack.c.h.b16 %v534
        %v2978 = vunpack.c.l.b16 %v535
        %v2979 = vunpack.c.h.b16 %v535
        %v2980 = vunpack.c.l.b16 %v536
        %v2981 = vunpack.c.h.b16 %v536
        %v2982 = vunpack.c.l.b16 %v537
        %v2983 = vunpack.c.h.b16 %v537
        %v2984 = vunpack.c.l.b16 %v538
        %v2985 = vunpack.c.h.b16 %v538
        %v2986 = vunpack.c.l.b16 %v539
        %v2987 = vunpack.c.h.b16 %v539
        %v2988 = vunpack.c.l.b16 %v540
        %v2989 = vunpack.c.h.b16 %v540
        %v2990 = vunpack.c.l.b16 %v541
        %v2991 = vunpack.c.h.b16 %v541
        %v2992 = vunpack.c.l.b16 %v542
        %v2993 = vunpack.c.h.b16 %v542
        %v2994 = vunpack.c.l.b16 %v543
        %v2995 = vunpack.c.h.b16 %v543
        %v2996 = vunpack.c.l.b16 %v544
        %v2997 = vunpack.c.h.b16 %v544
        %v2998 = vunpack.c.l.b16 %v545
        %v2999 = vunpack.c.h.b16 %v545
        %v3000 = vunpack.c.l.b16 %v546
        %v3001 = vunpack.c.h.b16 %v546
        %v3002 = vunpack.c.l.b16 %v547
        %v3003 = vunpack.c.h.b16 %v547
        %v3004 = vunpack.c.l.b16 %v548
        %v3005 = vunpack.c.h.b16 %v548
        %v3006 = vunpack.c.l.b16 %v549
        %v3007 = vunpack.c.h.b16 %v549
        %v3008 = vunpack.c.l.b16 %v550
        %v3009 = vunpack.c.h.b16 %v550
        %v3010 = vunpack.c.l.b16 %v551
        %v3011 = vunpack.c.h.b16 %v551
        %v3012 = vunpack.c.l.b16 %v552
        %v3013 = vunpack.c.h.b16 %v552
        %v3014 = vunpack.c.l.b16 %v553
        %v3015 = vunpack.c.h.b16 %v553
        %v3016 = vunpack.c.l.b16 %v554
        %v3017 = vunpack.c.h.b16 %v554
        %v3018 = vunpack.c.l.b16 %v555
        %v3019 = vunpack.c.h.b16 %v555
        %v3020 = vunpack.c.l.b16 %v556
        %v3021 = vunpack.c.h.b16 %v556
        %v3022 = vunpack.c.l.b16 %v557
        %v3023 = vunpack.c.h.b16 %v557
        %v3024 = vunpack.c.l.b16 %v558
        %v3025 = vunpack.c.h.b16 %v558
        %v3026 = vunpack.c.l.b16 %v559
        %v3027 = vunpack.c.h.b16 %v559
        %v3028 = vunpack.c.l.b16 %v560
        %v3029 = vunpack.c.h.b16 %v560
        %v3030 = vunpack.c.l.b16 %v561
        %v3031 = vunpack.c.h.b16 %v561
        %v3032 = vunpack.c.l.b16 %v562
        %v3033 = vunpack.c.h.b16 %v562
        %v3034 = vunpack.c.l.b16 %v563
        %v3035 = vunpack.c.h.b16 %v563
        %v3036 = vunpack.c.l.b16 %v564
        %v3037 = vunpack.c.h.b16 %v564
        %v3038 = vunpack.c.l.b16 %v565
        %v3039 = vunpack.c.h.b16 %v565
        %v3040 = vunpack.c.l.b16 %v566
        %v3041 = vunpack.c.h.b16 %v566
        %v3042 = vunpack.c.l.b16 %v567
        %v3043 = vunpack.c.h.b16 %v567
        %v3044 = vunpack.c.l.b16 %v568
        %v3045 = vunpack.c.h.b16 %v568
        %v3046 = vunpack.c.l.b16 %v569
        %v3047 = vunpack.c.h.b16 %v569
        %v3048 = vunpack.c.l.b16 %v570
        %v3049 = vunpack.c.h.b16 %v570
        %v3050 = vunpack.c.l.b16 %v571
        %v3051 = vunpack.c.h.b16 %v571
        %v3052 = vunpack.c.l.b16 %v572
        %v3053 = vunpack.c.h.b16 %v572
        %v3054 = vunpack.c.l.b16 %v573
        %v3055 = vunpack.c.h.b16 %v573
        %v3056 = vunpack.c.l.b16 %v574
        %v3057 = vunpack.c.h.b16 %v574
        %v3058 = vunpack.c.l.b16 %v575
        %v3059 = vunpack.c.h.b16 %v575
        %v3060 = vunpack.c.l.b16 %v576
        %v3061 = vunpack.c.h.b16 %v576
        %v3062 = vunpack.c.l.b16 %v577
        %v3063 = vunpack.c.h.b16 %v577
        %v3064 = vunpack.c.l.b16 %v578
        %v3065 = vunpack.c.h.b16 %v578
        %v3066 = vunpack.c.l.b16 %v579
        %v3067 = vunpack.c.h.b16 %v579
        %v3068 = vunpack.c.l.b16 %v580
        %v3069 = vunpack.c.h.b16 %v580
        %v3070 = vunpack.c.l.b16 %v581
        %v3071 = vunpack.c.h.b16 %v581
        %v3072 = vunpack.c.l.b16 %v582
        %v3073 = vunpack.c.h.b16 %v582
        %v3074 = vunpack.c.l.b16 %v583
        %v3075 = vunpack.c.h.b16 %v583
        %v3076 = vunpack.c.l.b16 %v584
        %v3077 = vunpack.c.h.b16 %v584
        %v3078 = vunpack.c.l.b16 %v585
        %v3079 = vunpack.c.h.b16 %v585
        %v3080 = vunpack.c.l.b16 %v586
        %v3081 = vunpack.c.h.b16 %v586
        %v3082 = vunpack.c.l.b16 %v587
        %v3083 = vunpack.c.h.b16 %v587
        %v3084 = vunpack.c.l.b16 %v588
        %v3085 = vunpack.c.h.b16 %v588
        %v3086 = vunpack.c.l.b16 %v589
        %v3087 = vunpack.c.h.b16 %v589
        %v3088 = vunpack.c.l.b16 %v590
        %v3089 = vunpack.c.h.b16 %v590
        %v3090 = vunpack.c.l.b16 %v591
        %v3091 = vunpack.c.h.b16 %v591
        %v3092 = vunpack.c.l.b16 %v592
        %v3093 = vunpack.c.h.b16 %v592
        %v3094 = vunpack.c.l.b16 %v593
        %v3095 = vunpack.c.h.b16 %v593
        %v3096 = vunpack.c.l.b16 %v594
        %v3097 = vunpack.c.h.b16 %v594
        %v3098 = vunpack.c.l.b16 %v595
        %v3099 = vunpack.c.h.b16 %v595
        %v3100 = vunpack.c.l.b16 %v596
        %v3101 = vunpack.c.h.b16 %v596
        %v3102 = vunpack.c.l.b16 %v597
        %v3103 = vunpack.c.h.b16 %v597
        %v3104 = vunpack.c.l.b16 %v598
        %v3105 = vunpack.c.h.b16 %v598
        %v3106 = vunpack.c.l.b16 %v599
        %v3107 = vunpack.c.h.b16 %v599
        %v3108 = vunpack.c.l.b16 %v600
        %v3109 = vunpack.c.h.b16 %v600
        %v3110 = vunpack.c.l.b16 %v601
        %v3111 = vunpack.c.h.b16 %v601
        %v3112 = vunpack.c.l.b16 %v602
        %v3113 = vunpack.c.h.b16 %v602
        %v3114 = vunpack.c.l.b16 %v603
        %v3115 = vunpack.c.h.b16 %v603
        %v3116 = vunpack.c.l.b16 %v604
        %v3117 = vunpack.c.h.b16 %v604
        %v3118 = vunpack.c.l.b16 %v605
        %v3119 = vunpack.c.h.b16 %v605
        %v3120 = vunpack.c.l.b16 %v606
        %v3121 = vunpack.c.h.b16 %v606
        %v3122 = vunpack.c.l.b16 %v607
        %v3123 = vunpack.c.h.b16 %v607
        %v3124 = vunpack.c.l.b16 %v608
        %v3125 = vunpack.c.h.b16 %v608
        %v3126 = vunpack.c.l.b16 %v609
        %v3127 = vunpack.c.h.b16 %v609
        %v3128 = vunpack.c.l.b16 %v610
        %v3129 = vunpack.c.h.b16 %v610
        %v3130 = vunpack.c.l.b16 %v611
        %v3131 = vunpack.c.h.b16 %v611
        %v3132 = vunpack.c.l.b16 %v612
        %v3133 = vunpack.c.h.b16 %v612
        %v3134 = vunpack.c.l.b16 %v613
        %v3135 = vunpack.c.h.b16 %v613
        %v3136 = vunpack.c.l.b16 %v614
        %v3137 = vunpack.c.h.b16 %v614
        %v3138 = vunpack.c.l.b16 %v615
        %v3139 = vunpack.c.h.b16 %v615
        %v3140 = vunpack.c.l.b16 %v616
        %v3141 = vunpack.c.h.b16 %v616
        %v3142 = vunpack.c.l.b16 %v617
        %v3143 = vunpack.c.h.b16 %v617
        %v3144 = vunpack.c.l.b16 %v618
        %v3145 = vunpack.c.h.b16 %v618
        %v3146 = vunpack.c.l.b16 %v619
        %v3147 = vunpack.c.h.b16 %v619
        %v3148 = vunpack.c.l.b16 %v620
        %v3149 = vunpack.c.h.b16 %v620
        %v3150 = vunpack.c.l.b16 %v621
        %v3151 = vunpack.c.h.b16 %v621
        %v3152 = vunpack.c.l.b16 %v622
        %v3153 = vunpack.c.h.b16 %v622
        %v3154 = vunpack.c.l.b16 %v623
        %v3155 = vunpack.c.h.b16 %v623
        %v3156 = vunpack.c.l.b16 %v624
        %v3157 = vunpack.c.h.b16 %v624
        %v3158 = vunpack.c.l.b16 %v625
        %v3159 = vunpack.c.h.b16 %v625
        %v3160 = vunpack.c.l.b16 %v626
        %v3161 = vunpack.c.h.b16 %v626
        %v3162 = vunpack.c.l.b16 %v627
        %v3163 = vunpack.c.h.b16 %v627
        %v3164 = vunpack.c.l.b16 %v628
        %v3165 = vunpack.c.h.b16 %v628
        %v3166 = vunpack.c.l.b16 %v629
        %v3167 = vunpack.c.h.b16 %v629
        %v3168 = vunpack.c.l.b16 %v630
        %v3169 = vunpack.c.h.b16 %v630
        %v3170 = vunpack.c.l.b16 %v631
        %v3171 = vunpack.c.h.b16 %v631
        %v3172 = vunpack.c.l.b16 %v632
        %v3173 = vunpack.c.h.b16 %v632
        %v3174 = vunpack.c.l.b16 %v633
        %v3175 = vunpack.c.h.b16 %v633
        %v3176 = vunpack.c.l.b16 %v634
        %v3177 = vunpack.c.h.b16 %v634
        %v3178 = vunpack.c.l.b16 %v635
        %v3179 = vunpack.c.h.b16 %v635
        %v3180 = vunpack.c.l.b16 %v636
        %v3181 = vunpack.c.h.b16 %v636
        %v3182 = vunpack.c.l.b16 %v637
        %v3183 = vunpack.c.h.b16 %v637
        %v3184 = vunpack.c.l.b16 %v638
        %v3185 = vunpack.c.h.b16 %v638
        %v3186 = vunpack.c.l.b16 %v639
        %v3187 = vunpack.c.h.b16 %v639
        %v3188 = vunpack.c.l.b16 %v640
        %v3189 = vunpack.c.h.b16 %v640
        %v3190 = vunpack.c.l.b16 %v641
        %v3191 = vunpack.c.h.b16 %v641
        %v3192 = vunpack.c.l.b16 %v642
        %v3193 = vunpack.c.h.b16 %v642
        %v3194 = vunpack.c.l.b16 %v643
        %v3195 = vunpack.c.h.b16 %v643
        %v3196 = vunpack.c.l.b16 %v644
        %v3197 = vunpack.c.h.b16 %v644
        %v3198 = vunpack.c.l.b16 %v645
        %v3199 = vunpack.c.h.b16 %v645
        %v3200 = vunpack.c.l.b16 %v646
        %v3201 = vunpack.c.h.b16 %v646
        %v3202 = vunpack.c.l.b16 %v647
        %v3203 = vunpack.c.h.b16 %v647
        %v3204 = vunpack.c.l.b16 %v648
        %v3205 = vunpack.c.h.b16 %v648
        %v3206 = vunpack.c.l.b16 %v649
        %v3207 = vunpack.c.h.b16 %v649
        %v3208 = vunpack.c.l.b16 %v650
        %v3209 = vunpack.c.h.b16 %v650
        %v3210 = vunpack.c.l.b16 %v651
        %v3211 = vunpack.c.h.b16 %v651
        %v3212 = vunpack.c.l.b16 %v652
        %v3213 = vunpack.c.h.b16 %v652
        %v3214 = vunpack.c.l.b16 %v653
        %v3215 = vunpack.c.h.b16 %v653
        %v3216 = vunpack.c.l.b16 %v654
        %v3217 = vunpack.c.h.b16 %v654
        %v3218 = vunpack.c.l.b16 %v655
        %v3219 = vunpack.c.h.b16 %v655
        %v3220 = vunpack.c.l.b16 %v656
        %v3221 = vunpack.c.h.b16 %v656
        %v3222 = vunpack.c.l.b16 %v657
        %v3223 = vunpack.c.h.b16 %v657
        %v3224 = vunpack.c.l.b16 %v658
        %v3225 = vunpack.c.h.b16 %v658
        %v3226 = vunpack.c.l.b16 %v659
        %v3227 = vunpack.c.h.b16 %v659
        %v3228 = vunpack.c.l.b16 %v660
        %v3229 = vunpack.c.h.b16 %v660
        %v3230 = vunpack.c.l.b16 %v661
        %v3231 = vunpack.c.h.b16 %v661
        %v3232 = vunpack.c.l.b16 %v662
        %v3233 = vunpack.c.h.b16 %v662
        %v3234 = vunpack.c.l.b16 %v663
        %v3235 = vunpack.c.h.b16 %v663
        %v3236 = vunpack.c.l.b16 %v664
        %v3237 = vunpack.c.h.b16 %v664
        %v3238 = vunpack.c.l.b16 %v665
        %v3239 = vunpack.c.h.b16 %v665
        %v3240 = vunpack.c.l.b16 %v666
        %v3241 = vunpack.c.h.b16 %v666
        %v3242 = vunpack.c.l.b16 %v667
        %v3243 = vunpack.c.h.b16 %v667
        %v3244 = vunpack.c.l.b16 %v668
        %v3245 = vunpack.c.h.b16 %v668
        %v3246 = vunpack.c.l.b16 %v669
        %v3247 = vunpack.c.h.b16 %v669
        %v3248 = vunpack.c.l.b16 %v670
        %v3249 = vunpack.c.h.b16 %v670
        %v3250 = vunpack.c.l.b16 %v671
        %v3251 = vunpack.c.h.b16 %v671
        %v3252 = vunpack.c.l.b16 %v672
        %v3253 = vunpack.c.h.b16 %v672
        %v3254 = vunpack.c.l.b16 %v673
        %v3255 = vunpack.c.h.b16 %v673
        %v3256 = vunpack.c.l.b16 %v674
        %v3257 = vunpack.c.h.b16 %v674
        %v3258 = vunpack.c.l.b16 %v675
        %v3259 = vunpack.c.h.b16 %v675
        %v3260 = vunpack.c.l.b16 %v676
        %v3261 = vunpack.c.h.b16 %v676
        %v3262 = vunpack.c.l.b16 %v677
        %v3263 = vunpack.c.h.b16 %v677
        %v3264 = vunpack.c.l.b16 %v678
        %v3265 = vunpack.c.h.b16 %v678
        %v3266 = vunpack.c.l.b16 %v679
        %v3267 = vunpack.c.h.b16 %v679
        %v3268 = vunpack.c.l.b16 %v680
        %v3269 = vunpack.c.h.b16 %v680
        %v3270 = vunpack.c.l.b16 %v681
        %v3271 = vunpack.c.h.b16 %v681
        %v3272 = vunpack.c.l.b16 %v682
        %v3273 = vunpack.c.h.b16 %v682
        %v3274 = vunpack.c.l.b16 %v683
        %v3275 = vunpack.c.h.b16 %v683
        %v3276 = vunpack.c.l.b16 %v684
        %v3277 = vunpack.c.h.b16 %v684
        %v3278 = vunpack.c.l.b16 %v685
        %v3279 = vunpack.c.h.b16 %v685
        %v3280 = vunpack.c.l.b16 %v686
        %v3281 = vunpack.c.h.b16 %v686
        %v3282 = vunpack.c.l.b16 %v687
        %v3283 = vunpack.c.h.b16 %v687
        %v3284 = vunpack.c.l.b16 %v688
        %v3285 = vunpack.c.h.b16 %v688
        %v3286 = vunpack.c.l.b16 %v689
        %v3287 = vunpack.c.h.b16 %v689
        %v3288 = vunpack.c.l.b16 %v690
        %v3289 = vunpack.c.h.b16 %v690
        %v3290 = vunpack.c.l.b16 %v691
        %v3291 = vunpack.c.h.b16 %v691
        %v3292 = vunpack.c.l.b16 %v692
        %v3293 = vunpack.c.h.b16 %v692
        %v3294 = vunpack.c.l.b16 %v693
        %v3295 = vunpack.c.h.b16 %v693
        %v3296 = vunpack.c.l.b16 %v694
        %v3297 = vunpack.c.h.b16 %v694
        %v3298 = vunpack.c.l.b16 %v695
        %v3299 = vunpack.c.h.b16 %v695
        %v3300 = vunpack.c.l.b16 %v696
        %v3301 = vunpack.c.h.b16 %v696
        %v3302 = vunpack.c.l.b16 %v697
        %v3303 = vunpack.c.h.b16 %v697
        %v3304 = vunpack.c.l.b16 %v698
        %v3305 = vunpack.c.h.b16 %v698
        %v3306 = vunpack.c.l.b16 %v699
        %v3307 = vunpack.c.h.b16 %v699
        %v3308 = vunpack.c.l.b16 %v700
        %v3309 = vunpack.c.h.b16 %v700
        %v3310 = vunpack.c.l.b16 %v701
        %v3311 = vunpack.c.h.b16 %v701
        %v3312 = vunpack.c.l.b16 %v702
        %v3313 = vunpack.c.h.b16 %v702
        %v3314 = vunpack.c.l.b16 %v703
        %v3315 = vunpack.c.h.b16 %v703
        %v3316 = vunpack.c.l.b16 %v704
        %v3317 = vunpack.c.h.b16 %v704
        %v3318 = vunpack.c.l.b16 %v705
        %v3319 = vunpack.c.h.b16 %v705
        %v3320 = vunpack.c.l.b16 %v706
        %v3321 = vunpack.c.h.b16 %v706
        %v3322 = vunpack.c.l.b16 %v707
        %v3323 = vunpack.c.h.b16 %v707
        %v3324 = vunpack.c.l.b16 %v708
        %v3325 = vunpack.c.h.b16 %v708
        %v3326 = vunpack.c.l.b16 %v709
        %v3327 = vunpack.c.h.b16 %v709
        %v3328 = vunpack.c.l.b16 %v710
        %v3329 = vunpack.c.h.b16 %v710
        %v3330 = vunpack.c.l.b16 %v711
        %v3331 = vunpack.c.h.b16 %v711
        %v3332 = vunpack.c.l.b16 %v712
        %v3333 = vunpack.c.h.b16 %v712
        %v3334 = vunpack.c.l.b16 %v713
        %v3335 = vunpack.c.h.b16 %v713
        %v3336 = vunpack.c.l.b16 %v714
        %v3337 = vunpack.c.h.b16 %v714
        %v3338 = vunpack.c.l.b16 %v715
        %v3339 = vunpack.c.h.b16 %v715
        %v3340 = vunpack.c.l.b16 %v716
        %v3341 = vunpack.c.h.b16 %v716
        %v3342 = vunpack.c.l.b16 %v717
        %v3343 = vunpack.c.h.b16 %v717
        %v3344 = vunpack.c.l.b16 %v718
        %v3345 = vunpack.c.h.b16 %v718
        %v3346 = vunpack.c.l.b16 %v719
        %v3347 = vunpack.c.h.b16 %v719
        %v3348 = vunpack.c.l.b16 %v720
        %v3349 = vunpack.c.h.b16 %v720
        %v3350 = vunpack.c.l.b16 %v721
        %v3351 = vunpack.c.h.b16 %v721
        %v3352 = vunpack.c.l.b16 %v722
        %v3353 = vunpack.c.h.b16 %v722
        %v3354 = vunpack.c.l.b16 %v723
        %v3355 = vunpack.c.h.b16 %v723
        %v3356 = vunpack.c.l.b16 %v724
        %v3357 = vunpack.c.h.b16 %v724
        %v3358 = vunpack.c.l.b16 %v725
        %v3359 = vunpack.c.h.b16 %v725
        %v3360 = vunpack.c.l.b16 %v726
        %v3361 = vunpack.c.h.b16 %v726
        %v3362 = vunpack.c.l.b16 %v727
        %v3363 = vunpack.c.h.b16 %v727
        %v3364 = vunpack.c.l.b16 %v728
        %v3365 = vunpack.c.h.b16 %v728
        %v3366 = vunpack.c.l.b16 %v729
        %v3367 = vunpack.c.h.b16 %v729
        %v3368 = vunpack.c.l.b16 %v730
        %v3369 = vunpack.c.h.b16 %v730
        %v3370 = vunpack.c.l.b16 %v731
        %v3371 = vunpack.c.h.b16 %v731
        %v3372 = vunpack.c.l.b16 %v732
        %v3373 = vunpack.c.h.b16 %v732
        %v3374 = vunpack.c.l.b16 %v733
        %v3375 = vunpack.c.h.b16 %v733
        %v3376 = vunpack.c.l.b16 %v734
        %v3377 = vunpack.c.h.b16 %v734
        %v3378 = vunpack.c.l.b16 %v735
        %v3379 = vunpack.c.h.b16 %v735
        %v3380 = vunpack.c.l.b16 %v736
        %v3381 = vunpack.c.h.b16 %v736
        %v3382 = vunpack.c.l.b16 %v737
        %v3383 = vunpack.c.h.b16 %v737
        %v3384 = vunpack.c.l.b16 %v738
        %v3385 = vunpack.c.h.b16 %v738
        %v3386 = vunpack.c.l.b16 %v739
        %v3387 = vunpack.c.h.b16 %v739
        %v3388 = vunpack.c.l.b16 %v740
        %v3389 = vunpack.c.h.b16 %v740
        %v3390 = vunpack.c.l.b16 %v741
        %v3391 = vunpack.c.h.b16 %v741
        %v3392 = vunpack.c.l.b16 %v742
        %v3393 = vunpack.c.h.b16 %v742
        %v3394 = vunpack.c.l.b16 %v743
        %v3395 = vunpack.c.h.b16 %v743
        %v3396 = vunpack.c.l.b16 %v744
        %v3397 = vunpack.c.h.b16 %v744
        %v3398 = vunpack.c.l.b16 %v745
        %v3399 = vunpack.c.h.b16 %v745
        %v3400 = vunpack.c.l.b16 %v746
        %v3401 = vunpack.c.h.b16 %v746
        %v3402 = vunpack.c.l.b16 %v747
        %v3403 = vunpack.c.h.b16 %v747
        %v3404 = vunpack.c.l.b16 %v748
        %v3405 = vunpack.c.h.b16 %v748
        %v3406 = vunpack.c.l.b16 %v749
        %v3407 = vunpack.c.h.b16 %v749
        %v3408 = vunpack.c.l.b16 %v750
        %v3409 = vunpack.c.h.b16 %v750
        %v3410 = vunpack.c.l.b16 %v751
        %v3411 = vunpack.c.h.b16 %v751
        %v3412 = vunpack.c.l.b16 %v752
        %v3413 = vunpack.c.h.b16 %v752
        %v3414 = vunpack.c.l.b16 %v753
        %v3415 = vunpack.c.h.b16 %v753
        %v3416 = vunpack.c.l.b16 %v754
        %v3417 = vunpack.c.h.b16 %v754
        %v3418 = vunpack.c.l.b16 %v755
        %v3419 = vunpack.c.h.b16 %v755
        %v3420 = vunpack.c.l.b16 %v756
        %v3421 = vunpack.c.h.b16 %v756
        %v3422 = vunpack.c.l.b16 %v757
        %v3423 = vunpack.c.h.b16 %v757
        %v3424 = vunpack.c.l.b16 %v758
        %v3425 = vunpack.c.h.b16 %v758
        %v3426 = vunpack.c.l.b16 %v759
        %v3427 = vunpack.c.h.b16 %v759
        %v3428 = vunpack.c.l.b16 %v760
        %v3429 = vunpack.c.h.b16 %v760
        %v3430 = vunpack.c.l.b16 %v761
        %v3431 = vunpack.c.h.b16 %v761
        %v3432 = vunpack.c.l.b16 %v762
        %v3433 = vunpack.c.h.b16 %v762
        %v3434 = vunpack.c.l.b16 %v763
        %v3435 = vunpack.c.h.b16 %v763
        %v3436 = vunpack.c.l.b16 %v764
        %v3437 = vunpack.c.h.b16 %v764
        %v3438 = vunpack.c.l.b16 %v765
        %v3439 = vunpack.c.h.b16 %v765
        %v3440 = vunpack.c.l.b16 %v766
        %v3441 = vunpack.c.h.b16 %v766
        %v3442 = vunpack.c.l.b16 %v767
        %v3443 = vunpack.c.h.b16 %v767
        %v3444 = vunpack.c.l.b16 %v768
        %v3445 = vunpack.c.h.b16 %v768
        %v3446 = vunpack.c.l.b16 %v769
        %v3447 = vunpack.c.h.b16 %v769
        %v3448 = vunpack.c.l.b16 %v770
        %v3449 = vunpack.c.h.b16 %v770
        %v3450 = vunpack.c.l.b16 %v771
        %v3451 = vunpack.c.h.b16 %v771
        %v3452 = vunpack.c.l.b16 %v772
        %v3453 = vunpack.c.h.b16 %v772
        %v3454 = vunpack.c.l.b16 %v773
        %v3455 = vunpack.c.h.b16 %v773
        %v3456 = vunpack.c.l.b16 %v774
        %v3457 = vunpack.c.h.b16 %v774
        %v3458 = vunpack.c.l.b16 %v775
        %v3459 = vunpack.c.h.b16 %v775
        %v3460 = vunpack.c.l.b16 %v776
        %v3461 = vunpack.c.h.b16 %v776
        %v3462 = vunpack.c.l.b16 %v777
        %v3463 = vunpack.c.h.b16 %v777
        %v3464 = vunpack.c.l.b16 %v778
        %v3465 = vunpack.c.h.b16 %v778
        %v3466 = vunpack.c.l.b16 %v779
        %v3467 = vunpack.c.h.b16 %v779
        %v3468 = vunpack.c.l.b16 %v780
        %v3469 = vunpack.c.h.b16 %v780
        %v3470 = vunpack.c.l.b16 %v781
        %v3471 = vunpack.c.h.b16 %v781
        %v3472 = vunpack.c.l.b16 %v782
        %v3473 = vunpack.c.h.b16 %v782
        %v3474 = vunpack.c.l.b16 %v783
        %v3475 = vunpack.c.h.b16 %v783
        %v3476 = vunpack.c.l.b16 %v784
        %v3477 = vunpack.c.h.b16 %v784
        %v3478 = vunpack.c.l.b16 %v785
        %v3479 = vunpack.c.h.b16 %v785
        %v3480 = vunpack.c.l.b16 %v786
        %v3481 = vunpack.c.h.b16 %v786
        %v3482 = vunpack.c.l.b16 %v787
        %v3483 = vunpack.c.h.b16 %v787
        %v3484 = vunpack.c.l.b16 %v788
        %v3485 = vunpack.c.h.b16 %v788
        %v3486 = vunpack.c.l.b16 %v789
        %v3487 = vunpack.c.h.b16 %v789
        %v3488 = vunpack.c.l.b16 %v790
        %v3489 = vunpack.c.h.b16 %v790
        %v3490 = vunpack.c.l.b16 %v791
        %v3491 = vunpack.c.h.b16 %v791
        %v3492 = vunpack.c.l.b16 %v792
        %v3493 = vunpack.c.h.b16 %v792
        %v3494 = vunpack.c.l.b16 %v793
        %v3495 = vunpack.c.h.b16 %v793
        %v3496 = vunpack.c.l.b16 %v794
        %v3497 = vunpack.c.h.b16 %v794
        %v3498 = vunpack.c.l.b16 %v795
        %v3499 = vunpack.c.h.b16 %v795
        %v3500 = vunpack.c.l.b16 %v796
        %v3501 = vunpack.c.h.b16 %v796
        %v3502 = vunpack.c.l.b16 %v797
        %v3503 = vunpack.c.h.b16 %v797
        %v3504 = vunpack.c.l.b16 %v798
        %v3505 = vunpack.c.h.b16 %v798
        %v3506 = vunpack.c.l.b16 %v799
        %v3507 = vunpack.c.h.b16 %v799
        %v3508 = vunpack.c.l.b16 %v800
        %v3509 = vunpack.c.h.b16 %v800
        %v3510 = vunpack.c.l.b16 %v801
        %v3511 = vunpack.c.h.b16 %v801
        %v3512 = vunpack.c.l.b16 %v802
        %v3513 = vunpack.c.h.b16 %v802
        %v3514 = vunpack.c.l.b16 %v803
        %v3515 = vunpack.c.h.b16 %v803
        %v3516 = vunpack.c.l.b16 %v804
        %v3517 = vunpack.c.h.b16 %v804
        %v3518 = vunpack.c.l.b16 %v805
        %v3519 = vunpack.c.h.b16 %v805
        %v3520 = vunpack.c.l.b16 %v806
        %v3521 = vunpack.c.h.b16 %v806
        %v3522 = vunpack.c.l.b16 %v807
        %v3523 = vunpack.c.h.b16 %v807
        %v3524 = vunpack.c.l.b16 %v808
        %v3525 = vunpack.c.h.b16 %v808
        %v3526 = vunpack.c.l.b16 %v809
        %v3527 = vunpack.c.h.b16 %v809
        %v3528 = vunpack.c.l.b16 %v810
        %v3529 = vunpack.c.h.b16 %v810
        %v3530 = vunpack.c.l.b16 %v811
        %v3531 = vunpack.c.h.b16 %v811
        %v3532 = vunpack.c.l.b16 %v812
        %v3533 = vunpack.c.h.b16 %v812
        %v3534 = vunpack.c.l.b16 %v813
        %v3535 = vunpack.c.h.b16 %v813
        %v3536 = vunpack.c.l.b16 %v814
        %v3537 = vunpack.c.h.b16 %v814
        %v3538 = vunpack.c.l.b16 %v815
        %v3539 = vunpack.c.h.b16 %v815
        %v3540 = vunpack.c.l.b16 %v816
        %v3541 = vunpack.c.h.b16 %v816
        %v3542 = vunpack.c.l.b16 %v817
        %v3543 = vunpack.c.h.b16 %v817
        %v3544 = vunpack.c.l.b16 %v818
        %v3545 = vunpack.c.h.b16 %v818
        %v3546 = vunpack.c.l.b16 %v819
        %v3547 = vunpack.c.h.b16 %v819
        %v3548 = vunpack.c.l.b16 %v820
        %v3549 = vunpack.c.h.b16 %v820
        %v3550 = vunpack.c.l.b16 %v821
        %v3551 = vunpack.c.h.b16 %v821
        %v3552 = vunpack.c.l.b16 %v822
        %v3553 = vunpack.c.h.b16 %v822
        %v3554 = vunpack.c.l.b16 %v823
        %v3555 = vunpack.c.h.b16 %v823
        %v3556 = vunpack.c.l.b16 %v824
        %v3557 = vunpack.c.h.b16 %v824
        %v3558 = vunpack.c.l.b16 %v825
        %v3559 = vunpack.c.h.b16 %v825
        %v3560 = vunpack.c.l.b16 %v826
        %v3561 = vunpack.c.h.b16 %v826
        %v3562 = vunpack.c.l.b16 %v827
        %v3563 = vunpack.c.h.b16 %v827
        %v3564 = vunpack.c.l.b16 %v828
        %v3565 = vunpack.c.h.b16 %v828
        %v3566 = vunpack.c.l.b16 %v829
        %v3567 = vunpack.c.h.b16 %v829
        %v3568 = vunpack.c.l.b16 %v830
        %v3569 = vunpack.c.h.b16 %v830
        %v3570 = vunpack.c.l.b16 %v831
        %v3571 = vunpack.c.h.b16 %v831
        %v3572 = vunpack.c.l.b16 %v832
        %v3573 = vunpack.c.h.b16 %v832
        %v3574 = vunpack.c.l.b16 %v833
        %v3575 = vunpack.c.h.b16 %v833
        %v3576 = vunpack.c.l.b16 %v834
        %v3577 = vunpack.c.h.b16 %v834
        %v3578 = vunpack.c.l.b16 %v835
        %v3579 = vunpack.c.h.b16 %v835
        %v3580 = vunpack.c.l.b16 %v836
        %v3581 = vunpack.c.h.b16 %v836
        %v3582 = vunpack.c.l.b16 %v837
        %v3583 = vunpack.c.h.b16 %v837
        %v3584 = vunpack.c.l.b16 %v838
        %v3585 = vunpack.c.h.b16 %v838
        %v3586 = vunpack.c.l.b16 %v839
        %v3587 = vunpack.c.h.b16 %v839
        %v3588 = vunpack.c.l.b16 %v840
        %v3589 = vunpack.c.h.b16 %v840
        %v3590 = vunpack.c.l.b16 %v841
        %v3591 = vunpack.c.h.b16 %v841
        %v3592 = vunpack.c.l.b16 %v842
        %v3593 = vunpack.c.h.b16 %v842
        %v3594 = vunpack.c.l.b16 %v843
        %v3595 = vunpack.c.h.b16 %v843
        %v3596 = vunpack.c.l.b16 %v844
        %v3597 = vunpack.c.h.b16 %v844
        %v3598 = vunpack.c.l.b16 %v845
        %v3599 = vunpack.c.h.b16 %v845
        %v3600 = vunpack.c.l.b16 %v846
        %v3601 = vunpack.c.h.b16 %v846
        %v3602 = vunpack.c.l.b16 %v847
        %v3603 = vunpack.c.h.b16 %v847
        %v3604 = vunpack.c.l.b16 %v848
        %v3605 = vunpack.c.h.b16 %v848
        %v3606 = vunpack.c.l.b16 %v849
        %v3607 = vunpack.c.h.b16 %v849
        %v3608 = vunpack.c.l.b16 %v850
        %v3609 = vunpack.c.h.b16 %v850
        %v3610 = vunpack.c.l.b16 %v851
        %v3611 = vunpack.c.h.b16 %v851
        %v3612 = vunpack.c.l.b16 %v852
        %v3613 = vunpack.c.h.b16 %v852
        %v3614 = vunpack.c.l.b16 %v853
        %v3615 = vunpack.c.h.b16 %v853
        %v3616 = vunpack.c.l.b16 %v854
        %v3617 = vunpack.c.h.b16 %v854
        %v3618 = vunpack.c.l.b16 %v855
        %v3619 = vunpack.c.h.b16 %v855
        %v3620 = vunpack.c.l.b16 %v856
        %v3621 = vunpack.c.h.b16 %v856
        %v3622 = vunpack.c.l.b16 %v857
        %v3623 = vunpack.c.h.b16 %v857
        %v3624 = vunpack.c.l.b16 %v858
        %v3625 = vunpack.c.h.b16 %v858
        %v3626 = vunpack.c.l.b16 %v859
        %v3627 = vunpack.c.h.b16 %v859
        %v3628 = vunpack.c.l.b16 %v860
        %v3629 = vunpack.c.h.b16 %v860
        %v3630 = vunpack.c.l.b16 %v861
        %v3631 = vunpack.c.h.b16 %v861
        %v3632 = vunpack.c.l.b16 %v862
        %v3633 = vunpack.c.h.b16 %v862
        %v3634 = vunpack.c.l.b16 %v863
        %v3635 = vunpack.c.h.b16 %v863
        %v3636 = vunpack.c.l.b16 %v864
        %v3637 = vunpack.c.h.b16 %v864
        %v3638 = vunpack.c.l.b16 %v865
        %v3639 = vunpack.c.h.b16 %v865
        %v3640 = vunpack.c.l.b16 %v866
        %v3641 = vunpack.c.h.b16 %v866
        %v3642 = vunpack.c.l.b16 %v867
        %v3643 = vunpack.c.h.b16 %v867
        %v3644 = vunpack.c.l.b16 %v868
        %v3645 = vunpack.c.h.b16 %v868
        %v3646 = vunpack.c.l.b16 %v869
        %v3647 = vunpack.c.h.b16 %v869
        %v3648 = vunpack.c.l.b16 %v870
        %v3649 = vunpack.c.h.b16 %v870
        %v3650 = vunpack.c.l.b16 %v871
        %v3651 = vunpack.c.h.b16 %v871
        %v3652 = vunpack.c.l.b16 %v872
        %v3653 = vunpack.c.h.b16 %v872
        %v3654 = vunpack.c.l.b16 %v873
        %v3655 = vunpack.c.h.b16 %v873
        %v3656 = vunpack.c.l.b16 %v874
        %v3657 = vunpack.c.h.b16 %v874
        %v3658 = vunpack.c.l.b16 %v875
        %v3659 = vunpack.c.h.b16 %v875
        %v3660 = vunpack.c.l.b16 %v876
        %v3661 = vunpack.c.h.b16 %v876
        %v3662 = vunpack.c.l.b16 %v877
        %v3663 = vunpack.c.h.b16 %v877
        %v3664 = vunpack.c.l.b16 %v878
        %v3665 = vunpack.c.h.b16 %v878
        %v3666 = vunpack.c.l.b16 %v879
        %v3667 = vunpack.c.h.b16 %v879
        %v3668 = vunpack.c.l.b16 %v880
        %v3669 = vunpack.c.h.b16 %v880
        %v3670 = vunpack.c.l.b16 %v881
        %v3671 = vunpack.c.h.b16 %v881
        %v3672 = vunpack.c.l.b16 %v882
        %v3673 = vunpack.c.h.b16 %v882
        %v3674 = vunpack.c.l.b16 %v883
        %v3675 = vunpack.c.h.b16 %v883
        %v3676 = vunpack.c.l.b16 %v884
        %v3677 = vunpack.c.h.b16 %v884
        %v3678 = vunpack.c.l.b16 %v885
        %v3679 = vunpack.c.h.b16 %v885
        %v3680 = vunpack.c.l.b16 %v886
        %v3681 = vunpack.c.h.b16 %v886
        %v3682 = vunpack.c.l.b16 %v887
        %v3683 = vunpack.c.h.b16 %v887
        %v3684 = vunpack.c.l.b16 %v888
        %v3685 = vunpack.c.h.b16 %v888
        %v3686 = vunpack.c.l.b16 %v889
        %v3687 = vunpack.c.h.b16 %v889
        %v3688 = vunpack.c.l.b16 %v890
        %v3689 = vunpack.c.h.b16 %v890
        %v3690 = vunpack.c.l.b16 %v891
        %v3691 = vunpack.c.h.b16 %v891
        %v3692 = vunpack.c.l.b16 %v892
        %v3693 = vunpack.c.h.b16 %v892
        %v3694 = vunpack.c.l.b16 %v893
        %v3695 = vunpack.c.h.b16 %v893
        %v3696 = vunpack.c.l.b16 %v894
        %v3697 = vunpack.c.h.b16 %v894
        %v3698 = vunpack.c.l.b16 %v895
        %v3699 = vunpack.c.h.b16 %v895
        %v3700 = vunpack.c.l.b16 %v896
        %v3701 = vunpack.c.h.b16 %v896
        %v3702 = vunpack.c.l.b16 %v897
        %v3703 = vunpack.c.h.b16 %v897
        %v3704 = vunpack.c.l.b16 %v898
        %v3705 = vunpack.c.h.b16 %v898
        %v3706 = vunpack.c.l.b16 %v899
        %v3707 = vunpack.c.h.b16 %v899
        %v3708 = vunpack.c.l.b16 %v900
        %v3709 = vunpack.c.h.b16 %v900
        %v3710 = vunpack.c.l.b16 %v901
        %v3711 = vunpack.c.h.b16 %v901
        %v3712 = vunpack.c.l.b16 %v902
        %v3713 = vunpack.c.h.b16 %v902
        %v3714 = vunpack.c.l.b16 %v903
        %v3715 = vunpack.c.h.b16 %v903
        %v3716 = vunpack.c.l.b16 %v904
        %v3717 = vunpack.c.h.b16 %v904
        %v3718 = vunpack.c.l.b16 %v905
        %v3719 = vunpack.c.h.b16 %v905
        %v3720 = vunpack.c.l.b16 %v906
        %v3721 = vunpack.c.h.b16 %v906
        %v3722 = vunpack.c.l.b16 %v907
        %v3723 = vunpack.c.h.b16 %v907
        %v3724 = vunpack.c.l.b16 %v908
        %v3725 = vunpack.c.h.b16 %v908
        %v3726 = vunpack.c.l.b16 %v909
        %v3727 = vunpack.c.h.b16 %v909
        %v3728 = vunpack.c.l.b16 %v910
        %v3729 = vunpack.c.h.b16 %v910
        %v3730 = vunpack.c.l.b16 %v911
        %v3731 = vunpack.c.h.b16 %v911
        %v3732 = vunpack.c.l.b16 %v912
        %v3733 = vunpack.c.h.b16 %v912
        %v3734 = vunpack.c.l.b16 %v913
        %v3735 = vunpack.c.h.b16 %v913
        %v3736 = vunpack.c.l.b16 %v914
        %v3737 = vunpack.c.h.b16 %v914
        %v3738 = vunpack.c.l.b16 %v915
        %v3739 = vunpack.c.h.b16 %v915
        %v3740 = vunpack.c.l.b16 %v916
        %v3741 = vunpack.c.h.b16 %v916
        %v3742 = vunpack.c.l.b16 %v917
        %v3743 = vunpack.c.h.b16 %v917
        %v3744 = vunpack.c.l.b16 %v918
        %v3745 = vunpack.c.h.b16 %v918
        %v3746 = vunpack.c.l.b16 %v919
        %v3747 = vunpack.c.h.b16 %v919
        %v3748 = vunpack.c.l.b16 %v920
        %v3749 = vunpack.c.h.b16 %v920
        %v3750 = vunpack.c.l.b16 %v921
        %v3751 = vunpack.c.h.b16 %v921
        %v3752 = vunpack.c.l.b16 %v922
        %v3753 = vunpack.c.h.b16 %v922
        %v3754 = vunpack.c.l.b16 %v923
        %v3755 = vunpack.c.h.b16 %v923
        %v3756 = vunpack.c.l.b16 %v924
        %v3757 = vunpack.c.h.b16 %v924
        %v3758 = vunpack.c.l.b16 %v925
        %v3759 = vunpack.c.h.b16 %v925
        %v3760 = vunpack.c.l.b16 %v926
        %v3761 = vunpack.c.h.b16 %v926
        %v3762 = vunpack.c.l.b16 %v927
        %v3763 = vunpack.c.h.b16 %v927
        %v3764 = vunpack.c.l.b16 %v928
        %v3765 = vunpack.c.h.b16 %v928
        %v3766 = vunpack.c.l.b16 %v929
        %v3767 = vunpack.c.h.b16 %v929
        %v3768 = vunpack.c.l.b16 %v930
        %v3769 = vunpack.c.h.b16 %v930
        %v3770 = vunpack.c.l.b16 %v931
        %v3771 = vunpack.c.h.b16 %v931
        %v3772 = vunpack.c.l.b16 %v932
        %v3773 = vunpack.c.h.b16 %v932
        %v3774 = vunpack.c.l.b16 %v933
        %v3775 = vunpack.c.h.b16 %v933
        %v3776 = vunpack.c.l.b16 %v934
        %v3777 = vunpack.c.h.b16 %v934
        %v3778 = vunpack.c.l.b16 %v935
        %v3779 = vunpack.c.h.b16 %v935
        %v3780 = vunpack.c.l.b16 %v936
        %v3781 = vunpack.c.h.b16 %v936
        %v3782 = vunpack.c.l.b16 %v937
        %v3783 = vunpack.c.h.b16 %v937
        %v3784 = vunpack.c.l.b16 %v938
        %v3785 = vunpack.c.h.b16 %v938
        %v3786 = vunpack.c.l.b16 %v939
        %v3787 = vunpack.c.h.b16 %v939
        %v3788 = vunpack.c.l.b16 %v940
        %v3789 = vunpack.c.h.b16 %v940
        %v3790 = vunpack.c.l.b16 %v941
        %v3791 = vunpack.c.h.b16 %v941
        %v3792 = vunpack.c.l.b16 %v942
        %v3793 = vunpack.c.h.b16 %v942
        %v3794 = vunpack.c.l.b16 %v943
        %v3795 = vunpack.c.h.b16 %v943
        %v3796 = vunpack.c.l.b16 %v944
        %v3797 = vunpack.c.h.b16 %v944
        %v3798 = vunpack.c.l.b16 %v945
        %v3799 = vunpack.c.h.b16 %v945
        %v3800 = vunpack.c.l.b16 %v946
        %v3801 = vunpack.c.h.b16 %v946
        %v3802 = vunpack.c.l.b16 %v947
        %v3803 = vunpack.c.h.b16 %v947
        %v3804 = vunpack.c.l.b16 %v948
        %v3805 = vunpack.c.h.b16 %v948
        %v3806 = vunpack.c.l.b16 %v949
        %v3807 = vunpack.c.h.b16 %v949
        %v3808 = vunpack.c.l.b16 %v950
        %v3809 = vunpack.c.h.b16 %v950
        %v3810 = vunpack.c.l.b16 %v951
        %v3811 = vunpack.c.h.b16 %v951
        %v3812 = vunpack.c.l.b16 %v952
        %v3813 = vunpack.c.h.b16 %v952
        %v3814 = vunpack.c.l.b16 %v953
        %v3815 = vunpack.c.h.b16 %v953
        %v3816 = vunpack.c.l.b16 %v954
        %v3817 = vunpack.c.h.b16 %v954
        %v3818 = vunpack.c.l.b16 %v955
        %v3819 = vunpack.c.h.b16 %v955
        %v3820 = vunpack.c.l.b16 %v956
        %v3821 = vunpack.c.h.b16 %v956
        %v3822 = vunpack.c.l.b16 %v957
        %v3823 = vunpack.c.h.b16 %v957
        %v3824 = vunpack.c.l.b16 %v958
        %v3825 = vunpack.c.h.b16 %v958
        %v3826 = vunpack.c.l.b16 %v959
        %v3827 = vunpack.c.h.b16 %v959
        %v3828 = vunpack.c.l.b16 %v960
        %v3829 = vunpack.c.h.b16 %v960
        %v3830 = vunpack.c.l.b16 %v961
        %v3831 = vunpack.c.h.b16 %v961
        %v3832 = vunpack.c.l.b16 %v962
        %v3833 = vunpack.c.h.b16 %v962
        %v3834 = vunpack.c.l.b16 %v963
        %v3835 = vunpack.c.h.b16 %v963
        %v3836 = vunpack.c.l.b16 %v964
        %v3837 = vunpack.c.h.b16 %v964
        %v3838 = vunpack.c.l.b16 %v965
        %v3839 = vunpack.c.h.b16 %v965
        %v3840 = vunpack.c.l.b16 %v966
        %v3841 = vunpack.c.h.b16 %v966
        %v3842 = vunpack.c.l.b16 %v967
        %v3843 = vunpack.c.h.b16 %v967
        %v3844 = vunpack.c.l.b16 %v968
        %v3845 = vunpack.c.h.b16 %v968
        %v3846 = vunpack.c.l.b16 %v969
        %v3847 = vunpack.c.h.b16 %v969
        %v3848 = vunpack.c.l.b16 %v970
        %v3849 = vunpack.c.h.b16 %v970
        %v3850 = vunpack.c.l.b16 %v971
        %v3851 = vunpack.c.h.b16 %v971
        %v3852 = vunpack.c.l.b16 %v972
        %v3853 = vunpack.c.h.b16 %v972
        %v3854 = vunpack.c.l.b16 %v973
        %v3855 = vunpack.c.h.b16 %v973
        %v3856 = vunpack.c.l.b16 %v974
        %v3857 = vunpack.c.h.b16 %v974
        %v3858 = vunpack.c.l.b16 %v975
        %v3859 = vunpack.c.h.b16 %v975
        %v3860 = vunpack.c.l.b16 %v976
        %v3861 = vunpack.c.h.b16 %v976
        %v3862 = vunpack.c.l.b16 %v977
        %v3863 = vunpack.c.h.b16 %v977
        %v3864 = vunpack.c.l.b16 %v978
        %v3865 = vunpack.c.h.b16 %v978
        %v3866 = vunpack.c.l.b16 %v979
        %v3867 = vunpack.c.h.b16 %v979
        %v3868 = vunpack.c.l.b16 %v980
        %v3869 = vunpack.c.h.b16 %v980
        %v3870 = vunpack.c.l.b16 %v981
        %v3871 = vunpack.c.h.b16 %v981
        %v3872 = vunpack.c.l.b16 %v982
        %v3873 = vunpack.c.h.b16 %v982
        %v3874 = vunpack.c.l.b16 %v983
        %v3875 = vunpack.c.h.b16 %v983
        %v3876 = vunpack.c.l.b16 %v984
        %v3877 = vunpack.c.h.b16 %v984
        %v3878 = vunpack.c.l.b16 %v985
        %v3879 = vunpack.c.h.b16 %v985
        %v3880 = vunpack.c.l.b16 %v986
        %v3881 = vunpack.c.h.b16 %v986
        %v3882 = vunpack.c.l.b16 %v987
        %v3883 = vunpack.c.h.b16 %v987
        %v3884 = vunpack.c.l.b16 %v988
        %v3885 = vunpack.c.h.b16 %v988
        %v3886 = vunpack.c.l.b16 %v989
        %v3887 = vunpack.c.h.b16 %v989
        %v3888 = vunpack.c.l.b16 %v990
        %v3889 = vunpack.c.h.b16 %v990
        %v3890 = vunpack.c.l.b16 %v991
        %v3891 = vunpack.c.h.b16 %v991
        %v3892 = vunpack.c.l.b16 %v992
        %v3893 = vunpack.c.h.b16 %v992
        %v3894 = vunpack.c.l.b16 %v993
        %v3895 = vunpack.c.h.b16 %v993
        %v3896 = vunpack.c.l.b16 %v994
        %v3897 = vunpack.c.h.b16 %v994
        %v3898 = vunpack.c.l.b16 %v995
        %v3899 = vunpack.c.h.b16 %v995
        %v3900 = vunpack.c.l.b16 %v996
        %v3901 = vunpack.c.h.b16 %v996
        %v3902 = vunpack.c.l.b16 %v997
        %v3903 = vunpack.c.h.b16 %v997
        %v3904 = vunpack.c.l.b16 %v998
        %v3905 = vunpack.c.h.b16 %v998
        %v3906 = vunpack.c.l.b16 %v999
        %v3907 = vunpack.c.h.b16 %v999
        %v3908 = vunpack.c.l.b16 %v1000
        %v3909 = vunpack.c.h.b16 %v1000
        %v3910 = vunpack.c.l.b16 %v1001
        %v3911 = vunpack.c.h.b16 %v1001
        %v3912 = vunpack.c.l.b16 %v1002
        %v3913 = vunpack.c.h.b16 %v1002
        %v3914 = vunpack.c.l.b16 %v1003
        %v3915 = vunpack.c.h.b16 %v1003
        %v3916 = vunpack.c.l.b16 %v1004
        %v3917 = vunpack.c.h.b16 %v1004
        %v3918 = vunpack.c.l.b16 %v1005
        %v3919 = vunpack.c.h.b16 %v1005
        %v3920 = vunpack.c.l.b16 %v1006
        %v3921 = vunpack.c.h.b16 %v1006
        %v3922 = vunpack.c.l.b16 %v1007
        %v3923 = vunpack.c.h.b16 %v1007
        %v3924 = vunpack.c.l.b16 %v1008
        %v3925 = vunpack.c.h.b16 %v1008
        %v3926 = vunpack.c.l.b16 %v1009
        %v3927 = vunpack.c.h.b16 %v1009
        %v3928 = vunpack.c.l.b16 %v1010
        %v3929 = vunpack.c.h.b16 %v1010
        %v3930 = vunpack.c.l.b16 %v1011
        %v3931 = vunpack.c.h.b16 %v1011
        %v3932 = vunpack.c.l.b16 %v1012
        %v3933 = vunpack.c.h.b16 %v1012
        %v3934 = vunpack.c.l.b16 %v1013
        %v3935 = vunpack.c.h.b16 %v1013
        %v3936 = vunpack.c.l.b16 %v1014
        %v3937 = vunpack.c.h.b16 %v1014
        %v3938 = vunpack.c.l.b16 %v1015
        %v3939 = vunpack.c.h.b16 %v1015
        %v3940 = vunpack.c.l.b16 %v1016
        %v3941 = vunpack.c.h.b16 %v1016
        %v3942 = vunpack.c.l.b16 %v1017
        %v3943 = vunpack.c.h.b16 %v1017
        %v3944 = vunpack.c.l.b16 %v1018
        %v3945 = vunpack.c.h.b16 %v1018
        %v3946 = vunpack.c.l.b16 %v1019
        %v3947 = vunpack.c.h.b16 %v1019
        %v3948 = vunpack.c.l.b16 %v1020
        %v3949 = vunpack.c.h.b16 %v1020
        %v3950 = vunpack.c.l.b16 %v1021
        %v3951 = vunpack.c.h.b16 %v1021
        %v3952 = vunpack.c.l.b16 %v1022
        %v3953 = vunpack.c.h.b16 %v1022
        %v3954 = vunpack.c.l.b16 %v1023
        %v3955 = vunpack.c.h.b16 %v1023
        %v3956 = vunpack.c.l.b16 %v1024
        %v3957 = vunpack.c.h.b16 %v1024
        %v3958 = vunpack.c.l.b16 %v1025
        %v3959 = vunpack.c.h.b16 %v1025
        %v3960 = vunpack.c.l.b16 %v1026
        %v3961 = vunpack.c.h.b16 %v1026
        %v3962 = vunpack.c.l.b16 %v1027
        %v3963 = vunpack.c.h.b16 %v1027
        %v3964 = vunpack.c.l.b16 %v1028
        %v3965 = vunpack.c.h.b16 %v1028
        %v3966 = vunpack.c.l.b16 %v1029
        %v3967 = vunpack.c.h.b16 %v1029
        %v3968 = vunpack.c.l.b16 %v1030
        %v3969 = vunpack.c.h.b16 %v1030
        %v3970 = vunpack.c.l.b16 %v1031
        %v3971 = vunpack.c.h.b16 %v1031
        %v3972 = vunpack.c.l.b16 %v1032
        %v3973 = vunpack.c.h.b16 %v1032
        %v3974 = vunpack.c.l.b16 %v1033
        %v3975 = vunpack.c.h.b16 %v1033
        %v3976 = vunpack.c.l.b16 %v1034
        %v3977 = vunpack.c.h.b16 %v1034
        %v3978 = vunpack.c.l.b16 %v1035
        %v3979 = vunpack.c.h.b16 %v1035
        %v3980 = vunpack.c.l.b16 %v1036
        %v3981 = vunpack.c.h.b16 %v1036
        %v3982 = vunpack.c.l.b16 %v1037
        %v3983 = vunpack.c.h.b16 %v1037
        %v3984 = vunpack.c.l.b16 %v1038
        %v3985 = vunpack.c.h.b16 %v1038
        %v3986 = vunpack.c.l.b16 %v1039
        %v3987 = vunpack.c.h.b16 %v1039
        %v3988 = vunpack.c.l.b16 %v1040
        %v3989 = vunpack.c.h.b16 %v1040
        %v3990 = vunpack.c.l.b16 %v1041
        %v3991 = vunpack.c.h.b16 %v1041
        %v3992 = vunpack.c.l.b16 %v1042
        %v3993 = vunpack.c.h.b16 %v1042
        %v3994 = vunpack.c.l.b16 %v1043
        %v3995 = vunpack.c.h.b16 %v1043
        %v3996 = vunpack.c.l.b16 %v1044
        %v3997 = vunpack.c.h.b16 %v1044
        %v3998 = vunpack.c.l.b16 %v1045
        %v3999 = vunpack.c.h.b16 %v1045
        %v4000 = vunpack.c.l.b16 %v1046
        %v4001 = vunpack.c.h.b16 %v1046
        %v4002 = vunpack.c.l.b16 %v1047
        %v4003 = vunpack.c.h.b16 %v1047
        %v4004 = vunpack.c.l.b16 %v1048
        %v4005 = vunpack.c.h.b16 %v1048
        %v4006 = vunpack.c.l.b16 %v1049
        %v4007 = vunpack.c.h.b16 %v1049
        %v4008 = vunpack.c.l.b16 %v1050
        %v4009 = vunpack.c.h.b16 %v1050
        %v4010 = vunpack.c.l.b16 %v1051
        %v4011 = vunpack.c.h.b16 %v1051
        %v4012 = vunpack.c.l.b16 %v1052
        %v4013 = vunpack.c.h.b16 %v1052
        %v4014 = vunpack.c.l.b16 %v1053
        %v4015 = vunpack.c.h.b16 %v1053
        %v4016 = vunpack.c.l.b16 %v1054
        %v4017 = vunpack.c.h.b16 %v1054
        %v4018 = vunpack.c.l.b16 %v1055
        %v4019 = vunpack.c.h.b16 %v1055
        %v4020 = vunpack.c.l.b16 %v1056
        %v4021 = vunpack.c.h.b16 %v1056
        %v4022 = vunpack.c.l.b16 %v1057
        %v4023 = vunpack.c.h.b16 %v1057
        %v4024 = vunpack.c.l.b16 %v1058
        %v4025 = vunpack.c.h.b16 %v1058
        %v4026 = vunpack.c.l.b16 %v1059
        %v4027 = vunpack.c.h.b16 %v1059
        %v4028 = vunpack.c.l.b16 %v1060
        %v4029 = vunpack.c.h.b16 %v1060
        %v4030 = vunpack.c.l.b16 %v1061
        %v4031 = vunpack.c.h.b16 %v1061
        %v4032 = vunpack.c.l.b16 %v1062
        %v4033 = vunpack.c.h.b16 %v1062
        %v4034 = vunpack.c.l.b16 %v1063
        %v4035 = vunpack.c.h.b16 %v1063
        %v4036 = vunpack.c.l.b16 %v1064
        %v4037 = vunpack.c.h.b16 %v1064
        %v4038 = vunpack.c.l.b16 %v1065
        %v4039 = vunpack.c.h.b16 %v1065
        %v4040 = vunpack.c.l.b16 %v1066
        %v4041 = vunpack.c.h.b16 %v1066
        %v4042 = vunpack.c.l.b16 %v1067
        %v4043 = vunpack.c.h.b16 %v1067
        %v4044 = vunpack.c.l.b16 %v1068
        %v4045 = vunpack.c.h.b16 %v1068
        %v4046 = vunpack.c.l.b16 %v1069
        %v4047 = vunpack.c.h.b16 %v1069
        %v4048 = vunpack.c.l.b16 %v1070
        %v4049 = vunpack.c.h.b16 %v1070
        %v4050 = vunpack.c.l.b16 %v1071
        %v4051 = vunpack.c.h.b16 %v1071
        %v4052 = vunpack.c.l.b16 %v1072
        %v4053 = vunpack.c.h.b16 %v1072
        %v4054 = vunpack.c.l.b16 %v1073
        %v4055 = vunpack.c.h.b16 %v1073
        %v4056 = vunpack.c.l.b16 %v1074
        %v4057 = vunpack.c.h.b16 %v1074
        %v4058 = vunpack.c.l.b16 %v1075
        %v4059 = vunpack.c.h.b16 %v1075
        %v4060 = vunpack.c.l.b16 %v1076
        %v4061 = vunpack.c.h.b16 %v1076
        %v4062 = vunpack.c.l.b16 %v1077
        %v4063 = vunpack.c.h.b16 %v1077
        %v4064 = vunpack.c.l.b16 %v1078
        %v4065 = vunpack.c.h.b16 %v1078
        %v4066 = vunpack.c.l.b16 %v1079
        %v4067 = vunpack.c.h.b16 %v1079
        %v4068 = vunpack.c.l.b16 %v1080
        %v4069 = vunpack.c.h.b16 %v1080
        %v4070 = vunpack.c.l.b16 %v1081
        %v4071 = vunpack.c.h.b16 %v1081
        %v4072 = vunpack.c.l.b16 %v1082
        %v4073 = vunpack.c.h.b16 %v1082
        %v4074 = vunpack.c.l.b16 %v1083
        %v4075 = vunpack.c.h.b16 %v1083
        %v4076 = vunpack.c.l.b16 %v1084
        %v4077 = vunpack.c.h.b16 %v1084
        %v4078 = vunpack.c.l.b16 %v1085
        %v4079 = vunpack.c.h.b16 %v1085
        %v4080 = vunpack.c.l.b16 %v1086
        %v4081 = vunpack.c.h.b16 %v1086
        %v4082 = vunpack.c.l.b16 %v1087
        %v4083 = vunpack.c.h.b16 %v1087
        %v4084 = vunpack.c.l.b16 %v1088
        %v4085 = vunpack.c.h.b16 %v1088
        %v4086 = vunpack.c.l.b16 %v1089
        %v4087 = vunpack.c.h.b16 %v1089
        %v4088 = vunpack.c.l.b16 %v1090
        %v4089 = vunpack.c.h.b16 %v1090
        %v4090 = vunpack.c.l.b16 %v1091
        %v4091 = vunpack.c.h.b16 %v1091
        %v4092 = vunpack.c.l.b16 %v1092
        %v4093 = vunpack.c.h.b16 %v1092
        %v4094 = vunpack.c.l.b16 %v1093
        %v4095 = vunpack.c.h.b16 %v1093
        %v4096 = vunpack.c.l.b16 %v1094
        %v4097 = vunpack.c.h.b16 %v1094
        %v4098 = vunpack.c.l.b16 %v1095
        %v4099 = vunpack.c.h.b16 %v1095
        %v4100 = vunpack.c.l.b16 %v1096
        %v4101 = vunpack.c.h.b16 %v1096
        %v4102 = vunpack.c.l.b16 %v1097
        %v4103 = vunpack.c.h.b16 %v1097
        %v4104 = vunpack.c.l.b16 %v1098
        %v4105 = vunpack.c.h.b16 %v1098
        %v4106 = vunpack.c.l.b16 %v1099
        %v4107 = vunpack.c.h.b16 %v1099
        %v4108 = vunpack.c.l.b16 %v1100
        %v4109 = vunpack.c.h.b16 %v1100
        %v4110 = vunpack.c.l.b16 %v1101
        %v4111 = vunpack.c.h.b16 %v1101
        %v4112 = vunpack.c.l.b16 %v1102
        %v4113 = vunpack.c.h.b16 %v1102
        %v4114 = vunpack.c.l.b16 %v1103
        %v4115 = vunpack.c.h.b16 %v1103
        %v4116 = vunpack.c.l.b16 %v1104
        %v4117 = vunpack.c.h.b16 %v1104
        %v4118 = vunpack.c.l.b16 %v1105
        %v4119 = vunpack.c.h.b16 %v1105
        %v4120 = vunpack.c.l.b16 %v1106
        %v4121 = vunpack.c.h.b16 %v1106
        %v4122 = vunpack.c.l.b16 %v1107
        %v4123 = vunpack.c.h.b16 %v1107
        %v4124 = vunpack.c.l.b16 %v1108
        %v4125 = vunpack.c.h.b16 %v1108
        %v4126 = vunpack.c.l.b16 %v1109
        %v4127 = vunpack.c.h.b16 %v1109
        %v4128 = vunpack.c.l.b16 %v1110
        %v4129 = vunpack.c.h.b16 %v1110
        %v4130 = vunpack.c.l.b16 %v1111
        %v4131 = vunpack.c.h.b16 %v1111
        %v4132 = vunpack.c.l.b16 %v1112
        %v4133 = vunpack.c.h.b16 %v1112
        %v4134 = vunpack.c.l.b16 %v1113
        %v4135 = vunpack.c.h.b16 %v1113
        %v4136 = vunpack.c.l.b16 %v1114
        %v4137 = vunpack.c.h.b16 %v1114
        %v4138 = vunpack.c.l.b16 %v1115
        %v4139 = vunpack.c.h.b16 %v1115
        %v4140 = vunpack.c.l.b16 %v1116
        %v4141 = vunpack.c.h.b16 %v1116
        %v4142 = vunpack.c.l.b16 %v1117
        %v4143 = vunpack.c.h.b16 %v1117
        %v4144 = vunpack.c.l.b16 %v1118
        %v4145 = vunpack.c.h.b16 %v1118
        %v4146 = vunpack.c.l.b16 %v1119
        %v4147 = vunpack.c.h.b16 %v1119
        %v4148 = vunpack.c.l.b16 %v1120
        %v4149 = vunpack.c.h.b16 %v1120
        %v4150 = vunpack.c.l.b16 %v1121
        %v4151 = vunpack.c.h.b16 %v1121
        %v4152 = vunpack.c.l.b16 %v1122
        %v4153 = vunpack.c.h.b16 %v1122
        %v4154 = vunpack.c.l.b16 %v1123
        %v4155 = vunpack.c.h.b16 %v1123
        %v4156 = vunpack.c.l.b16 %v1124
        %v4157 = vunpack.c.h.b16 %v1124
        %v4158 = vunpack.c.l.b16 %v1125
        %v4159 = vunpack.c.h.b16 %v1125
        %v4160 = vunpack.c.l.b16 %v1126
        %v4161 = vunpack.c.h.b16 %v1126
        %v4162 = vunpack.c.l.b16 %v1127
        %v4163 = vunpack.c.h.b16 %v1127
        %v4164 = vunpack.c.l.b16 %v1128
        %v4165 = vunpack.c.h.b16 %v1128
        %v4166 = vunpack.c.l.b16 %v1129
        %v4167 = vunpack.c.h.b16 %v1129
        %v4168 = vunpack.c.l.b16 %v1130
        %v4169 = vunpack.c.h.b16 %v1130
        %v4170 = vunpack.c.l.b16 %v1131
        %v4171 = vunpack.c.h.b16 %v1131
        %v4172 = vunpack.c.l.b16 %v1132
        %v4173 = vunpack.c.h.b16 %v1132
        %v4174 = vunpack.c.l.b16 %v1133
        %v4175 = vunpack.c.h.b16 %v1133
        %v4176 = vunpack.c.l.b16 %v1134
        %v4177 = vunpack.c.h.b16 %v1134
        %v4178 = vunpack.c.l.b16 %v1135
        %v4179 = vunpack.c.h.b16 %v1135
        %v4180 = vunpack.c.l.b16 %v1136
        %v4181 = vunpack.c.h.b16 %v1136
        %v4182 = vunpack.c.l.b16 %v1137
        %v4183 = vunpack.c.h.b16 %v1137
        %v4184 = vunpack.c.l.b16 %v1138
        %v4185 = vunpack.c.h.b16 %v1138
        %v4186 = vunpack.c.l.b16 %v1139
        %v4187 = vunpack.c.h.b16 %v1139
        %v4188 = vunpack.c.l.b16 %v1140
        %v4189 = vunpack.c.h.b16 %v1140
        %v4190 = vunpack.c.l.b16 %v1141
        %v4191 = vunpack.c.h.b16 %v1141
        %v4192 = vunpack.c.l.b16 %v1142
        %v4193 = vunpack.c.h.b16 %v1142
        %v4194 = vunpack.c.l.b16 %v1143
        %v4195 = vunpack.c.h.b16 %v1143
        %v4196 = vunpack.c.l.b16 %v1144
        %v4197 = vunpack.c.h.b16 %v1144
        %v4198 = vunpack.c.l.b16 %v1145
        %v4199 = vunpack.c.h.b16 %v1145
        %v4200 = vunpack.c.l.b16 %v1146
        %v4201 = vunpack.c.h.b16 %v1146
        %v4202 = vunpack.c.l.b16 %v1147
        %v4203 = vunpack.c.h.b16 %v1147
        %v4204 = vunpack.c.l.b16 %v1148
        %v4205 = vunpack.c.h.b16 %v1148
        %v4206 = vunpack.c.l.b16 %v1149
        %v4207 = vunpack.c.h.b16 %v1149
        %v4208 = vunpack.c.l.b16 %v1150
        %v4209 = vunpack.c.h.b16 %v1150
        %v4210 = vunpack.c.l.b16 %v1151
        %v4211 = vunpack.c.h.b16 %v1151
        %v4212 = vunpack.c.l.b16 %v1152
        %v4213 = vunpack.c.h.b16 %v1152
        %v4214 = vunpack.c.l.b16 %v1153
        %v4215 = vunpack.c.h.b16 %v1153
        %v4216 = vunpack.c.l.b16 %v1154
        %v4217 = vunpack.c.h.b16 %v1154
        %v4218 = vunpack.c.l.b16 %v1155
        %v4219 = vunpack.c.h.b16 %v1155
        %v4220 = vunpack.c.l.b16 %v1156
        %v4221 = vunpack.c.h.b16 %v1156
        %v4222 = vunpack.c.l.b16 %v1157
        %v4223 = vunpack.c.h.b16 %v1157
        %v4224 = vunpack.c.l.b16 %v1158
        %v4225 = vunpack.c.h.b16 %v1158
        %v4226 = vunpack.c.l.b16 %v1159
        %v4227 = vunpack.c.h.b16 %v1159
        %v4228 = vunpack.c.l.b16 %v1160
        %v4229 = vunpack.c.h.b16 %v1160
        %v4230 = vunpack.c.l.b16 %v1161
        %v4231 = vunpack.c.h.b16 %v1161
        %v4232 = vunpack.c.l.b16 %v1162
        %v4233 = vunpack.c.h.b16 %v1162
        %v4234 = vunpack.c.l.b16 %v1163
        %v4235 = vunpack.c.h.b16 %v1163
        %v4236 = vunpack.c.l.b16 %v1164
        %v4237 = vunpack.c.h.b16 %v1164
        %v4238 = vunpack.c.l.b16 %v1165
        %v4239 = vunpack.c.h.b16 %v1165
        %v4240 = vunpack.c.l.b16 %v1166
        %v4241 = vunpack.c.h.b16 %v1166
        %v4242 = vunpack.c.l.b16 %v1167
        %v4243 = vunpack.c.h.b16 %v1167
        %v4244 = vunpack.c.l.b16 %v1168
        %v4245 = vunpack.c.h.b16 %v1168
        %v4246 = vunpack.c.l.b16 %v1169
        %v4247 = vunpack.c.h.b16 %v1169
        %v4248 = vunpack.c.l.b16 %v1170
        %v4249 = vunpack.c.h.b16 %v1170
        %v4250 = vunpack.c.l.b16 %v1171
        %v4251 = vunpack.c.h.b16 %v1171
        %v4252 = vunpack.c.l.b16 %v1172
        %v4253 = vunpack.c.h.b16 %v1172
        %v4254 = vunpack.c.l.b16 %v1173
        %v4255 = vunpack.c.h.b16 %v1173
        %v4256 = vunpack.c.l.b16 %v1174
        %v4257 = vunpack.c.h.b16 %v1174
        %v4258 = vunpack.c.l.b16 %v1175
        %v4259 = vunpack.c.h.b16 %v1175
        %v4260 = vunpack.c.l.b16 %v1176
        %v4261 = vunpack.c.h.b16 %v1176
        %v4262 = vunpack.c.l.b16 %v1177
        %v4263 = vunpack.c.h.b16 %v1177
        %v4264 = vunpack.c.l.b16 %v1178
        %v4265 = vunpack.c.h.b16 %v1178
        %v4266 = vunpack.c.l.b16 %v1179
        %v4267 = vunpack.c.h.b16 %v1179
        %v4268 = vunpack.c.l.b16 %v1180
        %v4269 = vunpack.c.h.b16 %v1180
        %v4270 = vunpack.c.l.b16 %v1181
        %v4271 = vunpack.c.h.b16 %v1181
        %v4272 = vunpack.c.l.b16 %v1182
        %v4273 = vunpack.c.h.b16 %v1182
        %v4274 = vunpack.c.l.b16 %v1183
        %v4275 = vunpack.c.h.b16 %v1183
        %v4276 = vunpack.c.l.b16 %v1184
        %v4277 = vunpack.c.h.b16 %v1184
        %v4278 = vunpack.c.l.b16 %v1185
        %v4279 = vunpack.c.h.b16 %v1185
        %v4280 = vpack.c.b16 %v2490, %v2488
        %v4281 = vpack.c.b16 %v2491, %v2489
        %v4282 = vpack.c.b16 %v2494, %v2492
        %v4283 = vpack.c.b16 %v2495, %v2493
        %v4284 = vpack.c.b16 %v2498, %v2496
        %v4285 = vpack.c.b16 %v2499, %v2497
        %v4286 = vpack.c.b16 %v2502, %v2500
        %v4287 = vpack.c.b16 %v2503, %v2501
        %v4288 = vpack.c.b16 %v2506, %v2504
        %v4289 = vpack.c.b16 %v2507, %v2505
        %v4290 = vpack.c.b16 %v2510, %v2508
        %v4291 = vpack.c.b16 %v2511, %v2509
        %v4292 = vpack.c.b16 %v2514, %v2512
        %v4293 = vpack.c.b16 %v2515, %v2513
        %v4294 = vpack.c.b16 %v2518, %v2516
        %v4295 = vpack.c.b16 %v2519, %v2517
        %v4296 = vpack.c.b16 %v2522, %v2520
        %v4297 = vpack.c.b16 %v2523, %v2521
        %v4298 = vpack.c.b16 %v2526, %v2524
        %v4299 = vpack.c.b16 %v2527, %v2525
        %v4300 = vpack.c.b16 %v2530, %v2528
        %v4301 = vpack.c.b16 %v2531, %v2529
        %v4302 = vpack.c.b16 %v2534, %v2532
        %v4303 = vpack.c.b16 %v2535, %v2533
        %v4304 = vpack.c.b16 %v2538, %v2536
        %v4305 = vpack.c.b16 %v2539, %v2537
        %v4306 = vpack.c.b16 %v2542, %v2540
        %v4307 = vpack.c.b16 %v2543, %v2541
        %v4308 = vpack.c.b16 %v2546, %v2544
        %v4309 = vpack.c.b16 %v2547, %v2545
        %v4310 = vpack.c.b16 %v2550, %v2548
        %v4311 = vpack.c.b16 %v2551, %v2549
        %v4312 = vpack.c.b16 %v2554, %v2552
        %v4313 = vpack.c.b16 %v2555, %v2553
        %v4314 = vpack.c.b16 %v2558, %v2556
        %v4315 = vpack.c.b16 %v2559, %v2557
        %v4316 = vpack.c.b16 %v2562, %v2560
        %v4317 = vpack.c.b16 %v2563, %v2561
        %v4318 = vpack.c.b16 %v2566, %v2564
        %v4319 = vpack.c.b16 %v2567, %v2565
        %v4320 = vpack.c.b16 %v2570, %v2568
        %v4321 = vpack.c.b16 %v2571, %v2569
        %v4322 = vpack.c.b16 %v2574, %v2572
        %v4323 = vpack.c.b16 %v2575, %v2573
        %v4324 = vpack.c.b16 %v2578, %v2576
        %v4325 = vpack.c.b16 %v2579, %v2577
        %v4326 = vpack.c.b16 %v2582, %v2580
        %v4327 = vpack.c.b16 %v2583, %v2581
        %v4328 = vpack.c.b16 %v2586, %v2584
        %v4329 = vpack.c.b16 %v2587, %v2585
        %v4330 = vpack.c.b16 %v2590, %v2588
        %v4331 = vpack.c.b16 %v2591, %v2589
        %v4332 = vpack.c.b16 %v2594, %v2592
        %v4333 = vpack.c.b16 %v2595, %v2593
        %v4334 = vpack.c.b16 %v2598, %v2596
        %v4335 = vpack.c.b16 %v2599, %v2597
        %v4336 = vpack.c.b16 %v2602, %v2600
        %v4337 = vpack.c.b16 %v2603, %v2601
        %v4338 = vpack.c.b16 %v2606, %v2604
        %v4339 = vpack.c.b16 %v2607, %v2605
        %v4340 = vpack.c.b16 %v2610, %v2608
        %v4341 = vpack.c.b16 %v2611, %v2609
        %v4342 = vpack.c.b16 %v2614, %v2612
        %v4343 = vpack.c.b16 %v2615, %v2613
        %v4344 = vpack.c.b16 %v2618, %v2616
        %v4345 = vpack.c.b16 %v2619, %v2617
        %v4346 = vpack.c.b16 %v2622, %v2620
        %v4347 = vpack.c.b16 %v2623, %v2621
        %v4348 = vpack.c.b16 %v2626, %v2624
        %v4349 = vpack.c.b16 %v2627, %v2625
        %v4350 = vpack.c.b16 %v2630, %v2628
        %v4351 = vpack.c.b16 %v2631, %v2629
        %v4352 = vpack.c.b16 %v2634, %v2632
        %v4353 = vpack.c.b16 %v2635, %v2633
        %v4354 = vpack.c.b16 %v2638, %v2636
        %v4355 = vpack.c.b16 %v2639, %v2637
        %v4356 = vpack.c.b16 %v2642, %v2640
        %v4357 = vpack.c.b16 %v2643, %v2641
        %v4358 = vpack.c.b16 %v2646, %v2644
        %v4359 = vpack.c.b16 %v2647, %v2645
        %v4360 = vpack.c.b16 %v2650, %v2648
        %v4361 = vpack.c.b16 %v2651, %v2649
        %v4362 = vpack.c.b16 %v2654, %v2652
        %v4363 = vpack.c.b16 %v2655, %v2653
        %v4364 = vpack.c.b16 %v2658, %v2656
        %v4365 = vpack.c.b16 %v2659, %v2657
        %v4366 = vpack.c.b16 %v2662, %v2660
        %v4367 = vpack.c.b16 %v2663, %v2661
        %v4368 = vpack.c.b16 %v2666, %v2664
        %v4369 = vpack.c.b16 %v2667, %v2665
        %v4370 = vpack.c.b16 %v2670, %v2668
        %v4371 = vpack.c.b16 %v2671, %v2669
        %v4372 = vpack.c.b16 %v2674, %v2672
        %v4373 = vpack.c.b16 %v2675, %v2673
        %v4374 = vpack.c.b16 %v2678, %v2676
        %v4375 = vpack.c.b16 %v2679, %v2677
        %v4376 = vpack.c.b16 %v2682, %v2680
        %v4377 = vpack.c.b16 %v2683, %v2681
        %v4378 = vpack.c.b16 %v2686, %v2684
        %v4379 = vpack.c.b16 %v2687, %v2685
        %v4380 = vpack.c.b16 %v2690, %v2688
        %v4381 = vpack.c.b16 %v2691, %v2689
        %v4382 = vpack.c.b16 %v2694, %v2692
        %v4383 = vpack.c.b16 %v2695, %v2693
        %v4384 = vpack.c.b16 %v2698, %v2696
        %v4385 = vpack.c.b16 %v2699, %v2697
        %v4386 = vpack.c.b16 %v2702, %v2700
        %v4387 = vpack.c.b16 %v2703, %v2701
        %v4388 = vpack.c.b16 %v2706, %v2704
        %v4389 = vpack.c.b16 %v2707, %v2705
        %v4390 = vpack.c.b16 %v2710, %v2708
        %v4391 = vpack.c.b16 %v2711, %v2709
        %v4392 = vpack.c.b16 %v2714, %v2712
        %v4393 = vpack.c.b16 %v2715, %v2713
        %v4394 = vpack.c.b16 %v2718, %v2716
        %v4395 = vpack.c.b16 %v2719, %v2717
        %v4396 = vpack.c.b16 %v2722, %v2720
        %v4397 = vpack.c.b16 %v2723, %v2721
        %v4398 = vpack.c.b16 %v2726, %v2724
        %v4399 = vpack.c.b16 %v2727, %v2725
        %v4400 = vpack.c.b16 %v2730, %v2728
        %v4401 = vpack.c.b16 %v2731, %v2729
        %v4402 = vpack.c.b16 %v2734, %v2732
        %v4403 = vpack.c.b16 %v2735, %v2733
        %v4404 = vpack.c.b16 %v2738, %v2736
        %v4405 = vpack.c.b16 %v2739, %v2737
        %v4406 = vpack.c.b16 %v2742, %v2740
        %v4407 = vpack.c.b16 %v2743, %v2741
        %v4408 = vpack.c.b16 %v2746, %v2744
        %v4409 = vpack.c.b16 %v2747, %v2745
        %v4410 = vpack.c.b16 %v2750, %v2748
        %v4411 = vpack.c.b16 %v2751, %v2749
        %v4412 = vpack.c.b16 %v2754, %v2752
        %v4413 = vpack.c.b16 %v2755, %v2753
        %v4414 = vpack.c.b16 %v2758, %v2756
        %v4415 = vpack.c.b16 %v2759, %v2757
        %v4416 = vpack.c.b16 %v2762, %v2760
        %v4417 = vpack.c.b16 %v2763, %v2761
        %v4418 = vpack.c.b16 %v2766, %v2764
        %v4419 = vpack.c.b16 %v2767, %v2765
        %v4420 = vpack.c.b16 %v2770, %v2768
        %v4421 = vpack.c.b16 %v2771, %v2769
        %v4422 = vpack.c.b16 %v2774, %v2772
        %v4423 = vpack.c.b16 %v2775, %v2773
        %v4424 = vpack.c.b16 %v2778, %v2776
        %v4425 = vpack.c.b16 %v2779, %v2777
        %v4426 = vpack.c.b16 %v2782, %v2780
        %v4427 = vpack.c.b16 %v2783, %v2781
        %v4428 = vpack.c.b16 %v2786, %v2784
        %v4429 = vpack.c.b16 %v2787, %v2785
        %v4430 = vpack.c.b16 %v2790, %v2788
        %v4431 = vpack.c.b16 %v2791, %v2789
        %v4432 = vpack.c.b16 %v2794, %v2792
        %v4433 = vpack.c.b16 %v2795, %v2793
        %v4434 = vpack.c.b16 %v2798, %v2796
        %v4435 = vpack.c.b16 %v2799, %v2797
        %v4436 = vpack.c.b16 %v2802, %v2800
        %v4437 = vpack.c.b16 %v2803, %v2801
        %v4438 = vpack.c.b16 %v2806, %v2804
        %v4439 = vpack.c.b16 %v2807, %v2805
        %v4440 = vpack.c.b16 %v2810, %v2808
        %v4441 = vpack.c.b16 %v2811, %v2809
        %v4442 = vpack.c.b16 %v2814, %v2812
        %v4443 = vpack.c.b16 %v2815, %v2813
        %v4444 = vpack.c.b16 %v2818, %v2816
        %v4445 = vpack.c.b16 %v2819, %v2817
        %v4446 = vpack.c.b16 %v2822, %v2820
        %v4447 = vpack.c.b16 %v2823, %v2821
        %v4448 = vpack.c.b16 %v2826, %v2824
        %v4449 = vpack.c.b16 %v2827, %v2825
        %v4450 = vpack.c.b16 %v2830, %v2828
        %v4451 = vpack.c.b16 %v2831, %v2829
        %v4452 = vpack.c.b16 %v2834, %v2832
        %v4453 = vpack.c.b16 %v2835, %v2833
        %v4454 = vpack.c.b16 %v2838, %v2836
        %v4455 = vpack.c.b16 %v2839, %v2837
        %v4456 = vpack.c.b16 %v2842, %v2840
        %v4457 = vpack.c.b16 %v2843, %v2841
        %v4458 = vpack.c.b16 %v2846, %v2844
        %v4459 = vpack.c.b16 %v2847, %v2845
        %v4460 = vpack.c.b16 %v2850, %v2848
        %v4461 = vpack.c.b16 %v2851, %v2849
        %v4462 = vpack.c.b16 %v2854, %v2852
        %v4463 = vpack.c.b16 %v2855, %v2853
        %v4464 = vpack.c.b16 %v2858, %v2856
        %v4465 = vpack.c.b16 %v2859, %v2857
        %v4466 = vpack.c.b16 %v2862, %v2860
        %v4467 = vpack.c.b16 %v2863, %v2861
        %v4468 = vpack.c.b16 %v2866, %v2864
        %v4469 = vpack.c.b16 %v2867, %v2865
        %v4470 = vpack.c.b16 %v2870, %v2868
        %v4471 = vpack.c.b16 %v2871, %v2869
        %v4472 = vpack.c.b16 %v2874, %v2872
        %v4473 = vpack.c.b16 %v2875, %v2873
        %v4474 = vpack.c.b16 %v2878, %v2876
        %v4475 = vpack.c.b16 %v2879, %v2877
        %v4476 = vpack.c.b16 %v2882, %v2880
        %v4477 = vpack.c.b16 %v2883, %v2881
        %v4478 = vpack.c.b16 %v2886, %v2884
        %v4479 = vpack.c.b16 %v2887, %v2885
        %v4480 = vpack.c.b16 %v2890, %v2888
        %v4481 = vpack.c.b16 %v2891, %v2889
        %v4482 = vpack.c.b16 %v2894, %v2892
        %v4483 = vpack.c.b16 %v2895, %v2893
        %v4484 = vpack.c.b16 %v2898, %v2896
        %v4485 = vpack.c.b16 %v2899, %v2897
        %v4486 = vpack.c.b16 %v2902, %v2900
        %v4487 = vpack.c.b16 %v2903, %v2901
        %v4488 = vpack.c.b16 %v2906, %v2904
        %v4489 = vpack.c.b16 %v2907, %v2905
        %v4490 = vpack.c.b16 %v2910, %v2908
        %v4491 = vpack.c.b16 %v2911, %v2909
        %v4492 = vpack.c.b16 %v2914, %v2912
        %v4493 = vpack.c.b16 %v2915, %v2913
        %v4494 = vpack.c.b16 %v2918, %v2916
        %v4495 = vpack.c.b16 %v2919, %v2917
        %v4496 = vpack.c.b16 %v2922, %v2920
        %v4497 = vpack.c.b16 %v2923, %v2921
        %v4498 = vpack.c.b16 %v2926, %v2924
        %v4499 = vpack.c.b16 %v2927, %v2925
        %v4500 = vpack.c.b16 %v2930, %v2928
        %v4501 = vpack.c.b16 %v2931, %v2929
        %v4502 = vpack.c.b16 %v2934, %v2932
        %v4503 = vpack.c.b16 %v2935, %v2933
        %v4504 = vpack.c.b16 %v2938, %v2936
        %v4505 = vpack.c.b16 %v2939, %v2937
        %v4506 = vpack.c.b16 %v2942, %v2940
        %v4507 = vpack.c.b16 %v2943, %v2941
        %v4508 = vpack.c.b16 %v2946, %v2944
        %v4509 = vpack.c.b16 %v2947, %v2945
        %v4510 = vpack.c.b16 %v2950, %v2948
        %v4511 = vpack.c.b16 %v2951, %v2949
        %v4512 = vpack.c.b16 %v2954, %v2952
        %v4513 = vpack.c.b16 %v2955, %v2953
        %v4514 = vpack.c.b16 %v2958, %v2956
        %v4515 = vpack.c.b16 %v2959, %v2957
        %v4516 = vpack.c.b16 %v2962, %v2960
        %v4517 = vpack.c.b16 %v2963, %v2961
        %v4518 = vpack.c.b16 %v2966, %v2964
        %v4519 = vpack.c.b16 %v2967, %v2965
        %v4520 = vpack.c.b16 %v2970, %v2968
        %v4521 = vpack.c.b16 %v2971, %v2969
        %v4522 = vpack.c.b16 %v2974, %v2972
        %v4523 = vpack.c.b16 %v2975, %v2973
        %v4524 = vpack.c.b16 %v2978, %v2976
        %v4525 = vpack.c.b16 %v2979, %v2977
        %v4526 = vpack.c.b16 %v2982, %v2980
        %v4527 = vpack.c.b16 %v2983, %v2981
        %v4528 = vpack.c.b16 %v2986, %v2984
        %v4529 = vpack.c.b16 %v2987, %v2985
        %v4530 = vpack.c.b16 %v2990, %v2988
        %v4531 = vpack.c.b16 %v2991, %v2989
        %v4532 = vpack.c.b16 %v2994, %v2992
        %v4533 = vpack.c.b16 %v2995, %v2993
        %v4534 = vpack.c.b16 %v2998, %v2996
        %v4535 = vpack.c.b16 %v2999, %v2997
        %v4536 = vpack.c.b16 %v3002, %v3000
        %v4537 = vpack.c.b16 %v3003, %v3001
        %v4538 = vpack.c.b16 %v3006, %v3004
        %v4539 = vpack.c.b16 %v3007, %v3005
        %v4540 = vpack.c.b16 %v3010, %v3008
        %v4541 = vpack.c.b16 %v3011, %v3009
        %v4542 = vpack.c.b16 %v3014, %v3012
        %v4543 = vpack.c.b16 %v3015, %v3013
        %v4544 = vpack.c.b16 %v3018, %v3016
        %v4545 = vpack.c.b16 %v3019, %v3017
        %v4546 = vpack.c.b16 %v3022, %v3020
        %v4547 = vpack.c.b16 %v3023, %v3021
        %v4548 = vpack.c.b16 %v3026, %v3024
        %v4549 = vpack.c.b16 %v3027, %v3025
        %v4550 = vpack.c.b16 %v3030, %v3028
        %v4551 = vpack.c.b16 %v3031, %v3029
        %v4552 = vpack.c.b16 %v3034, %v3032
        %v4553 = vpack.c.b16 %v3035, %v3033
        %v4554 = vpack.c.b16 %v3038, %v3036
        %v4555 = vpack.c.b16 %v3039, %v3037
        %v4556 = vpack.c.b16 %v3042, %v3040
        %v4557 = vpack.c.b16 %v3043, %v3041
        %v4558 = vpack.c.b16 %v3046, %v3044
        %v4559 = vpack.c.b16 %v3047, %v3045
        %v4560 = vpack.c.b16 %v3050, %v3048
        %v4561 = vpack.c.b16 %v3051, %v3049
        %v4562 = vpack.c.b16 %v3054, %v3052
        %v4563 = vpack.c.b16 %v3055, %v3053
        %v4564 = vpack.c.b16 %v3058, %v3056
        %v4565 = vpack.c.b16 %v3059, %v3057
        %v4566 = vpack.c.b16 %v3062, %v3060
        %v4567 = vpack.c.b16 %v3063, %v3061
        %v4568 = vpack.c.b16 %v3066, %v3064
        %v4569 = vpack.c.b16 %v3067, %v3065
        %v4570 = vpack.c.b16 %v3070, %v3068
        %v4571 = vpack.c.b16 %v3071, %v3069
        %v4572 = vpack.c.b16 %v3074, %v3072
        %v4573 = vpack.c.b16 %v3075, %v3073
        %v4574 = vpack.c.b16 %v3078, %v3076
        %v4575 = vpack.c.b16 %v3079, %v3077
        %v4576 = vpack.c.b16 %v3082, %v3080
        %v4577 = vpack.c.b16 %v3083, %v3081
        %v4578 = vpack.c.b16 %v3086, %v3084
        %v4579 = vpack.c.b16 %v3087, %v3085
        %v4580 = vpack.c.b16 %v3090, %v3088
        %v4581 = vpack.c.b16 %v3091, %v3089
        %v4582 = vpack.c.b16 %v3094, %v3092
        %v4583 = vpack.c.b16 %v3095, %v3093
        %v4584 = vpack.c.b16 %v3098, %v3096
        %v4585 = vpack.c.b16 %v3099, %v3097
        %v4586 = vpack.c.b16 %v3102, %v3100
        %v4587 = vpack.c.b16 %v3103, %v3101
        %v4588 = vpack.c.b16 %v3106, %v3104
        %v4589 = vpack.c.b16 %v3107, %v3105
        %v4590 = vpack.c.b16 %v3110, %v3108
        %v4591 = vpack.c.b16 %v3111, %v3109
        %v4592 = vpack.c.b16 %v3114, %v3112
        %v4593 = vpack.c.b16 %v3115, %v3113
        %v4594 = vpack.c.b16 %v3118, %v3116
        %v4595 = vpack.c.b16 %v3119, %v3117
        %v4596 = vpack.c.b16 %v3122, %v3120
        %v4597 = vpack.c.b16 %v3123, %v3121
        %v4598 = vpack.c.b16 %v3126, %v3124
        %v4599 = vpack.c.b16 %v3127, %v3125
        %v4600 = vpack.c.b16 %v3130, %v3128
        %v4601 = vpack.c.b16 %v3131, %v3129
        %v4602 = vpack.c.b16 %v3134, %v3132
        %v4603 = vpack.c.b16 %v3135, %v3133
        %v4604 = vpack.c.b16 %v3138, %v3136
        %v4605 = vpack.c.b16 %v3139, %v3137
        %v4606 = vpack.c.b16 %v3142, %v3140
        %v4607 = vpack.c.b16 %v3143, %v3141
        %v4608 = vpack.c.b16 %v3146, %v3144
        %v4609 = vpack.c.b16 %v3147, %v3145
        %v4610 = vpack.c.b16 %v3150, %v3148
        %v4611 = vpack.c.b16 %v3151, %v3149
        %v4612 = vpack.c.b16 %v3154, %v3152
        %v4613 = vpack.c.b16 %v3155, %v3153
        %v4614 = vpack.c.b16 %v3158, %v3156
        %v4615 = vpack.c.b16 %v3159, %v3157
        %v4616 = vpack.c.b16 %v3162, %v3160
        %v4617 = vpack.c.b16 %v3163, %v3161
        %v4618 = vpack.c.b16 %v3166, %v3164
        %v4619 = vpack.c.b16 %v3167, %v3165
        %v4620 = vpack.c.b16 %v3170, %v3168
        %v4621 = vpack.c.b16 %v3171, %v3169
        %v4622 = vpack.c.b16 %v3174, %v3172
        %v4623 = vpack.c.b16 %v3175, %v3173
        %v4624 = vpack.c.b16 %v3178, %v3176
        %v4625 = vpack.c.b16 %v3179, %v3177
        %v4626 = vpack.c.b16 %v3182, %v3180
        %v4627 = vpack.c.b16 %v3183, %v3181
        %v4628 = vpack.c.b16 %v3186, %v3184
        %v4629 = vpack.c.b16 %v3187, %v3185
        %v4630 = vpack.c.b16 %v3190, %v3188
        %v4631 = vpack.c.b16 %v3191, %v3189
        %v4632 = vpack.c.b16 %v3194, %v3192
        %v4633 = vpack.c.b16 %v3195, %v3193
        %v4634 = vpack.c.b16 %v3198, %v3196
        %v4635 = vpack.c.b16 %v3199, %v3197
        %v4636 = vpack.c.b16 %v3202, %v3200
        %v4637 = vpack.c.b16 %v3203, %v3201
        %v4638 = vpack.c.b16 %v3206, %v3204
        %v4639 = vpack.c.b16 %v3207, %v3205
        %v4640 = vpack.c.b16 %v3210, %v3208
        %v4641 = vpack.c.b16 %v3211, %v3209
        %v4642 = vpack.c.b16 %v3214, %v3212
        %v4643 = vpack.c.b16 %v3215, %v3213
        %v4644 = vpack.c.b16 %v3218, %v3216
        %v4645 = vpack.c.b16 %v3219, %v3217
        %v4646 = vpack.c.b16 %v3222, %v3220
        %v4647 = vpack.c.b16 %v3223, %v3221
        %v4648 = vpack.c.b16 %v3226, %v3224
        %v4649 = vpack.c.b16 %v3227, %v3225
        %v4650 = vpack.c.b16 %v3230, %v3228
        %v4651 = vpack.c.b16 %v3231, %v3229
        %v4652 = vpack.c.b16 %v3234, %v3232
        %v4653 = vpack.c.b16 %v3235, %v3233
        %v4654 = vpack.c.b16 %v3238, %v3236
        %v4655 = vpack.c.b16 %v3239, %v3237
        %v4656 = vpack.c.b16 %v3242, %v3240
        %v4657 = vpack.c.b16 %v3243, %v3241
        %v4658 = vpack.c.b16 %v3246, %v3244
        %v4659 = vpack.c.b16 %v3247, %v3245
        %v4660 = vpack.c.b16 %v3250, %v3248
        %v4661 = vpack.c.b16 %v3251, %v3249
        %v4662 = vpack.c.b16 %v3254, %v3252
        %v4663 = vpack.c.b16 %v3255, %v3253
        %v4664 = vpack.c.b16 %v3258, %v3256
        %v4665 = vpack.c.b16 %v3259, %v3257
        %v4666 = vpack.c.b16 %v3262, %v3260
        %v4667 = vpack.c.b16 %v3263, %v3261
        %v4668 = vpack.c.b16 %v3266, %v3264
        %v4669 = vpack.c.b16 %v3267, %v3265
        %v4670 = vpack.c.b16 %v3270, %v3268
        %v4671 = vpack.c.b16 %v3271, %v3269
        %v4672 = vpack.c.b16 %v3274, %v3272
        %v4673 = vpack.c.b16 %v3275, %v3273
        %v4674 = vpack.c.b16 %v3278, %v3276
        %v4675 = vpack.c.b16 %v3279, %v3277
        %v4676 = vpack.c.b16 %v3282, %v3280
        %v4677 = vpack.c.b16 %v3283, %v3281
        %v4678 = vpack.c.b16 %v3286, %v3284
        %v4679 = vpack.c.b16 %v3287, %v3285
        %v4680 = vpack.c.b16 %v3290, %v3288
        %v4681 = vpack.c.b16 %v3291, %v3289
        %v4682 = vpack.c.b16 %v3294, %v3292
        %v4683 = vpack.c.b16 %v3295, %v3293
        %v4684 = vpack.c.b16 %v3298, %v3296
        %v4685 = vpack.c.b16 %v3299, %v3297
        %v4686 = vpack.c.b16 %v3302, %v3300
        %v4687 = vpack.c.b16 %v3303, %v3301
        %v4688 = vpack.c.b16 %v3306, %v3304
        %v4689 = vpack.c.b16 %v3307, %v3305
        %v4690 = vpack.c.b16 %v3310, %v3308
        %v4691 = vpack.c.b16 %v3311, %v3309
        %v4692 = vpack.c.b16 %v3314, %v3312
        %v4693 = vpack.c.b16 %v3315, %v3313
        %v4694 = vpack.c.b16 %v3318, %v3316
        %v4695 = vpack.c.b16 %v3319, %v3317
        %v4696 = vpack.c.b16 %v3322, %v3320
        %v4697 = vpack.c.b16 %v3323, %v3321
        %v4698 = vpack.c.b16 %v3326, %v3324
        %v4699 = vpack.c.b16 %v3327, %v3325
        %v4700 = vpack.c.b16 %v3330, %v3328
        %v4701 = vpack.c.b16 %v3331, %v3329
        %v4702 = vpack.c.b16 %v3334, %v3332
        %v4703 = vpack.c.b16 %v3335, %v3333
        %v4704 = vpack.c.b16 %v3338, %v3336
        %v4705 = vpack.c.b16 %v3339, %v3337
        %v4706 = vpack.c.b16 %v3342, %v3340
        %v4707 = vpack.c.b16 %v3343, %v3341
        %v4708 = vpack.c.b16 %v3346, %v3344
        %v4709 = vpack.c.b16 %v3347, %v3345
        %v4710 = vpack.c.b16 %v3350, %v3348
        %v4711 = vpack.c.b16 %v3351, %v3349
        %v4712 = vpack.c.b16 %v3354, %v3352
        %v4713 = vpack.c.b16 %v3355, %v3353
        %v4714 = vpack.c.b16 %v3358, %v3356
        %v4715 = vpack.c.b16 %v3359, %v3357
        %v4716 = vpack.c.b16 %v3362, %v3360
        %v4717 = vpack.c.b16 %v3363, %v3361
        %v4718 = vpack.c.b16 %v3366, %v3364
        %v4719 = vpack.c.b16 %v3367, %v3365
        %v4720 = vpack.c.b16 %v3370, %v3368
        %v4721 = vpack.c.b16 %v3371, %v3369
        %v4722 = vpack.c.b16 %v3374, %v3372
        %v4723 = vpack.c.b16 %v3375, %v3373
        %v4724 = vpack.c.b16 %v3378, %v3376
        %v4725 = vpack.c.b16 %v3379, %v3377
        %v4726 = vpack.c.b16 %v3382, %v3380
        %v4727 = vpack.c.b16 %v3383, %v3381
        %v4728 = vpack.c.b16 %v3386, %v3384
        %v4729 = vpack.c.b16 %v3387, %v3385
        %v4730 = vpack.c.b16 %v3390, %v3388
        %v4731 = vpack.c.b16 %v3391, %v3389
        %v4732 = vpack.c.b16 %v3394, %v3392
        %v4733 = vpack.c.b16 %v3395, %v3393
        %v4734 = vpack.c.b16 %v3398, %v3396
        %v4735 = vpack.c.b16 %v3399, %v3397
        %v4736 = vpack.c.b16 %v3402, %v3400
        %v4737 = vpack.c.b16 %v3403, %v3401
        %v4738 = vpack.c.b16 %v3406, %v3404
        %v4739 = vpack.c.b16 %v3407, %v3405
        %v4740 = vpack.c.b16 %v3410, %v3408
        %v4741 = vpack.c.b16 %v3411, %v3409
        %v4742 = vpack.c.b16 %v3414, %v3412
        %v4743 = vpack.c.b16 %v3415, %v3413
        %v4744 = vpack.c.b16 %v3418, %v3416
        %v4745 = vpack.c.b16 %v3419, %v3417
        %v4746 = vpack.c.b16 %v3422, %v3420
        %v4747 = vpack.c.b16 %v3423, %v3421
        %v4748 = vpack.c.b16 %v3426, %v3424
        %v4749 = vpack.c.b16 %v3427, %v3425
        %v4750 = vpack.c.b16 %v3430, %v3428
        %v4751 = vpack.c.b16 %v3431, %v3429
        %v4752 = vpack.c.b16 %v3434, %v3432
        %v4753 = vpack.c.b16 %v3435, %v3433
        %v4754 = vpack.c.b16 %v3438, %v3436
        %v4755 = vpack.c.b16 %v3439, %v3437
        %v4756 = vpack.c.b16 %v3442, %v3440
        %v4757 = vpack.c.b16 %v3443, %v3441
        %v4758 = vpack.c.b16 %v3446, %v3444
        %v4759 = vpack.c.b16 %v3447, %v3445
        %v4760 = vpack.c.b16 %v3450, %v3448
        %v4761 = vpack.c.b16 %v3451, %v3449
        %v4762 = vpack.c.b16 %v3454, %v3452
        %v4763 = vpack.c.b16 %v3455, %v3453
        %v4764 = vpack.c.b16 %v3458, %v3456
        %v4765 = vpack.c.b16 %v3459, %v3457
        %v4766 = vpack.c.b16 %v3462, %v3460
        %v4767 = vpack.c.b16 %v3463, %v3461
        %v4768 = vpack.c.b16 %v3466, %v3464
        %v4769 = vpack.c.b16 %v3467, %v3465
        %v4770 = vpack.c.b16 %v3470, %v3468
        %v4771 = vpack.c.b16 %v3471, %v3469
        %v4772 = vpack.c.b16 %v3474, %v3472
        %v4773 = vpack.c.b16 %v3475, %v3473
        %v4774 = vpack.c.b16 %v3478, %v3476
        %v4775 = vpack.c.b16 %v3479, %v3477
        %v4776 = vpack.c.b16 %v3482, %v3480
        %v4777 = vpack.c.b16 %v3483, %v3481
        %v4778 = vpack.c.b16 %v3486, %v3484
        %v4779 = vpack.c.b16 %v3487, %v3485
        %v4780 = vpack.c.b16 %v3490, %v3488
        %v4781 = vpack.c.b16 %v3491, %v3489
        %v4782 = vpack.c.b16 %v3494, %v3492
        %v4783 = vpack.c.b16 %v3495, %v3493
        %v4784 = vpack.c.b16 %v3498, %v3496
        %v4785 = vpack.c.b16 %v3499, %v3497
        %v4786 = vpack.c.b16 %v3502, %v3500
        %v4787 = vpack.c.b16 %v3503, %v3501
        %v4788 = vpack.c.b16 %v3506, %v3504
        %v4789 = vpack.c.b16 %v3507, %v3505
        %v4790 = vpack.c.b16 %v3510, %v3508
        %v4791 = vpack.c.b16 %v3511, %v3509
        %v4792 = vpack.c.b16 %v3514, %v3512
        %v4793 = vpack.c.b16 %v3515, %v3513
        %v4794 = vpack.c.b16 %v3518, %v3516
        %v4795 = vpack.c.b16 %v3519, %v3517
        %v4796 = vpack.c.b16 %v3522, %v3520
        %v4797 = vpack.c.b16 %v3523, %v3521
        %v4798 = vpack.c.b16 %v3526, %v3524
        %v4799 = vpack.c.b16 %v3527, %v3525
        %v4800 = vpack.c.b16 %v3530, %v3528
        %v4801 = vpack.c.b16 %v3531, %v3529
        %v4802 = vpack.c.b16 %v3534, %v3532
        %v4803 = vpack.c.b16 %v3535, %v3533
        %v4804 = vpack.c.b16 %v3538, %v3536
        %v4805 = vpack.c.b16 %v3539, %v3537
        %v4806 = vpack.c.b16 %v3542, %v3540
        %v4807 = vpack.c.b16 %v3543, %v3541
        %v4808 = vpack.c.b16 %v3546, %v3544
        %v4809 = vpack.c.b16 %v3547, %v3545
        %v4810 = vpack.c.b16 %v3550, %v3548
        %v4811 = vpack.c.b16 %v3551, %v3549
        %v4812 = vpack.c.b16 %v3554, %v3552
        %v4813 = vpack.c.b16 %v3555, %v3553
        %v4814 = vpack.c.b16 %v3558, %v3556
        %v4815 = vpack.c.b16 %v3559, %v3557
        %v4816 = vpack.c.b16 %v3562, %v3560
        %v4817 = vpack.c.b16 %v3563, %v3561
        %v4818 = vpack.c.b16 %v3566, %v3564
        %v4819 = vpack.c.b16 %v3567, %v3565
        %v4820 = vpack.c.b16 %v3570, %v3568
        %v4821 = vpack.c.b16 %v3571, %v3569
        %v4822 = vpack.c.b16 %v3574, %v3572
        %v4823 = vpack.c.b16 %v3575, %v3573
        %v4824 = vpack.c.b16 %v3578, %v3576
        %v4825 = vpack.c.b16 %v3579, %v3577
        %v4826 = vpack.c.b16 %v3582, %v3580
        %v4827 = vpack.c.b16 %v3583, %v3581
        %v4828 = vpack.c.b16 %v3586, %v3584
        %v4829 = vpack.c.b16 %v3587, %v3585
        %v4830 = vpack.c.b16 %v3590, %v3588
        %v4831 = vpack.c.b16 %v3591, %v3589
        %v4832 = vpack.c.b16 %v3594, %v3592
        %v4833 = vpack.c.b16 %v3595, %v3593
        %v4834 = vpack.c.b16 %v3598, %v3596
        %v4835 = vpack.c.b16 %v3599, %v3597
        %v4836 = vpack.c.b16 %v3602, %v3600
        %v4837 = vpack.c.b16 %v3603, %v3601
        %v4838 = vpack.c.b16 %v3606, %v3604
        %v4839 = vpack.c.b16 %v3607, %v3605
        %v4840 = vpack.c.b16 %v3610, %v3608
        %v4841 = vpack.c.b16 %v3611, %v3609
        %v4842 = vpack.c.b16 %v3614, %v3612
        %v4843 = vpack.c.b16 %v3615, %v3613
        %v4844 = vpack.c.b16 %v3618, %v3616
        %v4845 = vpack.c.b16 %v3619, %v3617
        %v4846 = vpack.c.b16 %v3622, %v3620
        %v4847 = vpack.c.b16 %v3623, %v3621
        %v4848 = vpack.c.b16 %v3626, %v3624
        %v4849 = vpack.c.b16 %v3627, %v3625
        %v4850 = vpack.c.b16 %v3630, %v3628
        %v4851 = vpack.c.b16 %v3631, %v3629
        %v4852 = vpack.c.b16 %v3634, %v3632
        %v4853 = vpack.c.b16 %v3635, %v3633
        %v4854 = vpack.c.b16 %v3638, %v3636
        %v4855 = vpack.c.b16 %v3639, %v3637
        %v4856 = vpack.c.b16 %v3642, %v3640
        %v4857 = vpack.c.b16 %v3643, %v3641
        %v4858 = vpack.c.b16 %v3646, %v3644
        %v4859 = vpack.c.b16 %v3647, %v3645
        %v4860 = vpack.c.b16 %v3650, %v3648
        %v4861 = vpack.c.b16 %v3651, %v3649
        %v4862 = vpack.c.b16 %v3654, %v3652
        %v4863 = vpack.c.b16 %v3655, %v3653
        %v4864 = vpack.c.b16 %v3658, %v3656
        %v4865 = vpack.c.b16 %v3659, %v3657
        %v4866 = vpack.c.b16 %v3662, %v3660
        %v4867 = vpack.c.b16 %v3663, %v3661
        %v4868 = vpack.c.b16 %v3666, %v3664
        %v4869 = vpack.c.b16 %v3667, %v3665
        %v4870 = vpack.c.b16 %v3670, %v3668
        %v4871 = vpack.c.b16 %v3671, %v3669
        %v4872 = vpack.c.b16 %v3674, %v3672
        %v4873 = vpack.c.b16 %v3675, %v3673
        %v4874 = vpack.c.b16 %v3678, %v3676
        %v4875 = vpack.c.b16 %v3679, %v3677
        %v4876 = vpack.c.b16 %v3682, %v3680
        %v4877 = vpack.c.b16 %v3683, %v3681
        %v4878 = vpack.c.b16 %v3686, %v3684
        %v4879 = vpack.c.b16 %v3687, %v3685
        %v4880 = vpack.c.b16 %v3690, %v3688
        %v4881 = vpack.c.b16 %v3691, %v3689
        %v4882 = vpack.c.b16 %v3694, %v3692
        %v4883 = vpack.c.b16 %v3695, %v3693
        %v4884 = vpack.c.b16 %v3698, %v3696
        %v4885 = vpack.c.b16 %v3699, %v3697
        %v4886 = vpack.c.b16 %v3702, %v3700
        %v4887 = vpack.c.b16 %v3703, %v3701
        %v4888 = vpack.c.b16 %v3706, %v3704
        %v4889 = vpack.c.b16 %v3707, %v3705
        %v4890 = vpack.c.b16 %v3710, %v3708
        %v4891 = vpack.c.b16 %v3711, %v3709
        %v4892 = vpack.c.b16 %v3714, %v3712
        %v4893 = vpack.c.b16 %v3715, %v3713
        %v4894 = vpack.c.b16 %v3718, %v3716
        %v4895 = vpack.c.b16 %v3719, %v3717
        %v4896 = vpack.c.b16 %v3722, %v3720
        %v4897 = vpack.c.b16 %v3723, %v3721
        %v4898 = vpack.c.b16 %v3726, %v3724
        %v4899 = vpack.c.b16 %v3727, %v3725
        %v4900 = vpack.c.b16 %v3730, %v3728
        %v4901 = vpack.c.b16 %v3731, %v3729
        %v4902 = vpack.c.b16 %v3734, %v3732
        %v4903 = vpack.c.b16 %v3735, %v3733
        %v4904 = vpack.c.b16 %v3738, %v3736
        %v4905 = vpack.c.b16 %v3739, %v3737
        %v4906 = vpack.c.b16 %v3742, %v3740
        %v4907 = vpack.c.b16 %v3743, %v3741
        %v4908 = vpack.c.b16 %v3746, %v3744
        %v4909 = vpack.c.b16 %v3747, %v3745
        %v4910 = vpack.c.b16 %v3750, %v3748
        %v4911 = vpack.c.b16 %v3751, %v3749
        %v4912 = vpack.c.b16 %v3754, %v3752
        %v4913 = vpack.c.b16 %v3755, %v3753
        %v4914 = vpack.c.b16 %v3758, %v3756
        %v4915 = vpack.c.b16 %v3759, %v3757
        %v4916 = vpack.c.b16 %v3762, %v3760
        %v4917 = vpack.c.b16 %v3763, %v3761
        %v4918 = vpack.c.b16 %v3766, %v3764
        %v4919 = vpack.c.b16 %v3767, %v3765
        %v4920 = vpack.c.b16 %v3770, %v3768
        %v4921 = vpack.c.b16 %v3771, %v3769
        %v4922 = vpack.c.b16 %v3774, %v3772
        %v4923 = vpack.c.b16 %v3775, %v3773
        %v4924 = vpack.c.b16 %v3778, %v3776
        %v4925 = vpack.c.b16 %v3779, %v3777
        %v4926 = vpack.c.b16 %v3782, %v3780
        %v4927 = vpack.c.b16 %v3783, %v3781
        %v4928 = vpack.c.b16 %v3786, %v3784
        %v4929 = vpack.c.b16 %v3787, %v3785
        %v4930 = vpack.c.b16 %v3790, %v3788
        %v4931 = vpack.c.b16 %v3791, %v3789
        %v4932 = vpack.c.b16 %v3794, %v3792
        %v4933 = vpack.c.b16 %v3795, %v3793
        %v4934 = vpack.c.b16 %v3798, %v3796
        %v4935 = vpack.c.b16 %v3799, %v3797
        %v4936 = vpack.c.b16 %v3802, %v3800
        %v4937 = vpack.c.b16 %v3803, %v3801
        %v4938 = vpack.c.b16 %v3806, %v3804
        %v4939 = vpack.c.b16 %v3807, %v3805
        %v4940 = vpack.c.b16 %v3810, %v3808
        %v4941 = vpack.c.b16 %v3811, %v3809
        %v4942 = vpack.c.b16 %v3814, %v3812
        %v4943 = vpack.c.b16 %v3815, %v3813
        %v4944 = vpack.c.b16 %v3818, %v3816
        %v4945 = vpack.c.b16 %v3819, %v3817
        %v4946 = vpack.c.b16 %v3822, %v3820
        %v4947 = vpack.c.b16 %v3823, %v3821
        %v4948 = vpack.c.b16 %v3826, %v3824
        %v4949 = vpack.c.b16 %v3827, %v3825
        %v4950 = vpack.c.b16 %v3830, %v3828
        %v4951 = vpack.c.b16 %v3831, %v3829
        %v4952 = vpack.c.b16 %v3834, %v3832
        %v4953 = vpack.c.b16 %v3835, %v3833
        %v4954 = vpack.c.b16 %v3838, %v3836
        %v4955 = vpack.c.b16 %v3839, %v3837
        %v4956 = vpack.c.b16 %v3842, %v3840
        %v4957 = vpack.c.b16 %v3843, %v3841
        %v4958 = vpack.c.b16 %v3846, %v3844
        %v4959 = vpack.c.b16 %v3847, %v3845
        %v4960 = vpack.c.b16 %v3850, %v3848
        %v4961 = vpack.c.b16 %v3851, %v3849
        %v4962 = vpack.c.b16 %v3854, %v3852
        %v4963 = vpack.c.b16 %v3855, %v3853
        %v4964 = vpack.c.b16 %v3858, %v3856
        %v4965 = vpack.c.b16 %v3859, %v3857
        %v4966 = vpack.c.b16 %v3862, %v3860
        %v4967 = vpack.c.b16 %v3863, %v3861
        %v4968 = vpack.c.b16 %v3866, %v3864
        %v4969 = vpack.c.b16 %v3867, %v3865
        %v4970 = vpack.c.b16 %v3870, %v3868
        %v4971 = vpack.c.b16 %v3871, %v3869
        %v4972 = vpack.c.b16 %v3874, %v3872
        %v4973 = vpack.c.b16 %v3875, %v3873
        %v4974 = vpack.c.b16 %v3878, %v3876
        %v4975 = vpack.c.b16 %v3879, %v3877
        %v4976 = vpack.c.b16 %v3882, %v3880
        %v4977 = vpack.c.b16 %v3883, %v3881
        %v4978 = vpack.c.b16 %v3886, %v3884
        %v4979 = vpack.c.b16 %v3887, %v3885
        %v4980 = vpack.c.b16 %v3890, %v3888
        %v4981 = vpack.c.b16 %v3891, %v3889
        %v4982 = vpack.c.b16 %v3894, %v3892
        %v4983 = vpack.c.b16 %v3895, %v3893
        %v4984 = vpack.c.b16 %v3898, %v3896
        %v4985 = vpack.c.b16 %v3899, %v3897
        %v4986 = vpack.c.b16 %v3902, %v3900
        %v4987 = vpack.c.b16 %v3903, %v3901
        %v4988 = vpack.c.b16 %v3906, %v3904
        %v4989 = vpack.c.b16 %v3907, %v3905
        %v4990 = vpack.c.b16 %v3910, %v3908
        %v4991 = vpack.c.b16 %v3911, %v3909
        %v4992 = vpack.c.b16 %v3914, %v3912
        %v4993 = vpack.c.b16 %v3915, %v3913
        %v4994 = vpack.c.b16 %v3918, %v3916
        %v4995 = vpack.c.b16 %v3919, %v3917
        %v4996 = vpack.c.b16 %v3922, %v3920
        %v4997 = vpack.c.b16 %v3923, %v3921
        %v4998 = vpack.c.b16 %v3926, %v3924
        %v4999 = vpack.c.b16 %v3927, %v3925
        %v5000 = vpack.c.b16 %v3930, %v3928
        %v5001 = vpack.c.b16 %v3931, %v3929
        %v5002 = vpack.c.b16 %v3934, %v3932
        %v5003 = vpack.c.b16 %v3935, %v3933
        %v5004 = vpack.c.b16 %v3938, %v3936
        %v5005 = vpack.c.b16 %v3939, %v3937
        %v5006 = vpack.c.b16 %v3942, %v3940
        %v5007 = vpack.c.b16 %v3943, %v3941
        %v5008 = vpack.c.b16 %v3946, %v3944
        %v5009 = vpack.c.b16 %v3947, %v3945
        %v5010 = vpack.c.b16 %v3950, %v3948
        %v5011 = vpack.c.b16 %v3951, %v3949
        %v5012 = vpack.c.b16 %v3954, %v3952
        %v5013 = vpack.c.b16 %v3955, %v3953
        %v5014 = vpack.c.b16 %v3958, %v3956
        %v5015 = vpack.c.b16 %v3959, %v3957
        %v5016 = vpack.c.b16 %v3962, %v3960
        %v5017 = vpack.c.b16 %v3963, %v3961
        %v5018 = vpack.c.b16 %v3966, %v3964
        %v5019 = vpack.c.b16 %v3967, %v3965
        %v5020 = vpack.c.b16 %v3970, %v3968
        %v5021 = vpack.c.b16 %v3971, %v3969
        %v5022 = vpack.c.b16 %v3974, %v3972
        %v5023 = vpack.c.b16 %v3975, %v3973
        %v5024 = vpack.c.b16 %v3978, %v3976
        %v5025 = vpack.c.b16 %v3979, %v3977
        %v5026 = vpack.c.b16 %v3982, %v3980
        %v5027 = vpack.c.b16 %v3983, %v3981
        %v5028 = vpack.c.b16 %v3986, %v3984
        %v5029 = vpack.c.b16 %v3987, %v3985
        %v5030 = vpack.c.b16 %v3990, %v3988
        %v5031 = vpack.c.b16 %v3991, %v3989
        %v5032 = vpack.c.b16 %v3994, %v3992
        %v5033 = vpack.c.b16 %v3995, %v3993
        %v5034 = vpack.c.b16 %v3998, %v3996
        %v5035 = vpack.c.b16 %v3999, %v3997
        %v5036 = vpack.c.b16 %v4002, %v4000
        %v5037 = vpack.c.b16 %v4003, %v4001
        %v5038 = vpack.c.b16 %v4006, %v4004
        %v5039 = vpack.c.b16 %v4007, %v4005
        %v5040 = vpack.c.b16 %v4010, %v4008
        %v5041 = vpack.c.b16 %v4011, %v4009
        %v5042 = vpack.c.b16 %v4014, %v4012
        %v5043 = vpack.c.b16 %v4015, %v4013
        %v5044 = vpack.c.b16 %v4018, %v4016
        %v5045 = vpack.c.b16 %v4019, %v4017
        %v5046 = vpack.c.b16 %v4022, %v4020
        %v5047 = vpack.c.b16 %v4023, %v4021
        %v5048 = vpack.c.b16 %v4026, %v4024
        %v5049 = vpack.c.b16 %v4027, %v4025
        %v5050 = vpack.c.b16 %v4030, %v4028
        %v5051 = vpack.c.b16 %v4031, %v4029
        %v5052 = vpack.c.b16 %v4034, %v4032
        %v5053 = vpack.c.b16 %v4035, %v4033
        %v5054 = vpack.c.b16 %v4038, %v4036
        %v5055 = vpack.c.b16 %v4039, %v4037
        %v5056 = vpack.c.b16 %v4042, %v4040
        %v5057 = vpack.c.b16 %v4043, %v4041
        %v5058 = vpack.c.b16 %v4046, %v4044
        %v5059 = vpack.c.b16 %v4047, %v4045
        %v5060 = vpack.c.b16 %v4050, %v4048
        %v5061 = vpack.c.b16 %v4051, %v4049
        %v5062 = vpack.c.b16 %v4054, %v4052
        %v5063 = vpack.c.b16 %v4055, %v4053
        %v5064 = vpack.c.b16 %v4058, %v4056
        %v5065 = vpack.c.b16 %v4059, %v4057
        %v5066 = vpack.c.b16 %v4062, %v4060
        %v5067 = vpack.c.b16 %v4063, %v4061
        %v5068 = vpack.c.b16 %v4066, %v4064
        %v5069 = vpack.c.b16 %v4067, %v4065
        %v5070 = vpack.c.b16 %v4070, %v4068
        %v5071 = vpack.c.b16 %v4071, %v4069
        %v5072 = vpack.c.b16 %v4074, %v4072
        %v5073 = vpack.c.b16 %v4075, %v4073
        %v5074 = vpack.c.b16 %v4078, %v4076
        %v5075 = vpack.c.b16 %v4079, %v4077
        %v5076 = vpack.c.b16 %v4082, %v4080
        %v5077 = vpack.c.b16 %v4083, %v4081
        %v5078 = vpack.c.b16 %v4086, %v4084
        %v5079 = vpack.c.b16 %v4087, %v4085
        %v5080 = vpack.c.b16 %v4090, %v4088
        %v5081 = vpack.c.b16 %v4091, %v4089
        %v5082 = vpack.c.b16 %v4094, %v4092
        %v5083 = vpack.c.b16 %v4095, %v4093
        %v5084 = vpack.c.b16 %v4098, %v4096
        %v5085 = vpack.c.b16 %v4099, %v4097
        %v5086 = vpack.c.b16 %v4102, %v4100
        %v5087 = vpack.c.b16 %v4103, %v4101
        %v5088 = vpack.c.b16 %v4106, %v4104
        %v5089 = vpack.c.b16 %v4107, %v4105
        %v5090 = vpack.c.b16 %v4110, %v4108
        %v5091 = vpack.c.b16 %v4111, %v4109
        %v5092 = vpack.c.b16 %v4114, %v4112
        %v5093 = vpack.c.b16 %v4115, %v4113
        %v5094 = vpack.c.b16 %v4118, %v4116
        %v5095 = vpack.c.b16 %v4119, %v4117
        %v5096 = vpack.c.b16 %v4122, %v4120
        %v5097 = vpack.c.b16 %v4123, %v4121
        %v5098 = vpack.c.b16 %v4126, %v4124
        %v5099 = vpack.c.b16 %v4127, %v4125
        %v5100 = vpack.c.b16 %v4130, %v4128
        %v5101 = vpack.c.b16 %v4131, %v4129
        %v5102 = vpack.c.b16 %v4134, %v4132
        %v5103 = vpack.c.b16 %v4135, %v4133
        %v5104 = vpack.c.b16 %v4138, %v4136
        %v5105 = vpack.c.b16 %v4139, %v4137
        %v5106 = vpack.c.b16 %v4142, %v4140
        %v5107 = vpack.c.b16 %v4143, %v4141
        %v5108 = vpack.c.b16 %v4146, %v4144
        %v5109 = vpack.c.b16 %v4147, %v4145
        %v5110 = vpack.c.b16 %v4150, %v4148
        %v5111 = vpack.c.b16 %v4151, %v4149
        %v5112 = vpack.c.b16 %v4154, %v4152
        %v5113 = vpack.c.b16 %v4155, %v4153
        %v5114 = vpack.c.b16 %v4158, %v4156
        %v5115 = vpack.c.b16 %v4159, %v4157
        %v5116 = vpack.c.b16 %v4162, %v4160
        %v5117 = vpack.c.b16 %v4163, %v4161
        %v5118 = vpack.c.b16 %v4166, %v4164
        %v5119 = vpack.c.b16 %v4167, %v4165
        %v5120 = vpack.c.b16 %v4170, %v4168
        %v5121 = vpack.c.b16 %v4171, %v4169
        %v5122 = vpack.c.b16 %v4174, %v4172
        %v5123 = vpack.c.b16 %v4175, %v4173
        %v5124 = vpack.c.b16 %v4178, %v4176
        %v5125 = vpack.c.b16 %v4179, %v4177
        %v5126 = vpack.c.b16 %v4182, %v4180
        %v5127 = vpack.c.b16 %v4183, %v4181
        %v5128 = vpack.c.b16 %v4186, %v4184
        %v5129 = vpack.c.b16 %v4187, %v4185
        %v5130 = vpack.c.b16 %v4190, %v4188
        %v5131 = vpack.c.b16 %v4191, %v4189
        %v5132 = vpack.c.b16 %v4194, %v4192
        %v5133 = vpack.c.b16 %v4195, %v4193
        %v5134 = vpack.c.b16 %v4198, %v4196
        %v5135 = vpack.c.b16 %v4199, %v4197
        %v5136 = vpack.c.b16 %v4202, %v4200
        %v5137 = vpack.c.b16 %v4203, %v4201
        %v5138 = vpack.c.b16 %v4206, %v4204
        %v5139 = vpack.c.b16 %v4207, %v4205
        %v5140 = vpack.c.b16 %v4210, %v4208
        %v5141 = vpack.c.b16 %v4211, %v4209
        %v5142 = vpack.c.b16 %v4214, %v4212
        %v5143 = vpack.c.b16 %v4215, %v4213
        %v5144 = vpack.c.b16 %v4218, %v4216
        %v5145 = vpack.c.b16 %v4219, %v4217
        %v5146 = vpack.c.b16 %v4222, %v4220
        %v5147 = vpack.c.b16 %v4223, %v4221
        %v5148 = vpack.c.b16 %v4226, %v4224
        %v5149 = vpack.c.b16 %v4227, %v4225
        %v5150 = vpack.c.b16 %v4230, %v4228
        %v5151 = vpack.c.b16 %v4231, %v4229
        %v5152 = vpack.c.b16 %v4234, %v4232
        %v5153 = vpack.c.b16 %v4235, %v4233
        %v5154 = vpack.c.b16 %v4238, %v4236
        %v5155 = vpack.c.b16 %v4239, %v4237
        %v5156 = vpack.c.b16 %v4242, %v4240
        %v5157 = vpack.c.b16 %v4243, %v4241
        %v5158 = vpack.c.b16 %v4246, %v4244
        %v5159 = vpack.c.b16 %v4247, %v4245
        %v5160 = vpack.c.b16 %v4250, %v4248
        %v5161 = vpack.c.b16 %v4251, %v4249
        %v5162 = vpack.c.b16 %v4254, %v4252
        %v5163 = vpack.c.b16 %v4255, %v4253
        %v5164 = vpack.c.b16 %v4258, %v4256
        %v5165 = vpack.c.b16 %v4259, %v4257
        %v5166 = vpack.c.b16 %v4262, %v4260
        %v5167 = vpack.c.b16 %v4263, %v4261
        %v5168 = vpack.c.b16 %v4266, %v4264
        %v5169 = vpack.c.b16 %v4267, %v4265
        %v5170 = vpack.c.b16 %v4270, %v4268
        %v5171 = vpack.c.b16 %v4271, %v4269
        %v5172 = vpack.c.b16 %v4274, %v4272
        %v5173 = vpack.c.b16 %v4275, %v4273
        %v5174 = vpack.c.b16 %v4278, %v4276
        %v5175 = vpack.c.b16 %v4279, %v4277
        %6072 = vmatprep.subr.bf16.mxu0 %v4281
        %6073 = vmatpush1.bf16.msra.mxu0 %v4280
        %6074 = vmatprep.subr.bf16.mxu0 %v4283
        %6075 = vmatpush1.bf16.msra.mxu0 %v4282
        %6076 = vmatprep.subr.bf16.mxu0 %v4285
        %6077 = vmatpush1.bf16.msra.mxu0 %v4284
        %6078 = vmatprep.subr.bf16.mxu0 %v4287
        %6079 = vmatpush1.bf16.msra.mxu0 %v4286
        %6080 = vmatprep.subr.bf16.mxu0 %v4289
        %6081 = vmatpush1.bf16.msra.mxu0 %v4288
        %6082 = vmatprep.subr.bf16.mxu0 %v4291
        %6083 = vmatpush1.bf16.msra.mxu0 %v4290
        %6084 = vmatprep.subr.bf16.mxu0 %v4293
        %6085 = vmatpush1.bf16.msra.mxu0 %v4292
        %6086 = vmatprep.subr.bf16.mxu0 %v4295
        %6087 = vmatpush1.bf16.msra.mxu0 %v4294
        %6088 = vmatprep.subr.bf16.mxu0 %v4297
        %6089 = vmatpush1.bf16.msra.mxu0 %v4296
        %6090 = vmatprep.subr.bf16.mxu0 %v4299
        %6091 = vmatpush1.bf16.msra.mxu0 %v4298
        %6092 = vmatprep.subr.bf16.mxu0 %v4301
        %6093 = vmatpush1.bf16.msra.mxu0 %v4300
        %6094 = vmatprep.subr.bf16.mxu0 %v4303
        %6095 = vmatpush1.bf16.msra.mxu0 %v4302
        %6096 = vmatprep.subr.bf16.mxu0 %v4305
        %6097 = vmatpush1.bf16.msra.mxu0 %v4304
        %6098 = vmatprep.subr.bf16.mxu0 %v4307
        %6099 = vmatpush1.bf16.msra.mxu0 %v4306
        %6100 = vmatprep.subr.bf16.mxu0 %v4309
        %6101 = vmatpush1.bf16.msra.mxu0 %v4308
        %6102 = vmatprep.subr.bf16.mxu0 %v4311
        %6103 = vmatpush1.bf16.msra.mxu0 %v4310
        %6104 = vmatprep.mubr.bf16.mxu0 %v1230
        %6105 = vmatmul.mubr.bf16.gmra.mrb[0].mxu0 %v1216
        %v6106 = vpop.f32.mrb[0].mxu0
        %v6107 = vadd.f32 0.0, %v6106
        %v6108 = vpop.f32.mrb[0].mxu0
        %v6109 = vadd.f32 0.0, %v6108
        %v6110 = vpop.f32.mrb[0].mxu0
        %v6111 = vpop.f32.mrb[0].mxu0
        %6112 = vdwg.mxu0
        %6113 = vmatprep.subr.bf16.mxu0 %v4313
        %6114 = vmatpush1.bf16.msra.mxu0 %v4312
        %6115 = vmatprep.subr.bf16.mxu0 %v4315
        %6116 = vmatpush1.bf16.msra.mxu0 %v4314
        %6117 = vmatprep.subr.bf16.mxu0 %v4317
        %6118 = vmatpush1.bf16.msra.mxu0 %v4316
        %6119 = vmatprep.subr.bf16.mxu0 %v4319
        %6120 = vmatpush1.bf16.msra.mxu0 %v4318
        %6121 = vmatprep.subr.bf16.mxu0 %v4321
        %6122 = vmatpush1.bf16.msra.mxu0 %v4320
        %6123 = vmatprep.subr.bf16.mxu0 %v4323
        %6124 = vmatpush1.bf16.msra.mxu0 %v4322
        %6125 = vmatprep.subr.bf16.mxu0 %v4325
        %6126 = vmatpush1.bf16.msra.mxu0 %v4324
        %6127 = vmatprep.subr.bf16.mxu0 %v4327
        %6128 = vmatpush1.bf16.msra.mxu0 %v4326
        %6129 = vmatprep.subr.bf16.mxu0 %v4329
        %6130 = vmatpush1.bf16.msra.mxu0 %v4328
        %6131 = vmatprep.subr.bf16.mxu0 %v4331
        %6132 = vmatpush1.bf16.msra.mxu0 %v4330
        %6133 = vmatprep.subr.bf16.mxu0 %v4333
        %6134 = vmatpush1.bf16.msra.mxu0 %v4332
        %6135 = vmatprep.subr.bf16.mxu0 %v4335
        %6136 = vmatpush1.bf16.msra.mxu0 %v4334
        %6137 = vmatprep.subr.bf16.mxu0 %v4337
        %6138 = vmatpush1.bf16.msra.mxu0 %v4336
        %6139 = vmatprep.subr.bf16.mxu0 %v4339
        %6140 = vmatpush1.bf16.msra.mxu0 %v4338
        %6141 = vmatprep.subr.bf16.mxu0 %v4341
        %6142 = vmatpush1.bf16.msra.mxu0 %v4340
        %6143 = vmatprep.subr.bf16.mxu0 %v4343
        %6144 = vmatpush1.bf16.msra.mxu0 %v4342
        %6145 = vmatprep.mubr.bf16.mxu0 %v1240
        %6146 = vmatmul.mubr.bf16.gmra.mrb[0].mxu0 %v1238
        %v6147 = vpop.f32.mrb[0].mxu0
        %v6148 = vadd.f32 %v6107, %v6147
        %v6149 = vpop.f32.mrb[0].mxu0
        %v6150 = vadd.f32 %v6109, %v6149
        %v6151 = vpop.f32.mrb[0].mxu0
        %v6152 = vpop.f32.mrb[0].mxu0
        %6153 = vdwg.mxu0
        %6154 = vmatprep.subr.bf16.mxu0 %v4345
        %6155 = vmatpush1.bf16.msra.mxu0 %v4344
        %6156 = vmatprep.subr.bf16.mxu0 %v4347
        %6157 = vmatpush1.bf16.msra.mxu0 %v4346
        %6158 = vmatprep.subr.bf16.mxu0 %v4349
        %6159 = vmatpush1.bf16.msra.mxu0 %v4348
        %6160 = vmatprep.subr.bf16.mxu0 %v4351
        %6161 = vmatpush1.bf16.msra.mxu0 %v4350
        %6162 = vmatprep.subr.bf16.mxu0 %v4353
        %6163 = vmatpush1.bf16.msra.mxu0 %v4352
        %6164 = vmatprep.subr.bf16.mxu0 %v4355
        %6165 = vmatpush1.bf16.msra.mxu0 %v4354
        %6166 = vmatprep.subr.bf16.mxu0 %v4357
        %6167 = vmatpush1.bf16.msra.mxu0 %v4356
        %6168 = vmatprep.subr.bf16.mxu0 %v4359
        %6169 = vmatpush1.bf16.msra.mxu0 %v4358
        %6170 = vmatprep.subr.bf16.mxu0 %v4361
        %6171 = vmatpush1.bf16.msra.mxu0 %v4360
        %6172 = vmatprep.subr.bf16.mxu0 %v4363
        %6173 = vmatpush1.bf16.msra.mxu0 %v4362
        %6174 = vmatprep.subr.bf16.mxu0 %v4365
        %6175 = vmatpush1.bf16.msra.mxu0 %v4364
        %6176 = vmatprep.subr.bf16.mxu0 %v4367
        %6177 = vmatpush1.bf16.msra.mxu0 %v4366
        %6178 = vmatprep.subr.bf16.mxu0 %v4369
        %6179 = vmatpush1.bf16.msra.mxu0 %v4368
        %6180 = vmatprep.subr.bf16.mxu0 %v4371
        %6181 = vmatpush1.bf16.msra.mxu0 %v4370
        %6182 = vmatprep.subr.bf16.mxu0 %v4373
        %6183 = vmatpush1.bf16.msra.mxu0 %v4372
        %6184 = vmatprep.subr.bf16.mxu0 %v4375
        %6185 = vmatpush1.bf16.msra.mxu0 %v4374
        %6186 = vmatprep.mubr.bf16.mxu0 %v1237
        %6187 = vmatmul.mubr.bf16.gmra.mrb[0].mxu0 %v1223
        %v6188 = vpop.f32.mrb[0].mxu0
        %v6189 = vadd.f32 %v6148, %v6188
        %v6190 = vpop.f32.mrb[0].mxu0
        %v6191 = vadd.f32 %v6150, %v6190
        %v6192 = vpop.f32.mrb[0].mxu0
        %v6193 = vpop.f32.mrb[0].mxu0
        %6194 = vdwg.mxu0
        %6195 = vmatprep.subr.bf16.mxu0 %v4377
        %6196 = vmatpush1.bf16.msra.mxu0 %v4376
        %6197 = vmatprep.subr.bf16.mxu0 %v4379
        %6198 = vmatpush1.bf16.msra.mxu0 %v4378
        %6199 = vmatprep.subr.bf16.mxu0 %v4381
        %6200 = vmatpush1.bf16.msra.mxu0 %v4380
        %6201 = vmatprep.subr.bf16.mxu0 %v4383
        %6202 = vmatpush1.bf16.msra.mxu0 %v4382
        %6203 = vmatprep.subr.bf16.mxu0 %v4385
        %6204 = vmatpush1.bf16.msra.mxu0 %v4384
        %6205 = vmatprep.subr.bf16.mxu0 %v4387
        %6206 = vmatpush1.bf16.msra.mxu0 %v4386
        %6207 = vmatprep.subr.bf16.mxu0 %v4389
        %6208 = vmatpush1.bf16.msra.mxu0 %v4388
        %6209 = vmatprep.subr.bf16.mxu0 %v4391
        %6210 = vmatpush1.bf16.msra.mxu0 %v4390
        %6211 = vmatprep.subr.bf16.mxu0 %v4393
        %6212 = vmatpush1.bf16.msra.mxu0 %v4392
        %6213 = vmatprep.subr.bf16.mxu0 %v4395
        %6214 = vmatpush1.bf16.msra.mxu0 %v4394
        %6215 = vmatprep.subr.bf16.mxu0 %v4397
        %6216 = vmatpush1.bf16.msra.mxu0 %v4396
        %6217 = vmatprep.subr.bf16.mxu0 %v4399
        %6218 = vmatpush1.bf16.msra.mxu0 %v4398
        %6219 = vmatprep.subr.bf16.mxu0 %v4401
        %6220 = vmatpush1.bf16.msra.mxu0 %v4400
        %6221 = vmatprep.subr.bf16.mxu0 %v4403
        %6222 = vmatpush1.bf16.msra.mxu0 %v4402
        %6223 = vmatprep.subr.bf16.mxu0 %v4405
        %6224 = vmatpush1.bf16.msra.mxu0 %v4404
        %6225 = vmatprep.subr.bf16.mxu0 %v4407
        %6226 = vmatpush1.bf16.msra.mxu0 %v4406
        %6227 = vmatprep.mubr.bf16.mxu0 %v1241
        %6228 = vmatmul.mubr.bf16.gmra.mrb[0].mxu0 %v1239
        %v6229 = vpop.f32.mrb[0].mxu0
        %v6230 = vadd.f32 %v6189, %v6229
        %v6231 = vpop.f32.mrb[0].mxu0
        %v6232 = vadd.f32 %v6191, %v6231
        %v6233 = vpop.f32.mrb[0].mxu0
        %v6234 = vpop.f32.mrb[0].mxu0
        %6235 = vdwg.mxu0
        %6236 = vmatprep.subr.bf16.mxu0 %v4409
        %6237 = vmatpush1.bf16.msra.mxu0 %v4408
        %6238 = vmatprep.subr.bf16.mxu0 %v4411
        %6239 = vmatpush1.bf16.msra.mxu0 %v4410
        %6240 = vmatprep.subr.bf16.mxu0 %v4413
        %6241 = vmatpush1.bf16.msra.mxu0 %v4412
        %6242 = vmatprep.subr.bf16.mxu0 %v4415
        %6243 = vmatpush1.bf16.msra.mxu0 %v4414
        %6244 = vmatprep.subr.bf16.mxu0 %v4417
        %6245 = vmatpush1.bf16.msra.mxu0 %v4416
        %6246 = vmatprep.subr.bf16.mxu0 %v4419
        %6247 = vmatpush1.bf16.msra.mxu0 %v4418
        %6248 = vmatprep.subr.bf16.mxu0 %v4421
        %6249 = vmatpush1.bf16.msra.mxu0 %v4420
        %6250 = vmatprep.subr.bf16.mxu0 %v4423
        %6251 = vmatpush1.bf16.msra.mxu0 %v4422
        %6252 = vmatprep.subr.bf16.mxu0 %v4425
        %6253 = vmatpush1.bf16.msra.mxu0 %v4424
        %6254 = vmatprep.subr.bf16.mxu0 %v4427
        %6255 = vmatpush1.bf16.msra.mxu0 %v4426
        %6256 = vmatprep.subr.bf16.mxu0 %v4429
        %6257 = vmatpush1.bf16.msra.mxu0 %v4428
        %6258 = vmatprep.subr.bf16.mxu0 %v4431
        %6259 = vmatpush1.bf16.msra.mxu0 %v4430
        %6260 = vmatprep.subr.bf16.mxu0 %v4433
        %6261 = vmatpush1.bf16.msra.mxu0 %v4432
        %6262 = vmatprep.subr.bf16.mxu0 %v4435
        %6263 = vmatpush1.bf16.msra.mxu0 %v4434
        %6264 = vmatprep.subr.bf16.mxu0 %v4437
        %6265 = vmatpush1.bf16.msra.mxu0 %v4436
        %6266 = vmatprep.subr.bf16.mxu0 %v4439
        %6267 = vmatpush1.bf16.msra.mxu0 %v4438
        %6268 = vmatprep.mubr.bf16.mxu0 %v1279
        %6269 = vmatmul.mubr.bf16.gmra.mrb[0].mxu0 %v1265
        %v6270 = vpop.f32.mrb[0].mxu0
        %v6271 = vadd.f32 %v6230, %v6270
        %v6272 = vpop.f32.mrb[0].mxu0
        %v6273 = vadd.f32 %v6232, %v6272
        %v6274 = vpop.f32.mrb[0].mxu0
        %v6275 = vpop.f32.mrb[0].mxu0
        %6276 = vdwg.mxu0
        %6277 = vmatprep.subr.bf16.mxu0 %v4441
        %6278 = vmatpush1.bf16.msra.mxu0 %v4440
        %6279 = vmatprep.subr.bf16.mxu0 %v4443
        %6280 = vmatpush1.bf16.msra.mxu0 %v4442
        %6281 = vmatprep.subr.bf16.mxu0 %v4445
        %6282 = vmatpush1.bf16.msra.mxu0 %v4444
        %6283 = vmatprep.subr.bf16.mxu0 %v4447
        %6284 = vmatpush1.bf16.msra.mxu0 %v4446
        %6285 = vmatprep.subr.bf16.mxu0 %v4449
        %6286 = vmatpush1.bf16.msra.mxu0 %v4448
        %6287 = vmatprep.subr.bf16.mxu0 %v4451
        %6288 = vmatpush1.bf16.msra.mxu0 %v4450
        %6289 = vmatprep.subr.bf16.mxu0 %v4453
        %6290 = vmatpush1.bf16.msra.mxu0 %v4452
        %6291 = vmatprep.subr.bf16.mxu0 %v4455
        %6292 = vmatpush1.bf16.msra.mxu0 %v4454
        %6293 = vmatprep.subr.bf16.mxu0 %v4457
        %6294 = vmatpush1.bf16.msra.mxu0 %v4456
        %6295 = vmatprep.subr.bf16.mxu0 %v4459
        %6296 = vmatpush1.bf16.msra.mxu0 %v4458
        %6297 = vmatprep.subr.bf16.mxu0 %v4461
        %6298 = vmatpush1.bf16.msra.mxu0 %v4460
        %6299 = vmatprep.subr.bf16.mxu0 %v4463
        %6300 = vmatpush1.bf16.msra.mxu0 %v4462
        %6301 = vmatprep.subr.bf16.mxu0 %v4465
        %6302 = vmatpush1.bf16.msra.mxu0 %v4464
        %6303 = vmatprep.subr.bf16.mxu0 %v4467
        %6304 = vmatpush1.bf16.msra.mxu0 %v4466
        %6305 = vmatprep.subr.bf16.mxu0 %v4469
        %6306 = vmatpush1.bf16.msra.mxu0 %v4468
        %6307 = vmatprep.subr.bf16.mxu0 %v4471
        %6308 = vmatpush1.bf16.msra.mxu0 %v4470
        %6309 = vmatprep.mubr.bf16.mxu0 %v1289
        %6310 = vmatmul.mubr.bf16.gmra.mrb[0].mxu0 %v1287
        %v6311 = vpop.f32.mrb[0].mxu0
        %v6312 = vadd.f32 %v6271, %v6311
        %v6313 = vpop.f32.mrb[0].mxu0
        %v6314 = vadd.f32 %v6273, %v6313
        %v6315 = vpop.f32.mrb[0].mxu0
        %v6316 = vpop.f32.mrb[0].mxu0
        %6317 = vdwg.mxu0
        %6318 = vmatprep.subr.bf16.mxu0 %v4473
        %6319 = vmatpush1.bf16.msra.mxu0 %v4472
        %6320 = vmatprep.subr.bf16.mxu0 %v4475
        %6321 = vmatpush1.bf16.msra.mxu0 %v4474
        %6322 = vmatprep.subr.bf16.mxu0 %v4477
        %6323 = vmatpush1.bf16.msra.mxu0 %v4476
        %6324 = vmatprep.subr.bf16.mxu0 %v4479
        %6325 = vmatpush1.bf16.msra.mxu0 %v4478
        %6326 = vmatprep.subr.bf16.mxu0 %v4481
        %6327 = vmatpush1.bf16.msra.mxu0 %v4480
        %6328 = vmatprep.subr.bf16.mxu0 %v4483
        %6329 = vmatpush1.bf16.msra.mxu0 %v4482
        %6330 = vmatprep.subr.bf16.mxu0 %v4485
        %6331 = vmatpush1.bf16.msra.mxu0 %v4484
        %6332 = vmatprep.subr.bf16.mxu0 %v4487
        %6333 = vmatpush1.bf16.msra.mxu0 %v4486
        %6334 = vmatprep.subr.bf16.mxu0 %v4489
        %6335 = vmatpush1.bf16.msra.mxu0 %v4488
        %6336 = vmatprep.subr.bf16.mxu0 %v4491
        %6337 = vmatpush1.bf16.msra.mxu0 %v4490
        %6338 = vmatprep.subr.bf16.mxu0 %v4493
        %6339 = vmatpush1.bf16.msra.mxu0 %v4492
        %6340 = vmatprep.subr.bf16.mxu0 %v4495
        %6341 = vmatpush1.bf16.msra.mxu0 %v4494
        %6342 = vmatprep.subr.bf16.mxu0 %v4497
        %6343 = vmatpush1.bf16.msra.mxu0 %v4496
        %6344 = vmatprep.subr.bf16.mxu0 %v4499
        %6345 = vmatpush1.bf16.msra.mxu0 %v4498
        %6346 = vmatprep.subr.bf16.mxu0 %v4501
        %6347 = vmatpush1.bf16.msra.mxu0 %v4500
        %6348 = vmatprep.subr.bf16.mxu0 %v4503
        %6349 = vmatpush1.bf16.msra.mxu0 %v4502
        %6350 = vmatprep.mubr.bf16.mxu0 %v1286
        %6351 = vmatmul.mubr.bf16.gmra.mrb[0].mxu0 %v1272
        %v6352 = vpop.f32.mrb[0].mxu0
        %v6353 = vadd.f32 %v6312, %v6352
        %v6354 = vpop.f32.mrb[0].mxu0
        %v6355 = vadd.f32 %v6314, %v6354
        %v6356 = vpop.f32.mrb[0].mxu0
        %v6357 = vpop.f32.mrb[0].mxu0
        %6358 = vdwg.mxu0
        %6359 = vmatprep.subr.bf16.mxu0 %v4505
        %6360 = vmatpush1.bf16.msra.mxu0 %v4504
        %6361 = vmatprep.subr.bf16.mxu0 %v4507
        %6362 = vmatpush1.bf16.msra.mxu0 %v4506
        %6363 = vmatprep.subr.bf16.mxu0 %v4509
        %6364 = vmatpush1.bf16.msra.mxu0 %v4508
        %6365 = vmatprep.subr.bf16.mxu0 %v4511
        %6366 = vmatpush1.bf16.msra.mxu0 %v4510
        %6367 = vmatprep.subr.bf16.mxu0 %v4513
        %6368 = vmatpush1.bf16.msra.mxu0 %v4512
        %6369 = vmatprep.subr.bf16.mxu0 %v4515
        %6370 = vmatpush1.bf16.msra.mxu0 %v4514
        %6371 = vmatprep.subr.bf16.mxu0 %v4517
        %6372 = vmatpush1.bf16.msra.mxu0 %v4516
        %6373 = vmatprep.subr.bf16.mxu0 %v4519
        %6374 = vmatpush1.bf16.msra.mxu0 %v4518
        %6375 = vmatprep.subr.bf16.mxu0 %v4521
        %6376 = vmatpush1.bf16.msra.mxu0 %v4520
        %6377 = vmatprep.subr.bf16.mxu0 %v4523
        %6378 = vmatpush1.bf16.msra.mxu0 %v4522
        %6379 = vmatprep.subr.bf16.mxu0 %v4525
        %6380 = vmatpush1.bf16.msra.mxu0 %v4524
        %6381 = vmatprep.subr.bf16.mxu0 %v4527
        %6382 = vmatpush1.bf16.msra.mxu0 %v4526
        %6383 = vmatprep.subr.bf16.mxu0 %v4529
        %6384 = vmatpush1.bf16.msra.mxu0 %v4528
        %6385 = vmatprep.subr.bf16.mxu0 %v4531
        %6386 = vmatpush1.bf16.msra.mxu0 %v4530
        %6387 = vmatprep.subr.bf16.mxu0 %v4533
        %6388 = vmatpush1.bf16.msra.mxu0 %v4532
        %6389 = vmatprep.subr.bf16.mxu0 %v4535
        %6390 = vmatpush1.bf16.msra.mxu0 %v4534
        %6391 = vmatprep.mubr.bf16.mxu0 %v1290
        %6392 = vmatmul.mubr.bf16.gmra.mrb[0].mxu0 %v1288
        %v6393 = vpop.f32.mrb[0].mxu0
        %v6394 = vadd.f32 %v6353, %v6393
        %v6395 = vpop.f32.mrb[0].mxu0
        %v6396 = vadd.f32 %v6355, %v6395
        %v6397 = vpop.f32.mrb[0].mxu0
        %v6398 = vpop.f32.mrb[0].mxu0
        %6399 = vdwg.mxu0
        %6400 = vmatprep.subr.bf16.mxu0 %v4537
        %6401 = vmatpush1.bf16.msra.mxu0 %v4536
        %6402 = vmatprep.subr.bf16.mxu0 %v4539
        %6403 = vmatpush1.bf16.msra.mxu0 %v4538
        %6404 = vmatprep.subr.bf16.mxu0 %v4541
        %6405 = vmatpush1.bf16.msra.mxu0 %v4540
        %6406 = vmatprep.subr.bf16.mxu0 %v4543
        %6407 = vmatpush1.bf16.msra.mxu0 %v4542
        %6408 = vmatprep.subr.bf16.mxu0 %v4545
        %6409 = vmatpush1.bf16.msra.mxu0 %v4544
        %6410 = vmatprep.subr.bf16.mxu0 %v4547
        %6411 = vmatpush1.bf16.msra.mxu0 %v4546
        %6412 = vmatprep.subr.bf16.mxu0 %v4549
        %6413 = vmatpush1.bf16.msra.mxu0 %v4548
        %6414 = vmatprep.subr.bf16.mxu0 %v4551
        %6415 = vmatpush1.bf16.msra.mxu0 %v4550
        %6416 = vmatprep.subr.bf16.mxu0 %v4553
        %6417 = vmatpush1.bf16.msra.mxu0 %v4552
        %6418 = vmatprep.subr.bf16.mxu0 %v4555
        %6419 = vmatpush1.bf16.msra.mxu0 %v4554
        %6420 = vmatprep.subr.bf16.mxu0 %v4557
        %6421 = vmatpush1.bf16.msra.mxu0 %v4556
        %6422 = vmatprep.subr.bf16.mxu0 %v4559
        %6423 = vmatpush1.bf16.msra.mxu0 %v4558
        %6424 = vmatprep.subr.bf16.mxu0 %v4561
        %6425 = vmatpush1.bf16.msra.mxu0 %v4560
        %6426 = vmatprep.subr.bf16.mxu0 %v4563
        %6427 = vmatpush1.bf16.msra.mxu0 %v4562
        %6428 = vmatprep.subr.bf16.mxu0 %v4565
        %6429 = vmatpush1.bf16.msra.mxu0 %v4564
        %6430 = vmatprep.subr.bf16.mxu0 %v4567
        %6431 = vmatpush1.bf16.msra.mxu0 %v4566
        %6432 = vmatprep.mubr.bf16.mxu0 %v1328
        %6433 = vmatmul.mubr.bf16.gmra.mrb[0].mxu0 %v1314
        %v6434 = vpop.f32.mrb[0].mxu0
        %v6435 = vadd.f32 %v6394, %v6434
        %v6436 = vpop.f32.mrb[0].mxu0
        %v6437 = vadd.f32 %v6396, %v6436
        %v6438 = vpop.f32.mrb[0].mxu0
        %v6439 = vpop.f32.mrb[0].mxu0
        %6440 = vdwg.mxu0
        %6441 = vmatprep.subr.bf16.mxu0 %v4569
        %6442 = vmatpush1.bf16.msra.mxu0 %v4568
        %6443 = vmatprep.subr.bf16.mxu0 %v4571
        %6444 = vmatpush1.bf16.msra.mxu0 %v4570
        %6445 = vmatprep.subr.bf16.mxu0 %v4573
        %6446 = vmatpush1.bf16.msra.mxu0 %v4572
        %6447 = vmatprep.subr.bf16.mxu0 %v4575
        %6448 = vmatpush1.bf16.msra.mxu0 %v4574
        %6449 = vmatprep.subr.bf16.mxu0 %v4577
        %6450 = vmatpush1.bf16.msra.mxu0 %v4576
        %6451 = vmatprep.subr.bf16.mxu0 %v4579
        %6452 = vmatpush1.bf16.msra.mxu0 %v4578
        %6453 = vmatprep.subr.bf16.mxu0 %v4581
        %6454 = vmatpush1.bf16.msra.mxu0 %v4580
        %6455 = vmatprep.subr.bf16.mxu0 %v4583
        %6456 = vmatpush1.bf16.msra.mxu0 %v4582
        %6457 = vmatprep.subr.bf16.mxu0 %v4585
        %6458 = vmatpush1.bf16.msra.mxu0 %v4584
        %6459 = vmatprep.subr.bf16.mxu0 %v4587
        %6460 = vmatpush1.bf16.msra.mxu0 %v4586
        %6461 = vmatprep.subr.bf16.mxu0 %v4589
        %6462 = vmatpush1.bf16.msra.mxu0 %v4588
        %6463 = vmatprep.subr.bf16.mxu0 %v4591
        %6464 = vmatpush1.bf16.msra.mxu0 %v4590
        %6465 = vmatprep.subr.bf16.mxu0 %v4593
        %6466 = vmatpush1.bf16.msra.mxu0 %v4592
        %6467 = vmatprep.subr.bf16.mxu0 %v4595
        %6468 = vmatpush1.bf16.msra.mxu0 %v4594
        %6469 = vmatprep.subr.bf16.mxu0 %v4597
        %6470 = vmatpush1.bf16.msra.mxu0 %v4596
        %6471 = vmatprep.subr.bf16.mxu0 %v4599
        %6472 = vmatpush1.bf16.msra.mxu0 %v4598
        %6473 = vmatprep.mubr.bf16.mxu0 %v1338
        %6474 = vmatmul.mubr.bf16.gmra.mrb[0].mxu0 %v1336
        %v6475 = vpop.f32.mrb[0].mxu0
        %v6476 = vadd.f32 %v6435, %v6475
        %v6477 = vpop.f32.mrb[0].mxu0
        %v6478 = vadd.f32 %v6437, %v6477
        %v6479 = vpop.f32.mrb[0].mxu0
        %v6480 = vpop.f32.mrb[0].mxu0
        %6481 = vdwg.mxu0
        %6482 = vmatprep.subr.bf16.mxu0 %v4601
        %6483 = vmatpush1.bf16.msra.mxu0 %v4600
        %6484 = vmatprep.subr.bf16.mxu0 %v4603
        %6485 = vmatpush1.bf16.msra.mxu0 %v4602
        %6486 = vmatprep.subr.bf16.mxu0 %v4605
        %6487 = vmatpush1.bf16.msra.mxu0 %v4604
        %6488 = vmatprep.subr.bf16.mxu0 %v4607
        %6489 = vmatpush1.bf16.msra.mxu0 %v4606
        %6490 = vmatprep.subr.bf16.mxu0 %v4609
        %6491 = vmatpush1.bf16.msra.mxu0 %v4608
        %6492 = vmatprep.subr.bf16.mxu0 %v4611
        %6493 = vmatpush1.bf16.msra.mxu0 %v4610
        %6494 = vmatprep.subr.bf16.mxu0 %v4613
        %6495 = vmatpush1.bf16.msra.mxu0 %v4612
        %6496 = vmatprep.subr.bf16.mxu0 %v4615
        %6497 = vmatpush1.bf16.msra.mxu0 %v4614
        %6498 = vmatprep.subr.bf16.mxu0 %v4617
        %6499 = vmatpush1.bf16.msra.mxu0 %v4616
        %6500 = vmatprep.subr.bf16.mxu0 %v4619
        %6501 = vmatpush1.bf16.msra.mxu0 %v4618
        %6502 = vmatprep.subr.bf16.mxu0 %v4621
        %6503 = vmatpush1.bf16.msra.mxu0 %v4620
        %6504 = vmatprep.subr.bf16.mxu0 %v4623
        %6505 = vmatpush1.bf16.msra.mxu0 %v4622
        %6506 = vmatprep.subr.bf16.mxu0 %v4625
        %6507 = vmatpush1.bf16.msra.mxu0 %v4624
        %6508 = vmatprep.subr.bf16.mxu0 %v4627
        %6509 = vmatpush1.bf16.msra.mxu0 %v4626
        %6510 = vmatprep.subr.bf16.mxu0 %v4629
        %6511 = vmatpush1.bf16.msra.mxu0 %v4628
        %6512 = vmatprep.subr.bf16.mxu0 %v4631
        %6513 = vmatpush1.bf16.msra.mxu0 %v4630
        %6514 = vmatprep.mubr.bf16.mxu0 %v1335
        %6515 = vmatmul.mubr.bf16.gmra.mrb[0].mxu0 %v1321
        %v6516 = vpop.f32.mrb[0].mxu0
        %v6517 = vadd.f32 %v6476, %v6516
        %v6518 = vpop.f32.mrb[0].mxu0
        %v6519 = vadd.f32 %v6478, %v6518
        %v6520 = vpop.f32.mrb[0].mxu0
        %v6521 = vpop.f32.mrb[0].mxu0
        %6522 = vdwg.mxu0
        %6523 = vmatprep.subr.bf16.mxu0 %v4633
        %6524 = vmatpush1.bf16.msra.mxu0 %v4632
        %6525 = vmatprep.subr.bf16.mxu0 %v4635
        %6526 = vmatpush1.bf16.msra.mxu0 %v4634
        %6527 = vmatprep.subr.bf16.mxu0 %v4637
        %6528 = vmatpush1.bf16.msra.mxu0 %v4636
        %6529 = vmatprep.subr.bf16.mxu0 %v4639
        %6530 = vmatpush1.bf16.msra.mxu0 %v4638
        %6531 = vmatprep.subr.bf16.mxu0 %v4641
        %6532 = vmatpush1.bf16.msra.mxu0 %v4640
        %6533 = vmatprep.subr.bf16.mxu0 %v4643
        %6534 = vmatpush1.bf16.msra.mxu0 %v4642
        %6535 = vmatprep.subr.bf16.mxu0 %v4645
        %6536 = vmatpush1.bf16.msra.mxu0 %v4644
        %6537 = vmatprep.subr.bf16.mxu0 %v4647
        %6538 = vmatpush1.bf16.msra.mxu0 %v4646
        %6539 = vmatprep.subr.bf16.mxu0 %v4649
        %6540 = vmatpush1.bf16.msra.mxu0 %v4648
        %6541 = vmatprep.subr.bf16.mxu0 %v4651
        %6542 = vmatpush1.bf16.msra.mxu0 %v4650
        %6543 = vmatprep.subr.bf16.mxu0 %v4653
        %6544 = vmatpush1.bf16.msra.mxu0 %v4652
        %6545 = vmatprep.subr.bf16.mxu0 %v4655
        %6546 = vmatpush1.bf16.msra.mxu0 %v4654
        %6547 = vmatprep.subr.bf16.mxu0 %v4657
        %6548 = vmatpush1.bf16.msra.mxu0 %v4656
        %6549 = vmatprep.subr.bf16.mxu0 %v4659
        %6550 = vmatpush1.bf16.msra.mxu0 %v4658
        %6551 = vmatprep.subr.bf16.mxu0 %v4661
        %6552 = vmatpush1.bf16.msra.mxu0 %v4660
        %6553 = vmatprep.subr.bf16.mxu0 %v4663
        %6554 = vmatpush1.bf16.msra.mxu0 %v4662
        %6555 = vmatprep.mubr.bf16.mxu0 %v1339
        %6556 = vmatmul.mubr.bf16.gmra.mrb[0].mxu0 %v1337
        %v6557 = vpop.f32.mrb[0].mxu0
        %v6558 = vadd.f32 %v6517, %v6557
        %v6559 = vpop.f32.mrb[0].mxu0
        %v6560 = vadd.f32 %v6519, %v6559
        %v6561 = vpop.f32.mrb[0].mxu0
        %v6562 = vpop.f32.mrb[0].mxu0
        %6563 = vdwg.mxu0
        %6564 = vmatprep.subr.bf16.mxu0 %v4665
        %6565 = vmatpush1.bf16.msra.mxu0 %v4664
        %6566 = vmatprep.subr.bf16.mxu0 %v4667
        %6567 = vmatpush1.bf16.msra.mxu0 %v4666
        %6568 = vmatprep.subr.bf16.mxu0 %v4669
        %6569 = vmatpush1.bf16.msra.mxu0 %v4668
        %6570 = vmatprep.subr.bf16.mxu0 %v4671
        %6571 = vmatpush1.bf16.msra.mxu0 %v4670
        %6572 = vmatprep.subr.bf16.mxu0 %v4673
        %6573 = vmatpush1.bf16.msra.mxu0 %v4672
        %6574 = vmatprep.subr.bf16.mxu0 %v4675
        %6575 = vmatpush1.bf16.msra.mxu0 %v4674
        %6576 = vmatprep.subr.bf16.mxu0 %v4677
        %6577 = vmatpush1.bf16.msra.mxu0 %v4676
        %6578 = vmatprep.subr.bf16.mxu0 %v4679
        %6579 = vmatpush1.bf16.msra.mxu0 %v4678
        %6580 = vmatprep.subr.bf16.mxu0 %v4681
        %6581 = vmatpush1.bf16.msra.mxu0 %v4680
        %6582 = vmatprep.subr.bf16.mxu0 %v4683
        %6583 = vmatpush1.bf16.msra.mxu0 %v4682
        %6584 = vmatprep.subr.bf16.mxu0 %v4685
        %6585 = vmatpush1.bf16.msra.mxu0 %v4684
        %6586 = vmatprep.subr.bf16.mxu0 %v4687
        %6587 = vmatpush1.bf16.msra.mxu0 %v4686
        %6588 = vmatprep.subr.bf16.mxu0 %v4689
        %6589 = vmatpush1.bf16.msra.mxu0 %v4688
        %6590 = vmatprep.subr.bf16.mxu0 %v4691
        %6591 = vmatpush1.bf16.msra.mxu0 %v4690
        %6592 = vmatprep.subr.bf16.mxu0 %v4693
        %6593 = vmatpush1.bf16.msra.mxu0 %v4692
        %6594 = vmatprep.subr.bf16.mxu0 %v4695
        %6595 = vmatpush1.bf16.msra.mxu0 %v4694
        %6596 = vmatprep.mubr.bf16.mxu0 %v1377
        %6597 = vmatmul.mubr.bf16.gmra.mrb[0].mxu0 %v1363
        %v6598 = vpop.f32.mrb[0].mxu0
        %v6599 = vadd.f32 %v6558, %v6598
        %v6600 = vpop.f32.mrb[0].mxu0
        %v6601 = vadd.f32 %v6560, %v6600
        %v6602 = vpop.f32.mrb[0].mxu0
        %v6603 = vpop.f32.mrb[0].mxu0
        %6604 = vdwg.mxu0
        %6605 = vmatprep.subr.bf16.mxu0 %v4697
        %6606 = vmatpush1.bf16.msra.mxu0 %v4696
        %6607 = vmatprep.subr.bf16.mxu0 %v4699
        %6608 = vmatpush1.bf16.msra.mxu0 %v4698
        %6609 = vmatprep.subr.bf16.mxu0 %v4701
        %6610 = vmatpush1.bf16.msra.mxu0 %v4700
        %6611 = vmatprep.subr.bf16.mxu0 %v4703
        %6612 = vmatpush1.bf16.msra.mxu0 %v4702
        %6613 = vmatprep.subr.bf16.mxu0 %v4705
        %6614 = vmatpush1.bf16.msra.mxu0 %v4704
        %6615 = vmatprep.subr.bf16.mxu0 %v4707
        %6616 = vmatpush1.bf16.msra.mxu0 %v4706
        %6617 = vmatprep.subr.bf16.mxu0 %v4709
        %6618 = vmatpush1.bf16.msra.mxu0 %v4708
        %6619 = vmatprep.subr.bf16.mxu0 %v4711
        %6620 = vmatpush1.bf16.msra.mxu0 %v4710
        %6621 = vmatprep.subr.bf16.mxu0 %v4713
        %6622 = vmatpush1.bf16.msra.mxu0 %v4712
        %6623 = vmatprep.subr.bf16.mxu0 %v4715
        %6624 = vmatpush1.bf16.msra.mxu0 %v4714
        %6625 = vmatprep.subr.bf16.mxu0 %v4717
        %6626 = vmatpush1.bf16.msra.mxu0 %v4716
        %6627 = vmatprep.subr.bf16.mxu0 %v4719
        %6628 = vmatpush1.bf16.msra.mxu0 %v4718
        %6629 = vmatprep.subr.bf16.mxu0 %v4721
        %6630 = vmatpush1.bf16.msra.mxu0 %v4720
        %6631 = vmatprep.subr.bf16.mxu0 %v4723
        %6632 = vmatpush1.bf16.msra.mxu0 %v4722
        %6633 = vmatprep.subr.bf16.mxu0 %v4725
        %6634 = vmatpush1.bf16.msra.mxu0 %v4724
        %6635 = vmatprep.subr.bf16.mxu0 %v4727
        %6636 = vmatpush1.bf16.msra.mxu0 %v4726
        %6637 = vmatprep.mubr.bf16.mxu0 %v1387
        %6638 = vmatmul.mubr.bf16.gmra.mrb[0].mxu0 %v1385
        %v6639 = vpop.f32.mrb[0].mxu0
        %v6640 = vadd.f32 %v6599, %v6639
        %v6641 = vpop.f32.mrb[0].mxu0
        %v6642 = vadd.f32 %v6601, %v6641
        %v6643 = vpop.f32.mrb[0].mxu0
        %v6644 = vpop.f32.mrb[0].mxu0
        %6645 = vdwg.mxu0
        %6646 = vmatprep.subr.bf16.mxu0 %v4729
        %6647 = vmatpush1.bf16.msra.mxu0 %v4728
        %6648 = vmatprep.subr.bf16.mxu0 %v4731
        %6649 = vmatpush1.bf16.msra.mxu0 %v4730
        %6650 = vmatprep.subr.bf16.mxu0 %v4733
        %6651 = vmatpush1.bf16.msra.mxu0 %v4732
        %6652 = vmatprep.subr.bf16.mxu0 %v4735
        %6653 = vmatpush1.bf16.msra.mxu0 %v4734
        %6654 = vmatprep.subr.bf16.mxu0 %v4737
        %6655 = vmatpush1.bf16.msra.mxu0 %v4736
        %6656 = vmatprep.subr.bf16.mxu0 %v4739
        %6657 = vmatpush1.bf16.msra.mxu0 %v4738
        %6658 = vmatprep.subr.bf16.mxu0 %v4741
        %6659 = vmatpush1.bf16.msra.mxu0 %v4740
        %6660 = vmatprep.subr.bf16.mxu0 %v4743
        %6661 = vmatpush1.bf16.msra.mxu0 %v4742
        %6662 = vmatprep.subr.bf16.mxu0 %v4745
        %6663 = vmatpush1.bf16.msra.mxu0 %v4744
        %6664 = vmatprep.subr.bf16.mxu0 %v4747
        %6665 = vmatpush1.bf16.msra.mxu0 %v4746
        %6666 = vmatprep.subr.bf16.mxu0 %v4749
        %6667 = vmatpush1.bf16.msra.mxu0 %v4748
        %6668 = vmatprep.subr.bf16.mxu0 %v4751
        %6669 = vmatpush1.bf16.msra.mxu0 %v4750
        %6670 = vmatprep.subr.bf16.mxu0 %v4753
        %6671 = vmatpush1.bf16.msra.mxu0 %v4752
        %6672 = vmatprep.subr.bf16.mxu0 %v4755
        %6673 = vmatpush1.bf16.msra.mxu0 %v4754
        %6674 = vmatprep.subr.bf16.mxu0 %v4757
        %6675 = vmatpush1.bf16.msra.mxu0 %v4756
        %6676 = vmatprep.subr.bf16.mxu0 %v4759
        %6677 = vmatpush1.bf16.msra.mxu0 %v4758
        %6678 = vmatprep.mubr.bf16.mxu0 %v1384
        %6679 = vmatmul.mubr.bf16.gmra.mrb[0].mxu0 %v1370
        %v6680 = vpop.f32.mrb[0].mxu0
        %v6681 = vadd.f32 %v6640, %v6680
        %v6682 = vpop.f32.mrb[0].mxu0
        %v6683 = vadd.f32 %v6642, %v6682
        %v6684 = vpop.f32.mrb[0].mxu0
        %v6685 = vpop.f32.mrb[0].mxu0
        %6686 = vdwg.mxu0
        %6687 = vmatprep.subr.bf16.mxu0 %v4761
        %6688 = vmatpush1.bf16.msra.mxu0 %v4760
        %6689 = vmatprep.subr.bf16.mxu0 %v4763
        %6690 = vmatpush1.bf16.msra.mxu0 %v4762
        %6691 = vmatprep.subr.bf16.mxu0 %v4765
        %6692 = vmatpush1.bf16.msra.mxu0 %v4764
        %6693 = vmatprep.subr.bf16.mxu0 %v4767
        %6694 = vmatpush1.bf16.msra.mxu0 %v4766
        %6695 = vmatprep.subr.bf16.mxu0 %v4769
        %6696 = vmatpush1.bf16.msra.mxu0 %v4768
        %6697 = vmatprep.subr.bf16.mxu0 %v4771
        %6698 = vmatpush1.bf16.msra.mxu0 %v4770
        %6699 = vmatprep.subr.bf16.mxu0 %v4773
        %6700 = vmatpush1.bf16.msra.mxu0 %v4772
        %6701 = vmatprep.subr.bf16.mxu0 %v4775
        %6702 = vmatpush1.bf16.msra.mxu0 %v4774
        %6703 = vmatprep.subr.bf16.mxu0 %v4777
        %6704 = vmatpush1.bf16.msra.mxu0 %v4776
        %6705 = vmatprep.subr.bf16.mxu0 %v4779
        %6706 = vmatpush1.bf16.msra.mxu0 %v4778
        %6707 = vmatprep.subr.bf16.mxu0 %v4781
        %6708 = vmatpush1.bf16.msra.mxu0 %v4780
        %6709 = vmatprep.subr.bf16.mxu0 %v4783
        %6710 = vmatpush1.bf16.msra.mxu0 %v4782
        %6711 = vmatprep.subr.bf16.mxu0 %v4785
        %6712 = vmatpush1.bf16.msra.mxu0 %v4784
        %6713 = vmatprep.subr.bf16.mxu0 %v4787
        %6714 = vmatpush1.bf16.msra.mxu0 %v4786
        %6715 = vmatprep.subr.bf16.mxu0 %v4789
        %6716 = vmatpush1.bf16.msra.mxu0 %v4788
        %6717 = vmatprep.subr.bf16.mxu0 %v4791
        %6718 = vmatpush1.bf16.msra.mxu0 %v4790
        %6719 = vmatprep.mubr.bf16.mxu0 %v1388
        %6720 = vmatmul.mubr.bf16.gmra.mrb[0].mxu0 %v1386
        %v6721 = vpop.f32.mrb[0].mxu0
        %v6722 = vadd.f32 %v6681, %v6721
        %v6723 = vpop.f32.mrb[0].mxu0
        %v6724 = vadd.f32 %v6683, %v6723
        %v6725 = vpop.f32.mrb[0].mxu0
        %v6726 = vpop.f32.mrb[0].mxu0
        %6727 = vdwg.mxu0
        %6728 = vmatprep.subr.bf16.mxu0 %v4793
        %6729 = vmatpush1.bf16.msra.mxu0 %v4792
        %6730 = vmatprep.subr.bf16.mxu0 %v4795
        %6731 = vmatpush1.bf16.msra.mxu0 %v4794
        %6732 = vmatprep.subr.bf16.mxu0 %v4797
        %6733 = vmatpush1.bf16.msra.mxu0 %v4796
        %6734 = vmatprep.subr.bf16.mxu0 %v4799
        %6735 = vmatpush1.bf16.msra.mxu0 %v4798
        %6736 = vmatprep.subr.bf16.mxu0 %v4801
        %6737 = vmatpush1.bf16.msra.mxu0 %v4800
        %6738 = vmatprep.subr.bf16.mxu0 %v4803
        %6739 = vmatpush1.bf16.msra.mxu0 %v4802
        %6740 = vmatprep.subr.bf16.mxu0 %v4805
        %6741 = vmatpush1.bf16.msra.mxu0 %v4804
        %6742 = vmatprep.subr.bf16.mxu0 %v4807
        %6743 = vmatpush1.bf16.msra.mxu0 %v4806
        %6744 = vmatprep.subr.bf16.mxu0 %v4809
        %6745 = vmatpush1.bf16.msra.mxu0 %v4808
        %6746 = vmatprep.subr.bf16.mxu0 %v4811
        %6747 = vmatpush1.bf16.msra.mxu0 %v4810
        %6748 = vmatprep.subr.bf16.mxu0 %v4813
        %6749 = vmatpush1.bf16.msra.mxu0 %v4812
        %6750 = vmatprep.subr.bf16.mxu0 %v4815
        %6751 = vmatpush1.bf16.msra.mxu0 %v4814
        %6752 = vmatprep.subr.bf16.mxu0 %v4817
        %6753 = vmatpush1.bf16.msra.mxu0 %v4816
        %6754 = vmatprep.subr.bf16.mxu0 %v4819
        %6755 = vmatpush1.bf16.msra.mxu0 %v4818
        %6756 = vmatprep.subr.bf16.mxu0 %v4821
        %6757 = vmatpush1.bf16.msra.mxu0 %v4820
        %6758 = vmatprep.subr.bf16.mxu0 %v4823
        %6759 = vmatpush1.bf16.msra.mxu0 %v4822
        %6760 = vmatprep.mubr.bf16.mxu0 %v1426
        %6761 = vmatmul.mubr.bf16.gmra.mrb[0].mxu0 %v1412
        %v6762 = vpop.f32.mrb[0].mxu0
        %v6763 = vadd.f32 %v6722, %v6762
        %v6764 = vpop.f32.mrb[0].mxu0
        %v6765 = vadd.f32 %v6724, %v6764
        %v6766 = vpop.f32.mrb[0].mxu0
        %v6767 = vpop.f32.mrb[0].mxu0
        %6768 = vdwg.mxu0
        %6769 = vmatprep.subr.bf16.mxu0 %v4825
        %6770 = vmatpush1.bf16.msra.mxu0 %v4824
        %6771 = vmatprep.subr.bf16.mxu0 %v4827
        %6772 = vmatpush1.bf16.msra.mxu0 %v4826
        %6773 = vmatprep.subr.bf16.mxu0 %v4829
        %6774 = vmatpush1.bf16.msra.mxu0 %v4828
        %6775 = vmatprep.subr.bf16.mxu0 %v4831
        %6776 = vmatpush1.bf16.msra.mxu0 %v4830
        %6777 = vmatprep.subr.bf16.mxu0 %v4833
        %6778 = vmatpush1.bf16.msra.mxu0 %v4832
        %6779 = vmatprep.subr.bf16.mxu0 %v4835
        %6780 = vmatpush1.bf16.msra.mxu0 %v4834
        %6781 = vmatprep.subr.bf16.mxu0 %v4837
        %6782 = vmatpush1.bf16.msra.mxu0 %v4836
        %6783 = vmatprep.subr.bf16.mxu0 %v4839
        %6784 = vmatpush1.bf16.msra.mxu0 %v4838
        %6785 = vmatprep.subr.bf16.mxu0 %v4841
        %6786 = vmatpush1.bf16.msra.mxu0 %v4840
        %6787 = vmatprep.subr.bf16.mxu0 %v4843
        %6788 = vmatpush1.bf16.msra.mxu0 %v4842
        %6789 = vmatprep.subr.bf16.mxu0 %v4845
        %6790 = vmatpush1.bf16.msra.mxu0 %v4844
        %6791 = vmatprep.subr.bf16.mxu0 %v4847
        %6792 = vmatpush1.bf16.msra.mxu0 %v4846
        %6793 = vmatprep.subr.bf16.mxu0 %v4849
        %6794 = vmatpush1.bf16.msra.mxu0 %v4848
        %6795 = vmatprep.subr.bf16.mxu0 %v4851
        %6796 = vmatpush1.bf16.msra.mxu0 %v4850
        %6797 = vmatprep.subr.bf16.mxu0 %v4853
        %6798 = vmatpush1.bf16.msra.mxu0 %v4852
        %6799 = vmatprep.subr.bf16.mxu0 %v4855
        %6800 = vmatpush1.bf16.msra.mxu0 %v4854
        %6801 = vmatprep.mubr.bf16.mxu0 %v1436
        %6802 = vmatmul.mubr.bf16.gmra.mrb[0].mxu0 %v1434
        %v6803 = vpop.f32.mrb[0].mxu0
        %v6804 = vadd.f32 %v6763, %v6803
        %v6805 = vpop.f32.mrb[0].mxu0
        %v6806 = vadd.f32 %v6765, %v6805
        %v6807 = vpop.f32.mrb[0].mxu0
        %v6808 = vpop.f32.mrb[0].mxu0
        %6809 = vdwg.mxu0
        %6810 = vmatprep.subr.bf16.mxu0 %v4857
        %6811 = vmatpush1.bf16.msra.mxu0 %v4856
        %6812 = vmatprep.subr.bf16.mxu0 %v4859
        %6813 = vmatpush1.bf16.msra.mxu0 %v4858
        %6814 = vmatprep.subr.bf16.mxu0 %v4861
        %6815 = vmatpush1.bf16.msra.mxu0 %v4860
        %6816 = vmatprep.subr.bf16.mxu0 %v4863
        %6817 = vmatpush1.bf16.msra.mxu0 %v4862
        %6818 = vmatprep.subr.bf16.mxu0 %v4865
        %6819 = vmatpush1.bf16.msra.mxu0 %v4864
        %6820 = vmatprep.subr.bf16.mxu0 %v4867
        %6821 = vmatpush1.bf16.msra.mxu0 %v4866
        %6822 = vmatprep.subr.bf16.mxu0 %v4869
        %6823 = vmatpush1.bf16.msra.mxu0 %v4868
        %6824 = vmatprep.subr.bf16.mxu0 %v4871
        %6825 = vmatpush1.bf16.msra.mxu0 %v4870
        %6826 = vmatprep.subr.bf16.mxu0 %v4873
        %6827 = vmatpush1.bf16.msra.mxu0 %v4872
        %6828 = vmatprep.subr.bf16.mxu0 %v4875
        %6829 = vmatpush1.bf16.msra.mxu0 %v4874
        %6830 = vmatprep.subr.bf16.mxu0 %v4877
        %6831 = vmatpush1.bf16.msra.mxu0 %v4876
        %6832 = vmatprep.subr.bf16.mxu0 %v4879
        %6833 = vmatpush1.bf16.msra.mxu0 %v4878
        %6834 = vmatprep.subr.bf16.mxu0 %v4881
        %6835 = vmatpush1.bf16.msra.mxu0 %v4880
        %6836 = vmatprep.subr.bf16.mxu0 %v4883
        %6837 = vmatpush1.bf16.msra.mxu0 %v4882
        %6838 = vmatprep.subr.bf16.mxu0 %v4885
        %6839 = vmatpush1.bf16.msra.mxu0 %v4884
        %6840 = vmatprep.subr.bf16.mxu0 %v4887
        %6841 = vmatpush1.bf16.msra.mxu0 %v4886
        %6842 = vmatprep.mubr.bf16.mxu0 %v1433
        %6843 = vmatmul.mubr.bf16.gmra.mrb[0].mxu0 %v1419
        %v6844 = vpop.f32.mrb[0].mxu0
        %v6845 = vadd.f32 %v6804, %v6844
        %v6846 = vpop.f32.mrb[0].mxu0
        %v6847 = vadd.f32 %v6806, %v6846
        %v6848 = vpop.f32.mrb[0].mxu0
        %v6849 = vpop.f32.mrb[0].mxu0
        %6850 = vdwg.mxu0
        %6851 = vmatprep.subr.bf16.mxu0 %v4889
        %6852 = vmatpush1.bf16.msra.mxu0 %v4888
        %6853 = vmatprep.subr.bf16.mxu0 %v4891
        %6854 = vmatpush1.bf16.msra.mxu0 %v4890
        %6855 = vmatprep.subr.bf16.mxu0 %v4893
        %6856 = vmatpush1.bf16.msra.mxu0 %v4892
        %6857 = vmatprep.subr.bf16.mxu0 %v4895
        %6858 = vmatpush1.bf16.msra.mxu0 %v4894
        %6859 = vmatprep.subr.bf16.mxu0 %v4897
        %6860 = vmatpush1.bf16.msra.mxu0 %v4896
        %6861 = vmatprep.subr.bf16.mxu0 %v4899
        %6862 = vmatpush1.bf16.msra.mxu0 %v4898
        %6863 = vmatprep.subr.bf16.mxu0 %v4901
        %6864 = vmatpush1.bf16.msra.mxu0 %v4900
        %6865 = vmatprep.subr.bf16.mxu0 %v4903
        %6866 = vmatpush1.bf16.msra.mxu0 %v4902
        %6867 = vmatprep.subr.bf16.mxu0 %v4905
        %6868 = vmatpush1.bf16.msra.mxu0 %v4904
        %6869 = vmatprep.subr.bf16.mxu0 %v4907
        %6870 = vmatpush1.bf16.msra.mxu0 %v4906
        %6871 = vmatprep.subr.bf16.mxu0 %v4909
        %6872 = vmatpush1.bf16.msra.mxu0 %v4908
        %6873 = vmatprep.subr.bf16.mxu0 %v4911
        %6874 = vmatpush1.bf16.msra.mxu0 %v4910
        %6875 = vmatprep.subr.bf16.mxu0 %v4913
        %6876 = vmatpush1.bf16.msra.mxu0 %v4912
        %6877 = vmatprep.subr.bf16.mxu0 %v4915
        %6878 = vmatpush1.bf16.msra.mxu0 %v4914
        %6879 = vmatprep.subr.bf16.mxu0 %v4917
        %6880 = vmatpush1.bf16.msra.mxu0 %v4916
        %6881 = vmatprep.subr.bf16.mxu0 %v4919
        %6882 = vmatpush1.bf16.msra.mxu0 %v4918
        %6883 = vmatprep.mubr.bf16.mxu0 %v1437
        %6884 = vmatmul.mubr.bf16.gmra.mrb[0].mxu0 %v1435
        %v6885 = vpop.f32.mrb[0].mxu0
        %v6886 = vadd.f32 %v6845, %v6885
        %v6887 = vpop.f32.mrb[0].mxu0
        %v6888 = vadd.f32 %v6847, %v6887
        %v6889 = vpop.f32.mrb[0].mxu0
        %v6890 = vpop.f32.mrb[0].mxu0
        %6891 = vdwg.mxu0
        %6892 = vmatprep.subr.bf16.mxu0 %v4921
        %6893 = vmatpush1.bf16.msra.mxu0 %v4920
        %6894 = vmatprep.subr.bf16.mxu0 %v4923
        %6895 = vmatpush1.bf16.msra.mxu0 %v4922
        %6896 = vmatprep.subr.bf16.mxu0 %v4925
        %6897 = vmatpush1.bf16.msra.mxu0 %v4924
        %6898 = vmatprep.subr.bf16.mxu0 %v4927
        %6899 = vmatpush1.bf16.msra.mxu0 %v4926
        %6900 = vmatprep.subr.bf16.mxu0 %v4929
        %6901 = vmatpush1.bf16.msra.mxu0 %v4928
        %6902 = vmatprep.subr.bf16.mxu0 %v4931
        %6903 = vmatpush1.bf16.msra.mxu0 %v4930
        %6904 = vmatprep.subr.bf16.mxu0 %v4933
        %6905 = vmatpush1.bf16.msra.mxu0 %v4932
        %6906 = vmatprep.subr.bf16.mxu0 %v4935
        %6907 = vmatpush1.bf16.msra.mxu0 %v4934
        %6908 = vmatprep.subr.bf16.mxu0 %v4937
        %6909 = vmatpush1.bf16.msra.mxu0 %v4936
        %6910 = vmatprep.subr.bf16.mxu0 %v4939
        %6911 = vmatpush1.bf16.msra.mxu0 %v4938
        %6912 = vmatprep.subr.bf16.mxu0 %v4941
        %6913 = vmatpush1.bf16.msra.mxu0 %v4940
        %6914 = vmatprep.subr.bf16.mxu0 %v4943
        %6915 = vmatpush1.bf16.msra.mxu0 %v4942
        %6916 = vmatprep.subr.bf16.mxu0 %v4945
        %6917 = vmatpush1.bf16.msra.mxu0 %v4944
        %6918 = vmatprep.subr.bf16.mxu0 %v4947
        %6919 = vmatpush1.bf16.msra.mxu0 %v4946
        %6920 = vmatprep.subr.bf16.mxu0 %v4949
        %6921 = vmatpush1.bf16.msra.mxu0 %v4948
        %6922 = vmatprep.subr.bf16.mxu0 %v4951
        %6923 = vmatpush1.bf16.msra.mxu0 %v4950
        %6924 = vmatprep.mubr.bf16.mxu0 %v1475
        %6925 = vmatmul.mubr.bf16.gmra.mrb[0].mxu0 %v1461
        %v6926 = vpop.f32.mrb[0].mxu0
        %v6927 = vadd.f32 %v6886, %v6926
        %v6928 = vpop.f32.mrb[0].mxu0
        %v6929 = vadd.f32 %v6888, %v6928
        %v6930 = vpop.f32.mrb[0].mxu0
        %v6931 = vpop.f32.mrb[0].mxu0
        %6932 = vdwg.mxu0
        %6933 = vmatprep.subr.bf16.mxu0 %v4953
        %6934 = vmatpush1.bf16.msra.mxu0 %v4952
        %6935 = vmatprep.subr.bf16.mxu0 %v4955
        %6936 = vmatpush1.bf16.msra.mxu0 %v4954
        %6937 = vmatprep.subr.bf16.mxu0 %v4957
        %6938 = vmatpush1.bf16.msra.mxu0 %v4956
        %6939 = vmatprep.subr.bf16.mxu0 %v4959
        %6940 = vmatpush1.bf16.msra.mxu0 %v4958
        %6941 = vmatprep.subr.bf16.mxu0 %v4961
        %6942 = vmatpush1.bf16.msra.mxu0 %v4960
        %6943 = vmatprep.subr.bf16.mxu0 %v4963
        %6944 = vmatpush1.bf16.msra.mxu0 %v4962
        %6945 = vmatprep.subr.bf16.mxu0 %v4965
        %6946 = vmatpush1.bf16.msra.mxu0 %v4964
        %6947 = vmatprep.subr.bf16.mxu0 %v4967
        %6948 = vmatpush1.bf16.msra.mxu0 %v4966
        %6949 = vmatprep.subr.bf16.mxu0 %v4969
        %6950 = vmatpush1.bf16.msra.mxu0 %v4968
        %6951 = vmatprep.subr.bf16.mxu0 %v4971
        %6952 = vmatpush1.bf16.msra.mxu0 %v4970
        %6953 = vmatprep.subr.bf16.mxu0 %v4973
        %6954 = vmatpush1.bf16.msra.mxu0 %v4972
        %6955 = vmatprep.subr.bf16.mxu0 %v4975
        %6956 = vmatpush1.bf16.msra.mxu0 %v4974
        %6957 = vmatprep.subr.bf16.mxu0 %v4977
        %6958 = vmatpush1.bf16.msra.mxu0 %v4976
        %6959 = vmatprep.subr.bf16.mxu0 %v4979
        %6960 = vmatpush1.bf16.msra.mxu0 %v4978
        %6961 = vmatprep.subr.bf16.mxu0 %v4981
        %6962 = vmatpush1.bf16.msra.mxu0 %v4980
        %6963 = vmatprep.subr.bf16.mxu0 %v4983
        %6964 = vmatpush1.bf16.msra.mxu0 %v4982
        %6965 = vmatprep.mubr.bf16.mxu0 %v1485
        %6966 = vmatmul.mubr.bf16.gmra.mrb[0].mxu0 %v1483
        %v6967 = vpop.f32.mrb[0].mxu0
        %v6968 = vadd.f32 %v6927, %v6967
        %v6969 = vpop.f32.mrb[0].mxu0
        %v6970 = vadd.f32 %v6929, %v6969
        %v6971 = vpop.f32.mrb[0].mxu0
        %v6972 = vpop.f32.mrb[0].mxu0
        %6973 = vdwg.mxu0
        %6974 = vmatprep.subr.bf16.mxu0 %v4985
        %6975 = vmatpush1.bf16.msra.mxu0 %v4984
        %6976 = vmatprep.subr.bf16.mxu0 %v4987
        %6977 = vmatpush1.bf16.msra.mxu0 %v4986
        %6978 = vmatprep.subr.bf16.mxu0 %v4989
        %6979 = vmatpush1.bf16.msra.mxu0 %v4988
        %6980 = vmatprep.subr.bf16.mxu0 %v4991
        %6981 = vmatpush1.bf16.msra.mxu0 %v4990
        %6982 = vmatprep.subr.bf16.mxu0 %v4993
        %6983 = vmatpush1.bf16.msra.mxu0 %v4992
        %6984 = vmatprep.subr.bf16.mxu0 %v4995
        %6985 = vmatpush1.bf16.msra.mxu0 %v4994
        %6986 = vmatprep.subr.bf16.mxu0 %v4997
        %6987 = vmatpush1.bf16.msra.mxu0 %v4996
        %6988 = vmatprep.subr.bf16.mxu0 %v4999
        %6989 = vmatpush1.bf16.msra.mxu0 %v4998
        %6990 = vmatprep.subr.bf16.mxu0 %v5001
        %6991 = vmatpush1.bf16.msra.mxu0 %v5000
        %6992 = vmatprep.subr.bf16.mxu0 %v5003
        %6993 = vmatpush1.bf16.msra.mxu0 %v5002
        %6994 = vmatprep.subr.bf16.mxu0 %v5005
        %6995 = vmatpush1.bf16.msra.mxu0 %v5004
        %6996 = vmatprep.subr.bf16.mxu0 %v5007
        %6997 = vmatpush1.bf16.msra.mxu0 %v5006
        %6998 = vmatprep.subr.bf16.mxu0 %v5009
        %6999 = vmatpush1.bf16.msra.mxu0 %v5008
        %7000 = vmatprep.subr.bf16.mxu0 %v5011
        %7001 = vmatpush1.bf16.msra.mxu0 %v5010
        %7002 = vmatprep.subr.bf16.mxu0 %v5013
        %7003 = vmatpush1.bf16.msra.mxu0 %v5012
        %7004 = vmatprep.subr.bf16.mxu0 %v5015
        %7005 = vmatpush1.bf16.msra.mxu0 %v5014
        %7006 = vmatprep.mubr.bf16.mxu0 %v1482
        %7007 = vmatmul.mubr.bf16.gmra.mrb[0].mxu0 %v1468
        %v7008 = vpop.f32.mrb[0].mxu0
        %v7009 = vadd.f32 %v6968, %v7008
        %v7010 = vpop.f32.mrb[0].mxu0
        %v7011 = vadd.f32 %v6970, %v7010
        %v7012 = vpop.f32.mrb[0].mxu0
        %v7013 = vpop.f32.mrb[0].mxu0
        %7014 = vdwg.mxu0
        %7015 = vmatprep.subr.bf16.mxu0 %v5017
        %7016 = vmatpush1.bf16.msra.mxu0 %v5016
        %7017 = vmatprep.subr.bf16.mxu0 %v5019
        %7018 = vmatpush1.bf16.msra.mxu0 %v5018
        %7019 = vmatprep.subr.bf16.mxu0 %v5021
        %7020 = vmatpush1.bf16.msra.mxu0 %v5020
        %7021 = vmatprep.subr.bf16.mxu0 %v5023
        %7022 = vmatpush1.bf16.msra.mxu0 %v5022
        %7023 = vmatprep.subr.bf16.mxu0 %v5025
        %7024 = vmatpush1.bf16.msra.mxu0 %v5024
        %7025 = vmatprep.subr.bf16.mxu0 %v5027
        %7026 = vmatpush1.bf16.msra.mxu0 %v5026
        %7027 = vmatprep.subr.bf16.mxu0 %v5029
        %7028 = vmatpush1.bf16.msra.mxu0 %v5028
        %7029 = vmatprep.subr.bf16.mxu0 %v5031
        %7030 = vmatpush1.bf16.msra.mxu0 %v5030
        %7031 = vmatprep.subr.bf16.mxu0 %v5033
        %7032 = vmatpush1.bf16.msra.mxu0 %v5032
        %7033 = vmatprep.subr.bf16.mxu0 %v5035
        %7034 = vmatpush1.bf16.msra.mxu0 %v5034
        %7035 = vmatprep.subr.bf16.mxu0 %v5037
        %7036 = vmatpush1.bf16.msra.mxu0 %v5036
        %7037 = vmatprep.subr.bf16.mxu0 %v5039
        %7038 = vmatpush1.bf16.msra.mxu0 %v5038
        %7039 = vmatprep.subr.bf16.mxu0 %v5041
        %7040 = vmatpush1.bf16.msra.mxu0 %v5040
        %7041 = vmatprep.subr.bf16.mxu0 %v5043
        %7042 = vmatpush1.bf16.msra.mxu0 %v5042
        %7043 = vmatprep.subr.bf16.mxu0 %v5045
        %7044 = vmatpush1.bf16.msra.mxu0 %v5044
        %7045 = vmatprep.subr.bf16.mxu0 %v5047
        %7046 = vmatpush1.bf16.msra.mxu0 %v5046
        %7047 = vmatprep.mubr.bf16.mxu0 %v1486
        %7048 = vmatmul.mubr.bf16.gmra.mrb[0].mxu0 %v1484
        %v7049 = vpop.f32.mrb[0].mxu0
        %v7050 = vadd.f32 %v7009, %v7049
        %v7051 = vpop.f32.mrb[0].mxu0
        %v7052 = vadd.f32 %v7011, %v7051
        %v7053 = vpop.f32.mrb[0].mxu0
        %v7054 = vpop.f32.mrb[0].mxu0
        %7055 = vdwg.mxu0
        %7056 = vmatprep.subr.bf16.mxu0 %v5049
        %7057 = vmatpush1.bf16.msra.mxu0 %v5048
        %7058 = vmatprep.subr.bf16.mxu0 %v5051
        %7059 = vmatpush1.bf16.msra.mxu0 %v5050
        %7060 = vmatprep.subr.bf16.mxu0 %v5053
        %7061 = vmatpush1.bf16.msra.mxu0 %v5052
        %7062 = vmatprep.subr.bf16.mxu0 %v5055
        %7063 = vmatpush1.bf16.msra.mxu0 %v5054
        %7064 = vmatprep.subr.bf16.mxu0 %v5057
        %7065 = vmatpush1.bf16.msra.mxu0 %v5056
        %7066 = vmatprep.subr.bf16.mxu0 %v5059
        %7067 = vmatpush1.bf16.msra.mxu0 %v5058
        %7068 = vmatprep.subr.bf16.mxu0 %v5061
        %7069 = vmatpush1.bf16.msra.mxu0 %v5060
        %7070 = vmatprep.subr.bf16.mxu0 %v5063
        %7071 = vmatpush1.bf16.msra.mxu0 %v5062
        %7072 = vmatprep.subr.bf16.mxu0 %v5065
        %7073 = vmatpush1.bf16.msra.mxu0 %v5064
        %7074 = vmatprep.subr.bf16.mxu0 %v5067
        %7075 = vmatpush1.bf16.msra.mxu0 %v5066
        %7076 = vmatprep.subr.bf16.mxu0 %v5069
        %7077 = vmatpush1.bf16.msra.mxu0 %v5068
        %7078 = vmatprep.subr.bf16.mxu0 %v5071
        %7079 = vmatpush1.bf16.msra.mxu0 %v5070
        %7080 = vmatprep.subr.bf16.mxu0 %v5073
        %7081 = vmatpush1.bf16.msra.mxu0 %v5072
        %7082 = vmatprep.subr.bf16.mxu0 %v5075
        %7083 = vmatpush1.bf16.msra.mxu0 %v5074
        %7084 = vmatprep.subr.bf16.mxu0 %v5077
        %7085 = vmatpush1.bf16.msra.mxu0 %v5076
        %7086 = vmatprep.subr.bf16.mxu0 %v5079
        %7087 = vmatpush1.bf16.msra.mxu0 %v5078
        %7088 = vmatprep.mubr.bf16.mxu0 %v1524
        %7089 = vmatmul.mubr.bf16.gmra.mrb[0].mxu0 %v1510
        %v7090 = vpop.f32.mrb[0].mxu0
        %v7091 = vadd.f32 %v7050, %v7090
        %v7092 = vpop.f32.mrb[0].mxu0
        %v7093 = vadd.f32 %v7052, %v7092
        %v7094 = vpop.f32.mrb[0].mxu0
        %v7095 = vpop.f32.mrb[0].mxu0
        %7096 = vdwg.mxu0
        %7097 = vmatprep.subr.bf16.mxu0 %v5081
        %7098 = vmatpush1.bf16.msra.mxu0 %v5080
        %7099 = vmatprep.subr.bf16.mxu0 %v5083
        %7100 = vmatpush1.bf16.msra.mxu0 %v5082
        %7101 = vmatprep.subr.bf16.mxu0 %v5085
        %7102 = vmatpush1.bf16.msra.mxu0 %v5084
        %7103 = vmatprep.subr.bf16.mxu0 %v5087
        %7104 = vmatpush1.bf16.msra.mxu0 %v5086
        %7105 = vmatprep.subr.bf16.mxu0 %v5089
        %7106 = vmatpush1.bf16.msra.mxu0 %v5088
        %7107 = vmatprep.subr.bf16.mxu0 %v5091
        %7108 = vmatpush1.bf16.msra.mxu0 %v5090
        %7109 = vmatprep.subr.bf16.mxu0 %v5093
        %7110 = vmatpush1.bf16.msra.mxu0 %v5092
        %7111 = vmatprep.subr.bf16.mxu0 %v5095
        %7112 = vmatpush1.bf16.msra.mxu0 %v5094
        %7113 = vmatprep.subr.bf16.mxu0 %v5097
        %7114 = vmatpush1.bf16.msra.mxu0 %v5096
        %7115 = vmatprep.subr.bf16.mxu0 %v5099
        %7116 = vmatpush1.bf16.msra.mxu0 %v5098
        %7117 = vmatprep.subr.bf16.mxu0 %v5101
        %7118 = vmatpush1.bf16.msra.mxu0 %v5100
        %7119 = vmatprep.subr.bf16.mxu0 %v5103
        %7120 = vmatpush1.bf16.msra.mxu0 %v5102
        %7121 = vmatprep.subr.bf16.mxu0 %v5105
        %7122 = vmatpush1.bf16.msra.mxu0 %v5104
        %7123 = vmatprep.subr.bf16.mxu0 %v5107
        %7124 = vmatpush1.bf16.msra.mxu0 %v5106
        %7125 = vmatprep.subr.bf16.mxu0 %v5109
        %7126 = vmatpush1.bf16.msra.mxu0 %v5108
        %7127 = vmatprep.subr.bf16.mxu0 %v5111
        %7128 = vmatpush1.bf16.msra.mxu0 %v5110
        %7129 = vmatprep.mubr.bf16.mxu0 %v1534
        %7130 = vmatmul.mubr.bf16.gmra.mrb[0].mxu0 %v1532
        %v7131 = vpop.f32.mrb[0].mxu0
        %v7132 = vadd.f32 %v7091, %v7131
        %v7133 = vpop.f32.mrb[0].mxu0
        %v7134 = vadd.f32 %v7093, %v7133
        %v7135 = vpop.f32.mrb[0].mxu0
        %v7136 = vpop.f32.mrb[0].mxu0
        %7137 = vdwg.mxu0
        %7138 = vmatprep.subr.bf16.mxu0 %v5113
        %7139 = vmatpush1.bf16.msra.mxu0 %v5112
        %7140 = vmatprep.subr.bf16.mxu0 %v5115
        %7141 = vmatpush1.bf16.msra.mxu0 %v5114
        %7142 = vmatprep.subr.bf16.mxu0 %v5117
        %7143 = vmatpush1.bf16.msra.mxu0 %v5116
        %7144 = vmatprep.subr.bf16.mxu0 %v5119
        %7145 = vmatpush1.bf16.msra.mxu0 %v5118
        %7146 = vmatprep.subr.bf16.mxu0 %v5121
        %7147 = vmatpush1.bf16.msra.mxu0 %v5120
        %7148 = vmatprep.subr.bf16.mxu0 %v5123
        %7149 = vmatpush1.bf16.msra.mxu0 %v5122
        %7150 = vmatprep.subr.bf16.mxu0 %v5125
        %7151 = vmatpush1.bf16.msra.mxu0 %v5124
        %7152 = vmatprep.subr.bf16.mxu0 %v5127
        %7153 = vmatpush1.bf16.msra.mxu0 %v5126
        %7154 = vmatprep.subr.bf16.mxu0 %v5129
        %7155 = vmatpush1.bf16.msra.mxu0 %v5128
        %7156 = vmatprep.subr.bf16.mxu0 %v5131
        %7157 = vmatpush1.bf16.msra.mxu0 %v5130
        %7158 = vmatprep.subr.bf16.mxu0 %v5133
        %7159 = vmatpush1.bf16.msra.mxu0 %v5132
        %7160 = vmatprep.subr.bf16.mxu0 %v5135
        %7161 = vmatpush1.bf16.msra.mxu0 %v5134
        %7162 = vmatprep.subr.bf16.mxu0 %v5137
        %7163 = vmatpush1.bf16.msra.mxu0 %v5136
        %7164 = vmatprep.subr.bf16.mxu0 %v5139
        %7165 = vmatpush1.bf16.msra.mxu0 %v5138
        %7166 = vmatprep.subr.bf16.mxu0 %v5141
        %7167 = vmatpush1.bf16.msra.mxu0 %v5140
        %7168 = vmatprep.subr.bf16.mxu0 %v5143
        %7169 = vmatpush1.bf16.msra.mxu0 %v5142
        %7170 = vmatprep.mubr.bf16.mxu0 %v1531
        %7171 = vmatmul.mubr.bf16.gmra.mrb[0].mxu0 %v1517
        %v7172 = vpop.f32.mrb[0].mxu0
        %v7173 = vadd.f32 %v7132, %v7172
        %v7174 = vpop.f32.mrb[0].mxu0
        %v7175 = vadd.f32 %v7134, %v7174
        %v7176 = vpop.f32.mrb[0].mxu0
        %v7177 = vpop.f32.mrb[0].mxu0
        %7178 = vdwg.mxu0
        %7179 = vmatprep.subr.bf16.mxu0 %v5145
        %7180 = vmatpush1.bf16.msra.mxu0 %v5144
        %7181 = vmatprep.subr.bf16.mxu0 %v5147
        %7182 = vmatpush1.bf16.msra.mxu0 %v5146
        %7183 = vmatprep.subr.bf16.mxu0 %v5149
        %7184 = vmatpush1.bf16.msra.mxu0 %v5148
        %7185 = vmatprep.subr.bf16.mxu0 %v5151
        %7186 = vmatpush1.bf16.msra.mxu0 %v5150
        %7187 = vmatprep.subr.bf16.mxu0 %v5153
        %7188 = vmatpush1.bf16.msra.mxu0 %v5152
        %7189 = vmatprep.subr.bf16.mxu0 %v5155
        %7190 = vmatpush1.bf16.msra.mxu0 %v5154
        %7191 = vmatprep.subr.bf16.mxu0 %v5157
        %7192 = vmatpush1.bf16.msra.mxu0 %v5156
        %7193 = vmatprep.subr.bf16.mxu0 %v5159
        %7194 = vmatpush1.bf16.msra.mxu0 %v5158
        %7195 = vmatprep.subr.bf16.mxu0 %v5161
        %7196 = vmatpush1.bf16.msra.mxu0 %v5160
        %7197 = vmatprep.subr.bf16.mxu0 %v5163
        %7198 = vmatpush1.bf16.msra.mxu0 %v5162
        %7199 = vmatprep.subr.bf16.mxu0 %v5165
        %7200 = vmatpush1.bf16.msra.mxu0 %v5164
        %7201 = vmatprep.subr.bf16.mxu0 %v5167
        %7202 = vmatpush1.bf16.msra.mxu0 %v5166
        %7203 = vmatprep.subr.bf16.mxu0 %v5169
        %7204 = vmatpush1.bf16.msra.mxu0 %v5168
        %7205 = vmatprep.subr.bf16.mxu0 %v5171
        %7206 = vmatpush1.bf16.msra.mxu0 %v5170
        %7207 = vmatprep.subr.bf16.mxu0 %v5173
        %7208 = vmatpush1.bf16.msra.mxu0 %v5172
        %7209 = vmatprep.subr.bf16.mxu0 %v5175
        %7210 = vmatpush1.bf16.msra.mxu0 %v5174
        %7211 = vmatprep.mubr.bf16.mxu0 %v1535
        %7212 = vmatmul.mubr.bf16.gmra.mrb[0].mxu0 %v1533
        %v7213 = vpop.f32.mrb[0].mxu0
        %v7214 = vadd.f32 %v7173, %v7213
        %v7215 = vpop.f32.mrb[0].mxu0
        %v7216 = vadd.f32 %v7175, %v7215
        %v7217 = vpop.f32.mrb[0].mxu0
        %v7218 = vpop.f32.mrb[0].mxu0
        %7219 = vdwg.mxu0
        %v7222 = vcombine.low %v7214, %v7216
        %v7224 = vunpack.c.l.s4 1983009808
        %v7225 = vunpack.c.0.s8 %v7224
        %v7226 = vlaneseq
        %v7227 = vshrl.u32 %v7226, 7
        %v7228 = vsub.s32 %v7225, %v7227
        %v7229 = vrot.slane %v7222, %v7228
        %v7231 = vadd.f32 %v282, %v7229
        %7232 = vst [vmem:[#allocation2] sm:$0xf] %v7231
        %p7233 = scmp.eq.s32.totalorder %s21, 20
        // Predicated region
        $region57: #{fc_test_nn_forward.1} parent=39 // pred_check
          %p7234 = pneg %p7233
        $region58: #{fc_test_nn_forward.1} parent=39 // pred_check_branch
          %7236 = sbr.rel (%p7234) target = $region60
        $region59: #{fc_test_nn_forward.1} parent=39 // pred_region
          %v7237 = vld [vmem:[#allocation2] sm:$0xf]
          %v7238 = vld [vmem:[#allocation6] sm:$0x3]
          %v7240 = vlaneseq
          %v7241 = vshrl.u32 %v7240, 7
          %v7242 = vsub.s32 0, %v7241
          %v7243 = vrot.slane %v7238, %v7242
          %v7244 = vlaneseq
          %v7245 = vshrl.u32 %v7244, 7
          %v7246 = vsub.s32 1, %v7245
          %v7247 = vrot.slane %v7238, %v7246
          %v7248 = vcombine.low %v7243, %v7247
          %v7250 = vunpack.c.l.s4 1983009808
          %v7251 = vunpack.c.0.s8 %v7250
          %v7252 = vlaneseq
          %v7253 = vshrl.u32 %v7252, 7
          %v7254 = vsub.s32 %v7251, %v7253
          %v7255 = vrot.slane %v7248, %v7254
          %v7257 = vadd.f32 %v7237, %v7255
          %v7258 = vmax.f32 %v7257, 0.0
          %v7259 = vld [vmem:[%s3] sm:$0xff]
          %v7260 = vld [vmem:[%s3 + $0x8] sm:$0xff]
          %v7261 = vld [vmem:[%s3 + $0x10] sm:$0xff]
          %v7262 = vld [vmem:[%s3 + $0x18] sm:$0xff]
          %v7263 = vld [vmem:[%s3 + $0x20] sm:$0xff]
          %v7264 = vld [vmem:[%s3 + $0x28] sm:$0xff]
          %v7265 = vld [vmem:[%s3 + $0x30] sm:$0xff]
          %v7266 = vld [vmem:[%s3 + $0x38] sm:$0xff]
          %v7267 = vld [vmem:[%s3 + $0x40] sm:$0xff]
          %v7268 = vld [vmem:[%s3 + $0x48] sm:$0xff]
          %v7269 = vld [vmem:[%s3 + $0x50] sm:$0xff]
          %v7270 = vld [vmem:[%s3 + $0x58] sm:$0xff]
          %v7271 = vld [vmem:[%s3 + $0x60] sm:$0xff]
          %v7272 = vld [vmem:[%s3 + $0x68] sm:$0xff]
          %v7273 = vld [vmem:[%s3 + $0x70] sm:$0xff]
          %v7274 = vld [vmem:[%s3 + $0x78] sm:$0xff]
          %v7275 = vld [vmem:[%s3 + $0x80] sm:$0xff]
          %v7276 = vld [vmem:[%s3 + $0x88] sm:$0xff]
          %v7277 = vld [vmem:[%s3 + $0x90] sm:$0xff]
          %v7278 = vld [vmem:[%s3 + $0x98] sm:$0xff]
          %v7279 = vld [vmem:[%s3 + $0xa0] sm:$0xff]
          %v7280 = vld [vmem:[%s3 + $0xa8] sm:$0xff]
          %v7281 = vld [vmem:[%s3 + $0xb0] sm:$0xff]
          %v7282 = vld [vmem:[%s3 + $0xb8] sm:$0xff]
          %v7283 = vld [vmem:[%s3 + $0xc0] sm:$0xff]
          %v7284 = vld [vmem:[%s3 + $0xc8] sm:$0xff]
          %v7285 = vld [vmem:[%s3 + $0xd0] sm:$0xff]
          %v7286 = vld [vmem:[%s3 + $0xd8] sm:$0xff]
          %v7287 = vld [vmem:[%s3 + $0xe0] sm:$0xff]
          %v7288 = vld [vmem:[%s3 + $0xe8] sm:$0xff]
          %v7289 = vld [vmem:[%s3 + $0xf0] sm:$0xff]
          %v7290 = vld [vmem:[%s3 + $0xf8] sm:$0xff]
          %v7291 = vld [vmem:[#allocation8] sm:$0x1]
          %v7293 = vlaneseq
          %v7294 = vshrl.u32 %v7293, 7
          %v7295 = vsub.s32 0, %v7294
          %v7296 = vrot.slane %v7291, %v7295
          %v7300 = vunpack.c.l.s4 1983009808
          %v7301 = vunpack.c.0.s8 %v7300
          %v7302 = vlaneseq
          %v7303 = vshrl.u32 %v7302, 7
          %v7304 = vsub.s32 %v7301, %v7303
          %v7305 = vrot.slane %v7258, %v7304
          %v7306 = vcombine.high %v7305, %v7305
          %7309 = vmatprep.subr.mxu0 0.0
          %7310 = vmatpush1.msra.mxu0 %v7259
          %7311 = vmatprep.subr.mxu0 0.0
          %7312 = vmatpush1.msra.mxu0 %v7260
          %7313 = vmatprep.subr.mxu0 0.0
          %7314 = vmatpush1.msra.mxu0 %v7261
          %7315 = vmatprep.subr.mxu0 0.0
          %7316 = vmatpush1.msra.mxu0 %v7262
          %7317 = vmatprep.subr.mxu0 0.0
          %7318 = vmatpush1.msra.mxu0 %v7263
          %7319 = vmatprep.subr.mxu0 0.0
          %7320 = vmatpush1.msra.mxu0 %v7264
          %7321 = vmatprep.subr.mxu0 0.0
          %7322 = vmatpush1.msra.mxu0 %v7265
          %7323 = vmatprep.subr.mxu0 0.0
          %7324 = vmatpush1.msra.mxu0 %v7266
          %7325 = vmatprep.subr.mxu0 0.0
          %7326 = vmatpush1.msra.mxu0 %v7267
          %7327 = vmatprep.subr.mxu0 0.0
          %7328 = vmatpush1.msra.mxu0 %v7268
          %7329 = vmatprep.subr.mxu0 0.0
          %7330 = vmatpush1.msra.mxu0 %v7269
          %7331 = vmatprep.subr.mxu0 0.0
          %7332 = vmatpush1.msra.mxu0 %v7270
          %7333 = vmatprep.subr.mxu0 0.0
          %7334 = vmatpush1.msra.mxu0 %v7271
          %7335 = vmatprep.subr.mxu0 0.0
          %7336 = vmatpush1.msra.mxu0 %v7272
          %7337 = vmatprep.subr.mxu0 0.0
          %7338 = vmatpush1.msra.mxu0 %v7273
          %7339 = vmatprep.subr.mxu0 0.0
          %7340 = vmatpush1.msra.mxu0 %v7274
          %7341 = vmatprep.subr.mxu0 0.0
          %7342 = vmatpush1.msra.mxu0 %v7275
          %7343 = vmatprep.subr.mxu0 0.0
          %7344 = vmatpush1.msra.mxu0 %v7276
          %7345 = vmatprep.subr.mxu0 0.0
          %7346 = vmatpush1.msra.mxu0 %v7277
          %7347 = vmatprep.subr.mxu0 0.0
          %7348 = vmatpush1.msra.mxu0 %v7278
          %7349 = vmatprep.subr.mxu0 0.0
          %7350 = vmatpush1.msra.mxu0 %v7279
          %7351 = vmatprep.subr.mxu0 0.0
          %7352 = vmatpush1.msra.mxu0 %v7280
          %7353 = vmatprep.subr.mxu0 0.0
          %7354 = vmatpush1.msra.mxu0 %v7281
          %7355 = vmatprep.subr.mxu0 0.0
          %7356 = vmatpush1.msra.mxu0 %v7282
          %7357 = vmatprep.subr.mxu0 0.0
          %7358 = vmatpush1.msra.mxu0 %v7283
          %7359 = vmatprep.subr.mxu0 0.0
          %7360 = vmatpush1.msra.mxu0 %v7284
          %7361 = vmatprep.subr.mxu0 0.0
          %7362 = vmatpush1.msra.mxu0 %v7285
          %7363 = vmatprep.subr.mxu0 0.0
          %7364 = vmatpush1.msra.mxu0 %v7286
          %7365 = vmatprep.subr.mxu0 0.0
          %7366 = vmatpush1.msra.mxu0 %v7287
          %7367 = vmatprep.subr.mxu0 0.0
          %7368 = vmatpush1.msra.mxu0 %v7288
          %7369 = vmatprep.subr.mxu0 0.0
          %7370 = vmatpush1.msra.mxu0 %v7289
          %7371 = vmatprep.subr.mxu0 0.0
          %7372 = vmatpush1.msra.mxu0 %v7290
          %7373 = vmatprep.mubr.f32.mxu0 %v7306
          %7374 = vmatmul.mubr.f32.gmra.mrb[0].mxu0 %v7305
          %v7375 = vpop.f32.mrb[0].mxu0
          %v7376 = vadd.f32 %v7296, %v7375
          %v7377 = vpop.f32.mrb[0].mxu0
          %7378 = vdwg.mxu0
          %vm7379 = vcmask 58368
          %7380 = vst.msk [vmem:[#allocation9] sm:$0x3] %vm7379, %v7376
        $region60: #{fc_test_nn_forward.1} parent=39 // pred_fallthru
          _
        // Predicated region
        $region61: #{fc_test_nn_forward.1} parent=39 // pred_check
          %p7381 = pneg %p149
        $region62: #{fc_test_nn_forward.1} parent=39 // pred_check_branch
          %7383 = sbr.rel (%p7381) target = $region64
        $region63: #{fc_test_nn_forward.1} parent=39 // pred_region
          %s7385 = ssub.s32 32, 32
          %7386 = vsyncadd [#allocation5], %s7385
          %s7388 = sshll.u32 [#allocation9], 4
          %s7389 = int_to_ptr.vmem [resolvable:$true] %s7388
          %7391 = dma.vmem_to_hbm [thread:$0]  %s7389, 32, %s5, [#allocation5]
        $region64: #{fc_test_nn_forward.1} parent=39 // pred_fallthru
          _
        // Predicated region
        $region65: #{fc_test_nn_forward.1} parent=39 // pred_check
          %p7392 = pneg %p149
        $region66: #{fc_test_nn_forward.1} parent=39 // pred_check_branch
          %7394 = sbr.rel (%p7392) target = $region68
        $region67: #{fc_test_nn_forward.1} parent=39 // pred_region
          %7395 = dma.done [#allocation5], 32
        $region68: #{fc_test_nn_forward.1} parent=39 // pred_fallthru
          _
      $region40: #{fc_test_nn_forward.1} parent=5 // pred_fallthru
        _
      %p7396 = scmp.le.s32.totalorder 2, %s16
      // Predicated region
      $region69: #{fc_test_nn_forward.1} parent=5 // pred_check
        %p7397 = pneg %p7396
      $region70: #{fc_test_nn_forward.1} parent=5 // pred_check_branch
        %7399 = sbr.rel (%p7397) target = $region72
      $region71: #{fc_test_nn_forward.1} parent=5 // pred_region
        %s7400 = ssub.s32 %s16, 2
      $region72: #{fc_test_nn_forward.1} parent=5 // pred_fallthru
        _
    $region6: #{fc_test_nn_forward.1} parent=1 // loop_footer
      %s20 = sadd.s32 1, %s16
    $region7: #{fc_test_nn_forward.1} parent=1 // loop_footer_branch
      %15 = sbr.rel target = $region3
    $region8: #{fc_test_nn_forward.1} parent=1 // loop_exit
      _
    %7401 = vsyncpa [#allocation4], 1
    %s7402 = scalar_lea.sflag [#allocation4], 1
    %7403 = vsyncpa %s7402, 1
    %7404 = vsyncpa [#allocation7], 1
    %7405 = vsyncpa [#allocation5], 1
    %s7406 = scalar_lea.sflag [#allocation5], 1
    %7407 = vsyncpa %s7406, 1

</llo_original>
